<compile_context>
chip_gen: v7x
topology: tpu7x:2x2x1
jax: 0.10.0
libtpu: 0.0.40
codegen_flags: <defaults>
</compile_context>

<pallas_src>
import functools

import jax
import jax.numpy as jnp
from jax import lax
from jax.experimental import pallas as pl
from jax.experimental.pallas import tpu as pltpu

LANE = 128                    # TPU lane width
MXU_DTYPE = jnp.bfloat16      # matmul-operand dtype (f32 accumulation)


def _round_up(x, m):
    return (x + m - 1) // m * m


def _choose_tm(m):
    """M-tile: as large as useful, but keep >=2 grid steps (v7x megacore)."""
    for tm in (1024, 512, 256):
        if m >= 2 * tm:
            return tm
    if m >= 128:
        return 128
    return _round_up(max(m, 8), 8)


# ----------------------------------------------------------------------------
# Pallas kernel: fused (im2col-matmul conv) + bias + GDN (+ residual add)
# ----------------------------------------------------------------------------
def _conv_gdn_kernel(*refs, cout, with_residual):
    """One M-tile:  patches(bf16) @ W(bf16) -> y(f32);  GDN in f32;  narrow store.

    Only the first `cout` output lanes are real; padded lanes use gamma=0 /
    beta=1 (finite GDN) and are sliced off in-register before the store, so the
    HBM output stays (M, Cout).
    """
    if with_residual:
        p_ref, w_ref, b_ref, g_ref, beta_ref, r_ref, o_ref = refs
    else:
        p_ref, w_ref, b_ref, g_ref, beta_ref, o_ref = refs

    # conv as matmul + bias (MXU, bf16 operands, f32 accumulation)
    y = jnp.dot(p_ref[...], w_ref[...], preferred_element_type=jnp.float32)
    y = y + b_ref[...]
    # GDN denominator: y^2 @ gamma^T + beta  (MXU, f32)
    denom = jnp.dot(y * y, g_ref[...], preferred_element_type=jnp.float32)
    denom = denom + beta_ref[...]
    z = (y * lax.rsqrt(denom))[:, :cout]          # drop padded lanes (f32, VPU+EUP)
    if with_residual:
        z = z + r_ref[...]                        # fused residual add (epilogue)
    o_ref[...] = z.astype(o_ref.dtype)


def pallas_conv_gdn_matmul(patches, wm, bias, gamma, beta, residual=None):
    """patches: (M, Kp) bf16 (Kp >= K, extra columns are zero taps);
    wm: (K, Cout); bias, beta: (Cout,); gamma: (Cout, Cout);
    residual: optional (M, Cout) f32 added after GDN.  Returns (M, Cout) f32."""
    M, Kp = patches.shape
    K, Cout = wm.shape
    Cp = _round_up(Cout, LANE)
    TM = _choose_tm(M)

    # Small resident operands only are padded (Cout -> Cp) for well-shaped MXU
    # work; padded output lanes get gamma=0 / beta=1 so GDN stays finite there.
    w_pad = jnp.zeros((Kp, Cp), MXU_DTYPE).at[:K, :Cout].set(wm.astype(MXU_DTYPE))
    b_pad = jnp.zeros((1, Cp), jnp.float32).at[0, :Cout].set(bias)
    g_pad = jnp.zeros((Cp, Cp), jnp.float32).at[:Cout, :Cout].set(gamma.T)
    beta_pad = jnp.ones((1, Cp), jnp.float32).at[0, :Cout].set(beta)

    in_specs = [
        pl.BlockSpec((TM, Kp), lambda i: (i, 0)),   # patches tile (streamed)
        pl.BlockSpec((Kp, Cp), lambda i: (0, 0)),   # conv weight (resident)
        pl.BlockSpec((1, Cp), lambda i: (0, 0)),    # bias
        pl.BlockSpec((Cp, Cp), lambda i: (0, 0)),   # gamma^T
        pl.BlockSpec((1, Cp), lambda i: (0, 0)),    # beta
    ]
    args = [patches, w_pad, b_pad, g_pad, beta_pad]
    if residual is not None:
        in_specs.append(pl.BlockSpec((TM, Cout), lambda i: (i, 0)))
        args.append(residual)

    kernel = functools.partial(_conv_gdn_kernel, cout=Cout,
                               with_residual=residual is not None)
    return pl.pallas_call(
        kernel,
        out_shape=jax.ShapeDtypeStruct((M, Cout), jnp.float32),
        grid_spec=pltpu.PrefetchScalarGridSpec(
            num_scalar_prefetch=0,
            grid=(pl.cdiv(M, TM),),           # ragged M edge handled by masking
            in_specs=in_specs,
            out_specs=pl.BlockSpec((TM, Cout), lambda i: (i, 0)),
        ),
        compiler_params=pltpu.CompilerParams(
            dimension_semantics=("parallel",),       # megacore-shardable M axis
            vmem_limit_bytes=32 * 1024 * 1024),
    )(*args)


# ----------------------------------------------------------------------------
# im2col glue (plain JAX: static slices / pads / reshapes only)
# ----------------------------------------------------------------------------
def _extract_patches(x, k, stride, pad):
    """NHWC im2col.  Appends all-zero taps so K = taps*C is 128-lane aligned
    when cheaply reachable — the zeros are written once when the patch matrix
    is materialized (no second padding pass over it)."""
    N, H, W, C = x.shape
    xp = jnp.pad(x, ((0, 0), (pad, pad), (pad, pad), (0, 0)))
    Ho = (H + 2 * pad - k) // stride + 1
    Wo = (W + 2 * pad - k) // stride + 1
    cols = []
    for ki in range(k):
        for kj in range(k):
            cols.append(xp[:, ki:ki + (Ho - 1) * stride + 1:stride,
                           kj:kj + (Wo - 1) * stride + 1:stride, :])
    taps = len(cols)
    taps_pad = taps
    while (taps_pad * C) % LANE != 0 and (taps_pad - taps) * C < LANE:
        taps_pad += 1
    if (taps_pad * C) % LANE != 0:     # not cheaply reachable; Mosaic masks K
        taps_pad = taps
    cols.extend([jnp.zeros_like(cols[0])] * (taps_pad - taps))
    patches = jnp.stack(cols, axis=3)              # (N, Ho, Wo, taps_pad, C)
    return patches.reshape(N * Ho * Wo, taps_pad * C), (N, Ho, Wo)


def _dilate2d(x, s):
    if s == 1:
        return x
    N, H, W, C = x.shape
    out = jnp.zeros((N, (H - 1) * s + 1, (W - 1) * s + 1, C), x.dtype)
    return out.at[:, ::s, ::s, :].set(x)


def conv2d_gdn(x_nhwc, w_oihw, bias, gamma, beta, *, stride, pad, residual=None):
    """Conv2d (PyTorch OIHW weight) + GDN (+ optional fused residual add)."""
    cout, cin, k, _ = w_oihw.shape
    wm = jnp.transpose(w_oihw, (2, 3, 1, 0)).reshape(k * k * cin, cout)
    patches, (N, Ho, Wo) = _extract_patches(
        x_nhwc.astype(MXU_DTYPE), k, stride, pad)
    res2d = None if residual is None else residual.reshape(N * Ho * Wo, cout)
    out = pallas_conv_gdn_matmul(patches, wm, bias, gamma, beta, residual=res2d)
    return out.reshape(N, Ho, Wo, cout)


def conv_transpose2d_gdn(x_nhwc, w_iohw, bias, gamma, beta, *, stride, pad,
                         residual=None):
    """ConvTranspose2d(weight (Cin, Cout, k, k), stride=s, padding=p) + GDN.

    Equivalent to conv2d(zero-dilate(x, s), flip_spatial(W) with in/out
    channels swapped, stride=1, padding=k-1-p).
    """
    k = w_iohw.shape[2]
    w_eff = jnp.transpose(jnp.flip(w_iohw, axis=(2, 3)), (1, 0, 2, 3))  # OIHW
    xd = _dilate2d(x_nhwc, stride)
    return conv2d_gdn(xd, w_eff, bias, gamma, beta, stride=1, pad=k - 1 - pad,
                      residual=residual)


# ----------------------------------------------------------------------------
# GOConv: parameters + forward
# ----------------------------------------------------------------------------
def init_goconv_params(key, cin, cout, k=5):
    keys = jax.random.split(key, 4)

    def gdn_params():
        return (0.1 * jnp.eye(cout, dtype=jnp.float32),
                jnp.ones((cout,), jnp.float32))

    def bias():
        return 0.01 * jnp.arange(cout, dtype=jnp.float32)

    gHH, bHH = gdn_params()
    gHL, bHL = gdn_params()
    gLL, bLL = gdn_params()
    gLH, bLH = gdn_params()
    return {
        # convHH: Conv2d(cin, cout, 5, stride=1, pad=2)
        'HH': dict(w=0.1 * jax.random.normal(keys[0], (cout, cin, k, k), jnp.float32),
                   b=bias(), gamma=gHH, beta=bHH),
        # convHL: Conv2d(cout, cout, 4, stride=2, pad=1)
        'HL': dict(w=0.1 * jax.random.normal(keys[1], (cout, cout, k - 1, k - 1), jnp.float32),
                   b=bias(), gamma=gHL, beta=bHL),
        # convLL: Conv2d(cin, cout, 5, stride=1, pad=2)
        'LL': dict(w=0.1 * jax.random.normal(keys[2], (cout, cin, k, k), jnp.float32),
                   b=bias(), gamma=gLL, beta=bLL),
        # convLH: ConvTranspose2d(cout, cout, 4, stride=2, pad=1), weight (Cin, Cout, 4, 4)
        'LH': dict(w=0.1 * jax.random.normal(keys[3], (cout, cout, k - 1, k - 1), jnp.float32),
                   b=bias(), gamma=gLH, beta=bLH),
    }


def goconv_forward(params, inputs_h_nchw, inputs_l_nchw, k=5):
    xh = jnp.transpose(inputs_h_nchw, (0, 2, 3, 1))   # NCHW -> NHWC (boundary only)
    xl = jnp.transpose(inputs_l_nchw, (0, 2, 3, 1))
    p = params
    conv_hh = conv2d_gdn(xh, p['HH']['w'], p['HH']['b'], p['HH']['gamma'],
                         p['HH']['beta'], stride=1, pad=(k - 1) // 2)
    conv_ll = conv2d_gdn(xl, p['LL']['w'], p['LL']['b'], p['LL']['gamma'],
                         p['LL']['beta'], stride=1, pad=(k - 1) // 2)
    # outputs_l = conv_ll + conv_hl : add fused into the HL kernel epilogue
    outputs_l = conv2d_gdn(conv_hh, p['HL']['w'], p['HL']['b'], p['HL']['gamma'],
                           p['HL']['beta'], stride=2, pad=(k - 2) // 2,
                           residual=conv_ll)
    # outputs_h = conv_hh + conv_lh : add fused into the LH (deconv) kernel epilogue
    outputs_h = conv_transpose2d_gdn(conv_ll, p['LH']['w'], p['LH']['b'],
                                     p['LH']['gamma'], p['LH']['beta'],
                                     stride=2, pad=(k - 2) // 2,
                                     residual=conv_hh)
    return (jnp.transpose(outputs_h, (0, 3, 1, 2)),   # NHWC -> NCHW
            jnp.transpose(outputs_l, (0, 3, 1, 2)))


# ----------------------------------------------------------------------------
# Pure-JAX reference (lax.conv, same bf16-operand / f32-accumulate convention)
# ----------------------------------------------------------------------------
def _gdn_ref(y, gamma, beta):
    denom = jnp.einsum('nhwj,ij->nhwi', y * y, gamma) + beta
    return y / jnp.sqrt(denom)


def _ref_conv2d_gdn(x, w_oihw, b, gamma, beta, stride, pad):
    w_hwio = jnp.transpose(w_oihw, (2, 3, 1, 0)).astype(MXU_DTYPE)
    y = lax.conv_general_dilated(x.astype(MXU_DTYPE), w_hwio, (stride, stride),
                                 [(pad, pad), (pad, pad)],
                                 dimension_numbers=('NHWC', 'HWIO', 'NHWC'),
                                 preferred_element_type=jnp.float32) + b
    return _gdn_ref(y, gamma, beta)


def _ref_convT2d_gdn(x, w_iohw, b, gamma, beta, stride, pad):
    k = w_iohw.shape[2]
    w_eff = jnp.transpose(jnp.flip(w_iohw, axis=(2, 3)), (1, 0, 2, 3))
    w_hwio = jnp.transpose(w_eff, (2, 3, 1, 0)).astype(MXU_DTYPE)
    y = lax.conv_general_dilated(x.astype(MXU_DTYPE), w_hwio, (1, 1),
                                 [(k - 1 - pad, k - 1 - pad)] * 2,
                                 lhs_dilation=(stride, stride),
                                 dimension_numbers=('NHWC', 'HWIO', 'NHWC'),
                                 preferred_element_type=jnp.float32) + b
    return _gdn_ref(y, gamma, beta)


def goconv_ref(params, inputs_h_nchw, inputs_l_nchw, k=5):
    xh = jnp.transpose(inputs_h_nchw, (0, 2, 3, 1))
    xl = jnp.transpose(inputs_l_nchw, (0, 2, 3, 1))
    p = params
    chh = _ref_conv2d_gdn(xh, p['HH']['w'], p['HH']['b'], p['HH']['gamma'],
                          p['HH']['beta'], 1, (k - 1) // 2)
    chl = _ref_conv2d_gdn(chh, p['HL']['w'], p['HL']['b'], p['HL']['gamma'],
                          p['HL']['beta'], 2, (k - 2) // 2)
    cll = _ref_conv2d_gdn(xl, p['LL']['w'], p['LL']['b'], p['LL']['gamma'],
                          p['LL']['beta'], 1, (k - 1) // 2)
    clh = _ref_convT2d_gdn(cll, p['LH']['w'], p['LH']['b'], p['LH']['gamma'],
                           p['LH']['beta'], 2, (k - 2) // 2)
    return (jnp.transpose(chh + clh, (0, 3, 1, 2)),
            jnp.transpose(cll + chl, (0, 3, 1, 2)))


if __name__ == "__main__":
    key = jax.random.PRNGKey(0)
    kx, kl, kp = jax.random.split(key, 3)
    N, Cin, Cout, H, W = 2, 4, 8, 16, 16

    inputs_h = jax.random.normal(kx, (N, Cin, H, W), jnp.float32)
    inputs_l = jax.random.normal(kl, (N, Cin, H // 2, W // 2), jnp.float32)
    params = init_goconv_params(kp, Cin, Cout, k=5)

    fwd = jax.jit(lambda p, a, b: goconv_forward(p, a, b, k=5))
    out_h, out_l = fwd(params, inputs_h, inputs_l)
    (out_h, out_l) = jax.block_until_ready((out_h, out_l))

    assert out_h.shape == (N, Cout, H, W)
    assert out_l.shape == (N, Cout, H // 2, W // 2)
    assert bool(jnp.isfinite(out_h).all()) and bool(jnp.isfinite(out_l).all())

    # bf16 MXU operands (f32 accumulation) in both paths; tolerance covers
    # accumulation-order and intermediate bf16-rounding differences.
    ref_h, ref_l = goconv_ref(params, inputs_h, inputs_l, k=5)
    assert jnp.allclose(out_h, ref_h, atol=1e-2, rtol=1e-2), "outputs_h mismatch"
    assert jnp.allclose(out_l, ref_l, atol=1e-2, rtol=1e-2), "outputs_l mismatch"

    print("KERNEL_OK")
</pallas_src>

<mosaic_0001>
module attributes {stable_mosaic.version = 11 : i64} {
  func.func @_conv_gdn_kernel(%arg0: i32, %arg1: memref<128x128xbf16, #tpu.memory_space<vmem>>, %arg2: memref<128x128xbf16, #tpu.memory_space<vmem>>, %arg3: memref<1x128xf32, #tpu.memory_space<vmem>>, %arg4: memref<128x128xf32, #tpu.memory_space<vmem>>, %arg5: memref<1x128xf32, #tpu.memory_space<vmem>>, %arg6: memref<128x8xf32, #tpu.memory_space<vmem>>) attributes {dimension_semantics = [#tpu.dimension_semantics<parallel>], iteration_bounds = array<i64: 1>, scalar_prefetch = 0 : i64, scratch_operands = 0 : i64, tpu.core_type = #tpu.core_type<tc>, window_params = [{transform_indices = @transform_0, window_bounds = array<i64: 128, 128>}, {pipeline_mode = #tpu.pipeline_mode<synchronous>, transform_indices = @transform_1, window_bounds = array<i64: 128, 128>}, {pipeline_mode = #tpu.pipeline_mode<synchronous>, transform_indices = @transform_2, window_bounds = array<i64: 1, 128>}, {pipeline_mode = #tpu.pipeline_mode<synchronous>, transform_indices = @transform_3, window_bounds = array<i64: 128, 128>}, {pipeline_mode = #tpu.pipeline_mode<synchronous>, transform_indices = @transform_4, window_bounds = array<i64: 1, 128>}, {transform_indices = @transform_5, window_bounds = array<i64: 128, 8>}]} {
    %c0 = arith.constant 0 : index
    %c0_0 = arith.constant 0 : index
    %0 = vector.load %arg1[%c0, %c0_0] : memref<128x128xbf16, #tpu.memory_space<vmem>>, vector<128x128xbf16>
    %c0_1 = arith.constant 0 : index
    %c0_2 = arith.constant 0 : index
    %1 = vector.load %arg2[%c0_1, %c0_2] : memref<128x128xbf16, #tpu.memory_space<vmem>>, vector<128x128xbf16>
    %cst = arith.constant dense<0.000000e+00> : vector<128x128xf32>
    %2 = tpu.matmul %0, %1, %cst {dimension_numbers = #tpu.dot_dimension_numbers<[1], [0], [0], [1], [0, 0, 1, 1], [], []>} : vector<128x128xbf16>, vector<128x128xbf16>, vector<128x128xf32> -> vector<128x128xf32>
    %c0_3 = arith.constant 0 : index
    %c0_4 = arith.constant 0 : index
    %3 = vector.load %arg3[%c0_3, %c0_4] : memref<1x128xf32, #tpu.memory_space<vmem>>, vector<1x128xf32>
    %4 = vector.broadcast %3 : vector<1x128xf32> to vector<128x128xf32>
    %5 = arith.addf %2, %4 : vector<128x128xf32>
    %6 = arith.mulf %5, %5 : vector<128x128xf32>
    %c0_5 = arith.constant 0 : index
    %c0_6 = arith.constant 0 : index
    %7 = vector.load %arg4[%c0_5, %c0_6] : memref<128x128xf32, #tpu.memory_space<vmem>>, vector<128x128xf32>
    %cst_7 = arith.constant dense<0.000000e+00> : vector<128x128xf32>
    %8 = tpu.matmul %6, %7, %cst_7 {dimension_numbers = #tpu.dot_dimension_numbers<[1], [0], [0], [1], [0, 0, 1, 1], [], []>} : vector<128x128xf32>, vector<128x128xf32>, vector<128x128xf32> -> vector<128x128xf32>
    %c0_8 = arith.constant 0 : index
    %c0_9 = arith.constant 0 : index
    %9 = vector.load %arg5[%c0_8, %c0_9] : memref<1x128xf32, #tpu.memory_space<vmem>>, vector<1x128xf32>
    %10 = vector.broadcast %9 : vector<1x128xf32> to vector<128x128xf32>
    %11 = arith.addf %8, %10 : vector<128x128xf32>
    %12 = math.rsqrt %11 : vector<128x128xf32>
    %13 = arith.mulf %5, %12 : vector<128x128xf32>
    %14 = vector.extract_strided_slice %13 {offsets = [0, 0], sizes = [128, 8], strides = [1, 1]} : vector<128x128xf32> to vector<128x8xf32>
    %c0_10 = arith.constant 0 : index
    %c0_11 = arith.constant 0 : index
    %15 = vector.load %arg6[%c0_10, %c0_11] : memref<128x8xf32, #tpu.memory_space<vmem>>, vector<128x8xf32>
    tpu.vector_store %arg6[%c0_10, %c0_11], %14 {strides = array<i32>} : memref<128x8xf32, #tpu.memory_space<vmem>>, vector<128x8xf32>,
    return
  }
  func.func @transform_0(%arg0: i32) -> (i32, i32) {
    %c0_i32 = arith.constant 0 : i32
    %c0_i32_0 = arith.constant 0 : i32
    return %arg0, %c0_i32 : i32, i32
  }
  func.func @transform_1(%arg0: i32) -> (i32, i32) {
    %c0_i32 = arith.constant 0 : i32
    %c0_i32_0 = arith.constant 0 : i32
    %c0_i32_1 = arith.constant 0 : i32
    return %c0_i32, %c0_i32_0 : i32, i32
  }
  func.func @transform_2(%arg0: i32) -> (i32, i32) {
    %c0_i32 = arith.constant 0 : i32
    %c0_i32_0 = arith.constant 0 : i32
    %c0_i32_1 = arith.constant 0 : i32
    return %c0_i32, %c0_i32_0 : i32, i32
  }
  func.func @transform_3(%arg0: i32) -> (i32, i32) {
    %c0_i32 = arith.constant 0 : i32
    %c0_i32_0 = arith.constant 0 : i32
    %c0_i32_1 = arith.constant 0 : i32
    return %c0_i32, %c0_i32_0 : i32, i32
  }
  func.func @transform_4(%arg0: i32) -> (i32, i32) {
    %c0_i32 = arith.constant 0 : i32
    %c0_i32_0 = arith.constant 0 : i32
    %c0_i32_1 = arith.constant 0 : i32
    return %c0_i32, %c0_i32_0 : i32, i32
  }
  func.func @transform_5(%arg0: i32) -> (i32, i32) {
    %c0_i32 = arith.constant 0 : i32
    %c0_i32_0 = arith.constant 0 : i32
    return %arg0, %c0_i32 : i32, i32
  }
}

module attributes {stable_mosaic.version = 11 : i64} {
  func.func @_conv_gdn_kernel(%arg0: i32, %arg1: memref<256x128xbf16, #tpu.memory_space<vmem>>, %arg2: memref<128x128xbf16, #tpu.memory_space<vmem>>, %arg3: memref<1x128xf32, #tpu.memory_space<vmem>>, %arg4: memref<128x128xf32, #tpu.memory_space<vmem>>, %arg5: memref<1x128xf32, #tpu.memory_space<vmem>>, %arg6: memref<256x8xf32, #tpu.memory_space<vmem>>) attributes {dimension_semantics = [#tpu.dimension_semantics<parallel>], iteration_bounds = array<i64: 2>, scalar_prefetch = 0 : i64, scratch_operands = 0 : i64, tpu.core_type = #tpu.core_type<tc>, window_params = [{transform_indices = @transform_0, window_bounds = array<i64: 256, 128>}, {pipeline_mode = #tpu.pipeline_mode<synchronous>, transform_indices = @transform_1, window_bounds = array<i64: 128, 128>}, {pipeline_mode = #tpu.pipeline_mode<synchronous>, transform_indices = @transform_2, window_bounds = array<i64: 1, 128>}, {pipeline_mode = #tpu.pipeline_mode<synchronous>, transform_indices = @transform_3, window_bounds = array<i64: 128, 128>}, {pipeline_mode = #tpu.pipeline_mode<synchronous>, transform_indices = @transform_4, window_bounds = array<i64: 1, 128>}, {transform_indices = @transform_5, window_bounds = array<i64: 256, 8>}]} {
    %c0 = arith.constant 0 : index
    %c0_0 = arith.constant 0 : index
    %0 = vector.load %arg1[%c0, %c0_0] : memref<256x128xbf16, #tpu.memory_space<vmem>>, vector<256x128xbf16>
    %c0_1 = arith.constant 0 : index
    %c0_2 = arith.constant 0 : index
    %1 = vector.load %arg2[%c0_1, %c0_2] : memref<128x128xbf16, #tpu.memory_space<vmem>>, vector<128x128xbf16>
    %cst = arith.constant dense<0.000000e+00> : vector<256x128xf32>
    %2 = tpu.matmul %0, %1, %cst {dimension_numbers = #tpu.dot_dimension_numbers<[1], [0], [0], [1], [0, 0, 1, 1], [], []>} : vector<256x128xbf16>, vector<128x128xbf16>, vector<256x128xf32> -> vector<256x128xf32>
    %c0_3 = arith.constant 0 : index
    %c0_4 = arith.constant 0 : index
    %3 = vector.load %arg3[%c0_3, %c0_4] : memref<1x128xf32, #tpu.memory_space<vmem>>, vector<1x128xf32>
    %4 = vector.broadcast %3 : vector<1x128xf32> to vector<256x128xf32>
    %5 = arith.addf %2, %4 : vector<256x128xf32>
    %6 = arith.mulf %5, %5 : vector<256x128xf32>
    %c0_5 = arith.constant 0 : index
    %c0_6 = arith.constant 0 : index
    %7 = vector.load %arg4[%c0_5, %c0_6] : memref<128x128xf32, #tpu.memory_space<vmem>>, vector<128x128xf32>
    %cst_7 = arith.constant dense<0.000000e+00> : vector<256x128xf32>
    %8 = tpu.matmul %6, %7, %cst_7 {dimension_numbers = #tpu.dot_dimension_numbers<[1], [0], [0], [1], [0, 0, 1, 1], [], []>} : vector<256x128xf32>, vector<128x128xf32>, vector<256x128xf32> -> vector<256x128xf32>
    %c0_8 = arith.constant 0 : index
    %c0_9 = arith.constant 0 : index
    %9 = vector.load %arg5[%c0_8, %c0_9] : memref<1x128xf32, #tpu.memory_space<vmem>>, vector<1x128xf32>
    %10 = vector.broadcast %9 : vector<1x128xf32> to vector<256x128xf32>
    %11 = arith.addf %8, %10 : vector<256x128xf32>
    %12 = math.rsqrt %11 : vector<256x128xf32>
    %13 = arith.mulf %5, %12 : vector<256x128xf32>
    %14 = vector.extract_strided_slice %13 {offsets = [0, 0], sizes = [256, 8], strides = [1, 1]} : vector<256x128xf32> to vector<256x8xf32>
    %c0_10 = arith.constant 0 : index
    %c0_11 = arith.constant 0 : index
    %15 = vector.load %arg6[%c0_10, %c0_11] : memref<256x8xf32, #tpu.memory_space<vmem>>, vector<256x8xf32>
    tpu.vector_store %arg6[%c0_10, %c0_11], %14 {strides = array<i32>} : memref<256x8xf32, #tpu.memory_space<vmem>>, vector<256x8xf32>,
    return
  }
  func.func @transform_0(%arg0: i32) -> (i32, i32) {
    %c0_i32 = arith.constant 0 : i32
    %c0_i32_0 = arith.constant 0 : i32
    return %arg0, %c0_i32 : i32, i32
  }
  func.func @transform_1(%arg0: i32) -> (i32, i32) {
    %c0_i32 = arith.constant 0 : i32
    %c0_i32_0 = arith.constant 0 : i32
    %c0_i32_1 = arith.constant 0 : i32
    return %c0_i32, %c0_i32_0 : i32, i32
  }
  func.func @transform_2(%arg0: i32) -> (i32, i32) {
    %c0_i32 = arith.constant 0 : i32
    %c0_i32_0 = arith.constant 0 : i32
    %c0_i32_1 = arith.constant 0 : i32
    return %c0_i32, %c0_i32_0 : i32, i32
  }
  func.func @transform_3(%arg0: i32) -> (i32, i32) {
    %c0_i32 = arith.constant 0 : i32
    %c0_i32_0 = arith.constant 0 : i32
    %c0_i32_1 = arith.constant 0 : i32
    return %c0_i32, %c0_i32_0 : i32, i32
  }
  func.func @transform_4(%arg0: i32) -> (i32, i32) {
    %c0_i32 = arith.constant 0 : i32
    %c0_i32_0 = arith.constant 0 : i32
    %c0_i32_1 = arith.constant 0 : i32
    return %c0_i32, %c0_i32_0 : i32, i32
  }
  func.func @transform_5(%arg0: i32) -> (i32, i32) {
    %c0_i32 = arith.constant 0 : i32
    %c0_i32_0 = arith.constant 0 : i32
    return %arg0, %c0_i32 : i32, i32
  }
}

module attributes {stable_mosaic.version = 11 : i64} {
  func.func @_conv_gdn_kernel(%arg0: i32, %arg1: memref<256x128xbf16, #tpu.memory_space<vmem>>, %arg2: memref<128x128xbf16, #tpu.memory_space<vmem>>, %arg3: memref<1x128xf32, #tpu.memory_space<vmem>>, %arg4: memref<128x128xf32, #tpu.memory_space<vmem>>, %arg5: memref<1x128xf32, #tpu.memory_space<vmem>>, %arg6: memref<256x8xf32, #tpu.memory_space<vmem>>, %arg7: memref<256x8xf32, #tpu.memory_space<vmem>>) attributes {dimension_semantics = [#tpu.dimension_semantics<parallel>], iteration_bounds = array<i64: 2>, scalar_prefetch = 0 : i64, scratch_operands = 0 : i64, tpu.core_type = #tpu.core_type<tc>, window_params = [{transform_indices = @transform_0, window_bounds = array<i64: 256, 128>}, {pipeline_mode = #tpu.pipeline_mode<synchronous>, transform_indices = @transform_1, window_bounds = array<i64: 128, 128>}, {pipeline_mode = #tpu.pipeline_mode<synchronous>, transform_indices = @transform_2, window_bounds = array<i64: 1, 128>}, {pipeline_mode = #tpu.pipeline_mode<synchronous>, transform_indices = @transform_3, window_bounds = array<i64: 128, 128>}, {pipeline_mode = #tpu.pipeline_mode<synchronous>, transform_indices = @transform_4, window_bounds = array<i64: 1, 128>}, {transform_indices = @transform_5, window_bounds = array<i64: 256, 8>}, {transform_indices = @transform_6, window_bounds = array<i64: 256, 8>}]} {
    %c0 = arith.constant 0 : index
    %c0_0 = arith.constant 0 : index
    %0 = vector.load %arg1[%c0, %c0_0] : memref<256x128xbf16, #tpu.memory_space<vmem>>, vector<256x128xbf16>
    %c0_1 = arith.constant 0 : index
    %c0_2 = arith.constant 0 : index
    %1 = vector.load %arg2[%c0_1, %c0_2] : memref<128x128xbf16, #tpu.memory_space<vmem>>, vector<128x128xbf16>
    %cst = arith.constant dense<0.000000e+00> : vector<256x128xf32>
    %2 = tpu.matmul %0, %1, %cst {dimension_numbers = #tpu.dot_dimension_numbers<[1], [0], [0], [1], [0, 0, 1, 1], [], []>} : vector<256x128xbf16>, vector<128x128xbf16>, vector<256x128xf32> -> vector<256x128xf32>
    %c0_3 = arith.constant 0 : index
    %c0_4 = arith.constant 0 : index
    %3 = vector.load %arg3[%c0_3, %c0_4] : memref<1x128xf32, #tpu.memory_space<vmem>>, vector<1x128xf32>
    %4 = vector.broadcast %3 : vector<1x128xf32> to vector<256x128xf32>
    %5 = arith.addf %2, %4 : vector<256x128xf32>
    %6 = arith.mulf %5, %5 : vector<256x128xf32>
    %c0_5 = arith.constant 0 : index
    %c0_6 = arith.constant 0 : index
    %7 = vector.load %arg4[%c0_5, %c0_6] : memref<128x128xf32, #tpu.memory_space<vmem>>, vector<128x128xf32>
    %cst_7 = arith.constant dense<0.000000e+00> : vector<256x128xf32>
    %8 = tpu.matmul %6, %7, %cst_7 {dimension_numbers = #tpu.dot_dimension_numbers<[1], [0], [0], [1], [0, 0, 1, 1], [], []>} : vector<256x128xf32>, vector<128x128xf32>, vector<256x128xf32> -> vector<256x128xf32>
    %c0_8 = arith.constant 0 : index
    %c0_9 = arith.constant 0 : index
    %9 = vector.load %arg5[%c0_8, %c0_9] : memref<1x128xf32, #tpu.memory_space<vmem>>, vector<1x128xf32>
    %10 = vector.broadcast %9 : vector<1x128xf32> to vector<256x128xf32>
    %11 = arith.addf %8, %10 : vector<256x128xf32>
    %12 = math.rsqrt %11 : vector<256x128xf32>
    %13 = arith.mulf %5, %12 : vector<256x128xf32>
    %14 = vector.extract_strided_slice %13 {offsets = [0, 0], sizes = [256, 8], strides = [1, 1]} : vector<256x128xf32> to vector<256x8xf32>
    %c0_10 = arith.constant 0 : index
    %c0_11 = arith.constant 0 : index
    %15 = vector.load %arg6[%c0_10, %c0_11] : memref<256x8xf32, #tpu.memory_space<vmem>>, vector<256x8xf32>
    %16 = arith.addf %14, %15 : vector<256x8xf32>
    %c0_12 = arith.constant 0 : index
    %c0_13 = arith.constant 0 : index
    %17 = vector.load %arg7[%c0_12, %c0_13] : memref<256x8xf32, #tpu.memory_space<vmem>>, vector<256x8xf32>
    tpu.vector_store %arg7[%c0_12, %c0_13], %16 {strides = array<i32>} : memref<256x8xf32, #tpu.memory_space<vmem>>, vector<256x8xf32>,
    return
  }
  func.func @transform_0(%arg0: i32) -> (i32, i32) {
    %c0_i32 = arith.constant 0 : i32
    %c0_i32_0 = arith.constant 0 : i32
    return %arg0, %c0_i32 : i32, i32
  }
  func.func @transform_1(%arg0: i32) -> (i32, i32) {
    %c0_i32 = arith.constant 0 : i32
    %c0_i32_0 = arith.constant 0 : i32
    %c0_i32_1 = arith.constant 0 : i32
    return %c0_i32, %c0_i32_0 : i32, i32
  }
  func.func @transform_2(%arg0: i32) -> (i32, i32) {
    %c0_i32 = arith.constant 0 : i32
    %c0_i32_0 = arith.constant 0 : i32
    %c0_i32_1 = arith.constant 0 : i32
    return %c0_i32, %c0_i32_0 : i32, i32
  }
  func.func @transform_3(%arg0: i32) -> (i32, i32) {
    %c0_i32 = arith.constant 0 : i32
    %c0_i32_0 = arith.constant 0 : i32
    %c0_i32_1 = arith.constant 0 : i32
    return %c0_i32, %c0_i32_0 : i32, i32
  }
  func.func @transform_4(%arg0: i32) -> (i32, i32) {
    %c0_i32 = arith.constant 0 : i32
    %c0_i32_0 = arith.constant 0 : i32
    %c0_i32_1 = arith.constant 0 : i32
    return %c0_i32, %c0_i32_0 : i32, i32
  }
  func.func @transform_5(%arg0: i32) -> (i32, i32) {
    %c0_i32 = arith.constant 0 : i32
    %c0_i32_0 = arith.constant 0 : i32
    return %arg0, %c0_i32 : i32, i32
  }
  func.func @transform_6(%arg0: i32) -> (i32, i32) {
    %c0_i32 = arith.constant 0 : i32
    %c0_i32_0 = arith.constant 0 : i32
    return %arg0, %c0_i32 : i32, i32
  }
}

module attributes {stable_mosaic.version = 11 : i64} {
  func.func @_conv_gdn_kernel(%arg0: i32, %arg1: memref<128x128xbf16, #tpu.memory_space<vmem>>, %arg2: memref<128x128xbf16, #tpu.memory_space<vmem>>, %arg3: memref<1x128xf32, #tpu.memory_space<vmem>>, %arg4: memref<128x128xf32, #tpu.memory_space<vmem>>, %arg5: memref<1x128xf32, #tpu.memory_space<vmem>>, %arg6: memref<128x8xf32, #tpu.memory_space<vmem>>, %arg7: memref<128x8xf32, #tpu.memory_space<vmem>>) attributes {dimension_semantics = [#tpu.dimension_semantics<parallel>], iteration_bounds = array<i64: 1>, scalar_prefetch = 0 : i64, scratch_operands = 0 : i64, tpu.core_type = #tpu.core_type<tc>, window_params = [{transform_indices = @transform_0, window_bounds = array<i64: 128, 128>}, {pipeline_mode = #tpu.pipeline_mode<synchronous>, transform_indices = @transform_1, window_bounds = array<i64: 128, 128>}, {pipeline_mode = #tpu.pipeline_mode<synchronous>, transform_indices = @transform_2, window_bounds = array<i64: 1, 128>}, {pipeline_mode = #tpu.pipeline_mode<synchronous>, transform_indices = @transform_3, window_bounds = array<i64: 128, 128>}, {pipeline_mode = #tpu.pipeline_mode<synchronous>, transform_indices = @transform_4, window_bounds = array<i64: 1, 128>}, {transform_indices = @transform_5, window_bounds = array<i64: 128, 8>}, {transform_indices = @transform_6, window_bounds = array<i64: 128, 8>}]} {
    %c0 = arith.constant 0 : index
    %c0_0 = arith.constant 0 : index
    %0 = vector.load %arg1[%c0, %c0_0] : memref<128x128xbf16, #tpu.memory_space<vmem>>, vector<128x128xbf16>
    %c0_1 = arith.constant 0 : index
    %c0_2 = arith.constant 0 : index
    %1 = vector.load %arg2[%c0_1, %c0_2] : memref<128x128xbf16, #tpu.memory_space<vmem>>, vector<128x128xbf16>
    %cst = arith.constant dense<0.000000e+00> : vector<128x128xf32>
    %2 = tpu.matmul %0, %1, %cst {dimension_numbers = #tpu.dot_dimension_numbers<[1], [0], [0], [1], [0, 0, 1, 1], [], []>} : vector<128x128xbf16>, vector<128x128xbf16>, vector<128x128xf32> -> vector<128x128xf32>
    %c0_3 = arith.constant 0 : index
    %c0_4 = arith.constant 0 : index
    %3 = vector.load %arg3[%c0_3, %c0_4] : memref<1x128xf32, #tpu.memory_space<vmem>>, vector<1x128xf32>
    %4 = vector.broadcast %3 : vector<1x128xf32> to vector<128x128xf32>
    %5 = arith.addf %2, %4 : vector<128x128xf32>
    %6 = arith.mulf %5, %5 : vector<128x128xf32>
    %c0_5 = arith.constant 0 : index
    %c0_6 = arith.constant 0 : index
    %7 = vector.load %arg4[%c0_5, %c0_6] : memref<128x128xf32, #tpu.memory_space<vmem>>, vector<128x128xf32>
    %cst_7 = arith.constant dense<0.000000e+00> : vector<128x128xf32>
    %8 = tpu.matmul %6, %7, %cst_7 {dimension_numbers = #tpu.dot_dimension_numbers<[1], [0], [0], [1], [0, 0, 1, 1], [], []>} : vector<128x128xf32>, vector<128x128xf32>, vector<128x128xf32> -> vector<128x128xf32>
    %c0_8 = arith.constant 0 : index
    %c0_9 = arith.constant 0 : index
    %9 = vector.load %arg5[%c0_8, %c0_9] : memref<1x128xf32, #tpu.memory_space<vmem>>, vector<1x128xf32>
    %10 = vector.broadcast %9 : vector<1x128xf32> to vector<128x128xf32>
    %11 = arith.addf %8, %10 : vector<128x128xf32>
    %12 = math.rsqrt %11 : vector<128x128xf32>
    %13 = arith.mulf %5, %12 : vector<128x128xf32>
    %14 = vector.extract_strided_slice %13 {offsets = [0, 0], sizes = [128, 8], strides = [1, 1]} : vector<128x128xf32> to vector<128x8xf32>
    %c0_10 = arith.constant 0 : index
    %c0_11 = arith.constant 0 : index
    %15 = vector.load %arg6[%c0_10, %c0_11] : memref<128x8xf32, #tpu.memory_space<vmem>>, vector<128x8xf32>
    %16 = arith.addf %14, %15 : vector<128x8xf32>
    %c0_12 = arith.constant 0 : index
    %c0_13 = arith.constant 0 : index
    %17 = vector.load %arg7[%c0_12, %c0_13] : memref<128x8xf32, #tpu.memory_space<vmem>>, vector<128x8xf32>
    tpu.vector_store %arg7[%c0_12, %c0_13], %16 {strides = array<i32>} : memref<128x8xf32, #tpu.memory_space<vmem>>, vector<128x8xf32>,
    return
  }
  func.func @transform_0(%arg0: i32) -> (i32, i32) {
    %c0_i32 = arith.constant 0 : i32
    %c0_i32_0 = arith.constant 0 : i32
    return %arg0, %c0_i32 : i32, i32
  }
  func.func @transform_1(%arg0: i32) -> (i32, i32) {
    %c0_i32 = arith.constant 0 : i32
    %c0_i32_0 = arith.constant 0 : i32
    %c0_i32_1 = arith.constant 0 : i32
    return %c0_i32, %c0_i32_0 : i32, i32
  }
  func.func @transform_2(%arg0: i32) -> (i32, i32) {
    %c0_i32 = arith.constant 0 : i32
    %c0_i32_0 = arith.constant 0 : i32
    %c0_i32_1 = arith.constant 0 : i32
    return %c0_i32, %c0_i32_0 : i32, i32
  }
  func.func @transform_3(%arg0: i32) -> (i32, i32) {
    %c0_i32 = arith.constant 0 : i32
    %c0_i32_0 = arith.constant 0 : i32
    %c0_i32_1 = arith.constant 0 : i32
    return %c0_i32, %c0_i32_0 : i32, i32
  }
  func.func @transform_4(%arg0: i32) -> (i32, i32) {
    %c0_i32 = arith.constant 0 : i32
    %c0_i32_0 = arith.constant 0 : i32
    %c0_i32_1 = arith.constant 0 : i32
    return %c0_i32, %c0_i32_0 : i32, i32
  }
  func.func @transform_5(%arg0: i32) -> (i32, i32) {
    %c0_i32 = arith.constant 0 : i32
    %c0_i32_0 = arith.constant 0 : i32
    return %arg0, %c0_i32 : i32, i32
  }
  func.func @transform_6(%arg0: i32) -> (i32, i32) {
    %c0_i32 = arith.constant 0 : i32
    %c0_i32_0 = arith.constant 0 : i32
    return %arg0, %c0_i32 : i32, i32
  }
}

</mosaic_0001>

<llo_original>
// kernel: _lambda_.5
$region0: #{_lambda_.5}
  #allocation0 [shape = 'u32[]', space=smem, size = 0x4, offset = 0x4, fixed_abs, tag = 'smem constant byte address 0x4 - core index']
  #allocation1 [shape = 'u32[144,128]{1,0:T(1,128)}', space=vmem, size = 0x12000, scoped, tag = 'internal scratch']
  %s0 = inlined_call_operand.vmem [shape: bf16[128,128], index: 0, kind: input, shape index: {}]
  %s1 = inlined_call_operand.vmem [shape: bf16[128,128], index: 1, kind: input, shape index: {}]
  %s2 = inlined_call_operand.vmem [shape: f32[1,128], index: 2, kind: input, shape index: {}]
  %s3 = inlined_call_operand.vmem [shape: f32[128,128], index: 3, kind: input, shape index: {}]
  %s4 = inlined_call_operand.vmem [shape: f32[1,128], index: 4, kind: input, shape index: {}]
  %s5 = inlined_call_operand.vmem [shape: f32[128,8], index: 5, kind: output, shape index: {}]
  %s6 = sld [smem:[#allocation0]]
  $region30: #{_lambda_.5} parent=0
    _
  %s8 = ssub.s32 1, %s6
  %s9 = scalar_select 0, %s8, %s6
  // Predicated region
  $region2: #{_lambda_.5} parent=0 // pred_check
    _
  $region3: #{_lambda_.5} parent=0 // pred_check_branch
    %11 = sbr.rel (0) target = $region5
  $region4: #{_lambda_.5} parent=0 // pred_region
    _
  $region5: #{_lambda_.5} parent=0 // pred_fallthru
    _
  // Predicated region
  $region6: #{_lambda_.5} parent=0 // pred_check
    _
  $region7: #{_lambda_.5} parent=0 // pred_check_branch
    %13 = sbr.rel (0) target = $region9
  $region8: #{_lambda_.5} parent=0 // pred_region
    _
  $region9: #{_lambda_.5} parent=0 // pred_fallthru
    _
  // Predicated region
  $region10: #{_lambda_.5} parent=0 // pred_check
    _
  $region11: #{_lambda_.5} parent=0 // pred_check_branch
    %15 = sbr.rel (0) target = $region13
  $region12: #{_lambda_.5} parent=0 // pred_region
    _
  $region13: #{_lambda_.5} parent=0 // pred_fallthru
    _
  // Predicated region
  $region14: #{_lambda_.5} parent=0 // pred_check
    _
  $region15: #{_lambda_.5} parent=0 // pred_check_branch
    %17 = sbr.rel (0) target = $region17
  $region16: #{_lambda_.5} parent=0 // pred_region
    _
  $region17: #{_lambda_.5} parent=0 // pred_fallthru
    _
  // Predicated region
  $region18: #{_lambda_.5} parent=0 // pred_check
    _
  $region19: #{_lambda_.5} parent=0 // pred_check_branch
    %19 = sbr.rel (0) target = $region21
  $region20: #{_lambda_.5} parent=0 // pred_region
    _
  $region21: #{_lambda_.5} parent=0 // pred_fallthru
    _
  %v21 = vld [vmem:[%s0] sm:$0xf]
  %v22 = vld [vmem:[%s0 + $0x4] sm:$0xf]
  %v23 = vld [vmem:[%s0 + $0x8] sm:$0xf]
  %v24 = vld [vmem:[%s0 + $0xc] sm:$0xf]
  %v25 = vld [vmem:[%s0 + $0x10] sm:$0xf]
  %v26 = vld [vmem:[%s0 + $0x14] sm:$0xf]
  %v27 = vld [vmem:[%s0 + $0x18] sm:$0xf]
  %v28 = vld [vmem:[%s0 + $0x1c] sm:$0xf]
  %v29 = vld [vmem:[%s0 + $0x20] sm:$0xf]
  %v30 = vld [vmem:[%s0 + $0x24] sm:$0xf]
  %v31 = vld [vmem:[%s0 + $0x28] sm:$0xf]
  %v32 = vld [vmem:[%s0 + $0x2c] sm:$0xf]
  %v33 = vld [vmem:[%s0 + $0x30] sm:$0xf]
  %v34 = vld [vmem:[%s0 + $0x34] sm:$0xf]
  %v35 = vld [vmem:[%s0 + $0x38] sm:$0xf]
  %v36 = vld [vmem:[%s0 + $0x3c] sm:$0xf]
  %v37 = vld [vmem:[%s1] sm:$0xf]
  %v38 = vld [vmem:[%s1 + $0x4] sm:$0xf]
  %v39 = vld [vmem:[%s1 + $0x8] sm:$0xf]
  %v40 = vld [vmem:[%s1 + $0xc] sm:$0xf]
  %v41 = vld [vmem:[%s1 + $0x10] sm:$0xf]
  %v42 = vld [vmem:[%s1 + $0x14] sm:$0xf]
  %v43 = vld [vmem:[%s1 + $0x18] sm:$0xf]
  %v44 = vld [vmem:[%s1 + $0x1c] sm:$0xf]
  %v45 = vld [vmem:[%s1 + $0x20] sm:$0xf]
  %v46 = vld [vmem:[%s1 + $0x24] sm:$0xf]
  %v47 = vld [vmem:[%s1 + $0x28] sm:$0xf]
  %v48 = vld [vmem:[%s1 + $0x2c] sm:$0xf]
  %v49 = vld [vmem:[%s1 + $0x30] sm:$0xf]
  %v50 = vld [vmem:[%s1 + $0x34] sm:$0xf]
  %v51 = vld [vmem:[%s1 + $0x38] sm:$0xf]
  %v52 = vld [vmem:[%s1 + $0x3c] sm:$0xf]
  %v53 = vld [vmem:[%s2] sm:$0x1]
  %v55 = vlaneseq
  %v56 = vshrl.u32 %v55, 7
  %v57 = vsub.s32 0, %v56
  %v58 = vrot.slane %v53, %v57
  %v76 = vunpack.c.l.b16 %v21
  %v77 = vunpack.c.l.b16 %v22
  %v78 = vunpack.c.l.b16 %v23
  %v79 = vunpack.c.l.b16 %v24
  %v80 = vunpack.c.l.b16 %v25
  %v81 = vunpack.c.l.b16 %v26
  %v82 = vunpack.c.l.b16 %v27
  %v83 = vunpack.c.l.b16 %v28
  %v84 = vunpack.c.l.b16 %v29
  %v85 = vunpack.c.l.b16 %v30
  %v86 = vunpack.c.l.b16 %v31
  %v87 = vunpack.c.l.b16 %v32
  %v88 = vunpack.c.l.b16 %v33
  %v89 = vunpack.c.l.b16 %v34
  %v90 = vunpack.c.l.b16 %v35
  %v91 = vunpack.c.l.b16 %v36
  %v92 = vpack.c.b16 %v77, %v76
  %v93 = vpack.c.b16 %v79, %v78
  %v94 = vpack.c.b16 %v81, %v80
  %v95 = vpack.c.b16 %v83, %v82
  %v96 = vpack.c.b16 %v85, %v84
  %v97 = vpack.c.b16 %v87, %v86
  %v98 = vpack.c.b16 %v89, %v88
  %v99 = vpack.c.b16 %v91, %v90
  %v124 = vunpack.c.l.b16 %v37
  %v125 = vunpack.c.l.b16 %v38
  %v126 = vunpack.c.l.b16 %v39
  %v127 = vunpack.c.l.b16 %v40
  %v128 = vunpack.c.l.b16 %v41
  %v129 = vunpack.c.l.b16 %v42
  %v130 = vunpack.c.l.b16 %v43
  %v131 = vunpack.c.l.b16 %v44
  %v132 = vunpack.c.l.b16 %v45
  %v133 = vunpack.c.l.b16 %v46
  %v134 = vunpack.c.l.b16 %v47
  %v135 = vunpack.c.l.b16 %v48
  %v136 = vunpack.c.l.b16 %v49
  %v137 = vunpack.c.l.b16 %v50
  %v138 = vunpack.c.l.b16 %v51
  %v139 = vunpack.c.l.b16 %v52
  %v140 = vpack.c.b16 %v125, %v124
  %v141 = vpack.c.b16 %v127, %v126
  %v142 = vpack.c.b16 %v129, %v128
  %v143 = vpack.c.b16 %v131, %v130
  %v144 = vpack.c.b16 %v133, %v132
  %v145 = vpack.c.b16 %v135, %v134
  %v146 = vpack.c.b16 %v137, %v136
  %v147 = vpack.c.b16 %v139, %v138
  %156 = vmatprep.subr.bf16.mxu0 0
  %157 = vmatpush1.bf16.msra.mxu0 %v140
  %158 = vmatprep.subr.bf16.mxu0 0
  %159 = vmatpush1.bf16.msra.mxu0 %v141
  %160 = vmatprep.subr.bf16.mxu0 0
  %161 = vmatpush1.bf16.msra.mxu0 %v142
  %162 = vmatprep.subr.bf16.mxu0 0
  %163 = vmatpush1.bf16.msra.mxu0 %v143
  %164 = vmatprep.subr.bf16.mxu0 0
  %165 = vmatpush1.bf16.msra.mxu0 %v144
  %166 = vmatprep.subr.bf16.mxu0 0
  %167 = vmatpush1.bf16.msra.mxu0 %v145
  %168 = vmatprep.subr.bf16.mxu0 0
  %169 = vmatpush1.bf16.msra.mxu0 %v146
  %170 = vmatprep.subr.bf16.mxu0 0
  %171 = vmatpush1.bf16.msra.mxu0 %v147
  %172 = vmatprep.subr.bf16.mxu0 0
  %173 = vmatpush1.bf16.msra.mxu0 0
  %174 = vmatprep.subr.bf16.mxu0 0
  %175 = vmatpush1.bf16.msra.mxu0 0
  %176 = vmatprep.subr.bf16.mxu0 0
  %177 = vmatpush1.bf16.msra.mxu0 0
  %178 = vmatprep.subr.bf16.mxu0 0
  %179 = vmatpush1.bf16.msra.mxu0 0
  %180 = vmatprep.subr.bf16.mxu0 0
  %181 = vmatpush1.bf16.msra.mxu0 0
  %182 = vmatprep.subr.bf16.mxu0 0
  %183 = vmatpush1.bf16.msra.mxu0 0
  %184 = vmatprep.subr.bf16.mxu0 0
  %185 = vmatpush1.bf16.msra.mxu0 0
  %186 = vmatprep.subr.bf16.mxu0 0
  %187 = vmatpush1.bf16.msra.mxu0 0
  %188 = vmatprep.mubr.bf16.mxu0 0
  %189 = vmatmul.mubr.bf16.gmra.mrb[0].mxu0 %v92
  %v190 = vpop.f32.mrb[0].mxu0
  %v191 = vadd.f32 %v58, %v190
  %v192 = vpop.f32.mrb[0].mxu0
  %v193 = vpop.f32.mrb[0].mxu0
  %v194 = vadd.f32 %v58, %v193
  %v195 = vpop.f32.mrb[0].mxu0
  %196 = vmatprep.mubr.bf16.mxu0 0
  %197 = vmatmul.mubr.bf16.gmra.mrb[0].mxu0 %v93
  %v198 = vpop.f32.mrb[0].mxu0
  %v199 = vadd.f32 %v58, %v198
  %v200 = vpop.f32.mrb[0].mxu0
  %v201 = vpop.f32.mrb[0].mxu0
  %v202 = vadd.f32 %v58, %v201
  %v203 = vpop.f32.mrb[0].mxu0
  %204 = vmatprep.mubr.bf16.mxu0 0
  %205 = vmatmul.mubr.bf16.gmra.mrb[0].mxu0 %v94
  %v206 = vpop.f32.mrb[0].mxu0
  %v207 = vadd.f32 %v58, %v206
  %v208 = vpop.f32.mrb[0].mxu0
  %v209 = vpop.f32.mrb[0].mxu0
  %v210 = vadd.f32 %v58, %v209
  %v211 = vpop.f32.mrb[0].mxu0
  %212 = vmatprep.mubr.bf16.mxu0 0
  %213 = vmatmul.mubr.bf16.gmra.mrb[0].mxu0 %v95
  %v214 = vpop.f32.mrb[0].mxu0
  %v215 = vadd.f32 %v58, %v214
  %v216 = vpop.f32.mrb[0].mxu0
  %v217 = vpop.f32.mrb[0].mxu0
  %v218 = vadd.f32 %v58, %v217
  %v219 = vpop.f32.mrb[0].mxu0
  %220 = vmatprep.mubr.bf16.mxu0 0
  %221 = vmatmul.mubr.bf16.gmra.mrb[0].mxu0 %v96
  %v222 = vpop.f32.mrb[0].mxu0
  %v223 = vadd.f32 %v58, %v222
  %v224 = vpop.f32.mrb[0].mxu0
  %v225 = vpop.f32.mrb[0].mxu0
  %v226 = vadd.f32 %v58, %v225
  %v227 = vpop.f32.mrb[0].mxu0
  %228 = vmatprep.mubr.bf16.mxu0 0
  %229 = vmatmul.mubr.bf16.gmra.mrb[0].mxu0 %v97
  %v230 = vpop.f32.mrb[0].mxu0
  %v231 = vadd.f32 %v58, %v230
  %v232 = vpop.f32.mrb[0].mxu0
  %v233 = vpop.f32.mrb[0].mxu0
  %v234 = vadd.f32 %v58, %v233
  %v235 = vpop.f32.mrb[0].mxu0
  %236 = vmatprep.mubr.bf16.mxu0 0
  %237 = vmatmul.mubr.bf16.gmra.mrb[0].mxu0 %v98
  %v238 = vpop.f32.mrb[0].mxu0
  %v239 = vadd.f32 %v58, %v238
  %v240 = vpop.f32.mrb[0].mxu0
  %v241 = vpop.f32.mrb[0].mxu0
  %v242 = vadd.f32 %v58, %v241
  %v243 = vpop.f32.mrb[0].mxu0
  %244 = vmatprep.mubr.bf16.mxu0 0
  %245 = vmatmul.mubr.bf16.gmra.mrb[0].mxu0 %v99
  %v246 = vpop.f32.mrb[0].mxu0
  %v247 = vadd.f32 %v58, %v246
  %v248 = vpop.f32.mrb[0].mxu0
  %v249 = vpop.f32.mrb[0].mxu0
  %v250 = vadd.f32 %v58, %v249
  %v251 = vpop.f32.mrb[0].mxu0
  %252 = vdwg.mxu0
  %v253 = vmul.f32 %v191, %v191
  %v254 = vmul.f32 %v194, %v194
  %v255 = vmul.f32 %v199, %v199
  %v256 = vmul.f32 %v202, %v202
  %v257 = vmul.f32 %v207, %v207
  %v258 = vmul.f32 %v210, %v210
  %v259 = vmul.f32 %v215, %v215
  %v260 = vmul.f32 %v218, %v218
  %v261 = vmul.f32 %v223, %v223
  %v262 = vmul.f32 %v226, %v226
  %v263 = vmul.f32 %v231, %v231
  %v264 = vmul.f32 %v234, %v234
  %v265 = vmul.f32 %v239, %v239
  %v266 = vmul.f32 %v242, %v242
  %v267 = vmul.f32 %v247, %v247
  %v268 = vmul.f32 %v250, %v250
  %v269 = vld [vmem:[%s3] sm:$0xff]
  %v270 = vld [vmem:[%s3 + $0x8] sm:$0xff]
  %v271 = vld [vmem:[%s3 + $0x10] sm:$0xff]
  %v272 = vld [vmem:[%s3 + $0x18] sm:$0xff]
  %v273 = vld [vmem:[%s3 + $0x20] sm:$0xff]
  %v274 = vld [vmem:[%s3 + $0x28] sm:$0xff]
  %v275 = vld [vmem:[%s3 + $0x30] sm:$0xff]
  %v276 = vld [vmem:[%s3 + $0x38] sm:$0xff]
  %v277 = vld [vmem:[%s3 + $0x40] sm:$0xff]
  %v278 = vld [vmem:[%s3 + $0x48] sm:$0xff]
  %v279 = vld [vmem:[%s3 + $0x50] sm:$0xff]
  %v280 = vld [vmem:[%s3 + $0x58] sm:$0xff]
  %v281 = vld [vmem:[%s3 + $0x60] sm:$0xff]
  %v282 = vld [vmem:[%s3 + $0x68] sm:$0xff]
  %v283 = vld [vmem:[%s3 + $0x70] sm:$0xff]
  %v284 = vld [vmem:[%s3 + $0x78] sm:$0xff]
  %v285 = vld [vmem:[%s4] sm:$0x1]
  %v287 = vlaneseq
  %v288 = vshrl.u32 %v287, 7
  %v289 = vsub.s32 0, %v288
  %v290 = vrot.slane %v285, %v289
  %292 = vmatprep.subr.mxu0 0.0
  %293 = vmatpush1.msra.mxu0 %v269
  %294 = vmatprep.subr.mxu0 0.0
  %295 = vmatpush1.msra.mxu0 %v270
  %296 = vmatprep.subr.mxu0 0.0
  %297 = vmatpush1.msra.mxu0 %v271
  %298 = vmatprep.subr.mxu0 0.0
  %299 = vmatpush1.msra.mxu0 %v272
  %300 = vmatprep.subr.mxu0 0.0
  %301 = vmatpush1.msra.mxu0 %v273
  %302 = vmatprep.subr.mxu0 0.0
  %303 = vmatpush1.msra.mxu0 %v274
  %304 = vmatprep.subr.mxu0 0.0
  %305 = vmatpush1.msra.mxu0 %v275
  %306 = vmatprep.subr.mxu0 0.0
  %307 = vmatpush1.msra.mxu0 %v276
  %308 = vmatprep.subr.mxu0 0.0
  %309 = vmatpush1.msra.mxu0 %v277
  %310 = vmatprep.subr.mxu0 0.0
  %311 = vmatpush1.msra.mxu0 %v278
  %312 = vmatprep.subr.mxu0 0.0
  %313 = vmatpush1.msra.mxu0 %v279
  %314 = vmatprep.subr.mxu0 0.0
  %315 = vmatpush1.msra.mxu0 %v280
  %316 = vmatprep.subr.mxu0 0.0
  %317 = vmatpush1.msra.mxu0 %v281
  %318 = vmatprep.subr.mxu0 0.0
  %319 = vmatpush1.msra.mxu0 %v282
  %320 = vmatprep.subr.mxu0 0.0
  %321 = vmatpush1.msra.mxu0 %v283
  %322 = vmatprep.subr.mxu0 0.0
  %323 = vmatpush1.msra.mxu0 %v284
  %324 = vmatprep.subr.mxu0 0.0
  %325 = vmatpush1.msra.mxu0 0.0
  %326 = vmatprep.subr.mxu0 0.0
  %327 = vmatpush1.msra.mxu0 0.0
  %328 = vmatprep.subr.mxu0 0.0
  %329 = vmatpush1.msra.mxu0 0.0
  %330 = vmatprep.subr.mxu0 0.0
  %331 = vmatpush1.msra.mxu0 0.0
  %332 = vmatprep.subr.mxu0 0.0
  %333 = vmatpush1.msra.mxu0 0.0
  %334 = vmatprep.subr.mxu0 0.0
  %335 = vmatpush1.msra.mxu0 0.0
  %336 = vmatprep.subr.mxu0 0.0
  %337 = vmatpush1.msra.mxu0 0.0
  %338 = vmatprep.subr.mxu0 0.0
  %339 = vmatpush1.msra.mxu0 0.0
  %340 = vmatprep.subr.mxu0 0.0
  %341 = vmatpush1.msra.mxu0 0.0
  %342 = vmatprep.subr.mxu0 0.0
  %343 = vmatpush1.msra.mxu0 0.0
  %344 = vmatprep.subr.mxu0 0.0
  %345 = vmatpush1.msra.mxu0 0.0
  %346 = vmatprep.subr.mxu0 0.0
  %347 = vmatpush1.msra.mxu0 0.0
  %348 = vmatprep.subr.mxu0 0.0
  %349 = vmatpush1.msra.mxu0 0.0
  %350 = vmatprep.subr.mxu0 0.0
  %351 = vmatpush1.msra.mxu0 0.0
  %352 = vmatprep.subr.mxu0 0.0
  %353 = vmatpush1.msra.mxu0 0.0
  %354 = vmatprep.subr.mxu0 0.0
  %355 = vmatpush1.msra.mxu0 0.0
  %356 = vmatprep.mubr.f32.mxu0 0.0
  %357 = vmatmul.mubr.f32.gmra.mrb[0].mxu0 %v253
  %v358 = vpop.f32.mrb[0].mxu0
  %v359 = vadd.f32 %v290, %v358
  %v360 = vpop.f32.mrb[0].mxu0
  %361 = vmatprep.mubr.f32.mxu0 0.0
  %362 = vmatmul.mubr.f32.gmra.mrb[0].mxu0 %v254
  %v363 = vpop.f32.mrb[0].mxu0
  %v364 = vadd.f32 %v290, %v363
  %v365 = vpop.f32.mrb[0].mxu0
  %366 = vmatprep.mubr.f32.mxu0 0.0
  %367 = vmatmul.mubr.f32.gmra.mrb[0].mxu0 %v255
  %v368 = vpop.f32.mrb[0].mxu0
  %v369 = vadd.f32 %v290, %v368
  %v370 = vpop.f32.mrb[0].mxu0
  %371 = vmatprep.mubr.f32.mxu0 0.0
  %372 = vmatmul.mubr.f32.gmra.mrb[0].mxu0 %v256
  %v373 = vpop.f32.mrb[0].mxu0
  %v374 = vadd.f32 %v290, %v373
  %v375 = vpop.f32.mrb[0].mxu0
  %376 = vmatprep.mubr.f32.mxu0 0.0
  %377 = vmatmul.mubr.f32.gmra.mrb[0].mxu0 %v257
  %v378 = vpop.f32.mrb[0].mxu0
  %v379 = vadd.f32 %v290, %v378
  %v380 = vpop.f32.mrb[0].mxu0
  %381 = vmatprep.mubr.f32.mxu0 0.0
  %382 = vmatmul.mubr.f32.gmra.mrb[0].mxu0 %v258
  %v383 = vpop.f32.mrb[0].mxu0
  %v384 = vadd.f32 %v290, %v383
  %v385 = vpop.f32.mrb[0].mxu0
  %386 = vmatprep.mubr.f32.mxu0 0.0
  %387 = vmatmul.mubr.f32.gmra.mrb[0].mxu0 %v259
  %v388 = vpop.f32.mrb[0].mxu0
  %v389 = vadd.f32 %v290, %v388
  %v390 = vpop.f32.mrb[0].mxu0
  %391 = vmatprep.mubr.f32.mxu0 0.0
  %392 = vmatmul.mubr.f32.gmra.mrb[0].mxu0 %v260
  %v393 = vpop.f32.mrb[0].mxu0
  %v394 = vadd.f32 %v290, %v393
  %v395 = vpop.f32.mrb[0].mxu0
  %396 = vmatprep.mubr.f32.mxu0 0.0
  %397 = vmatmul.mubr.f32.gmra.mrb[0].mxu0 %v261
  %v398 = vpop.f32.mrb[0].mxu0
  %v399 = vadd.f32 %v290, %v398
  %v400 = vpop.f32.mrb[0].mxu0
  %401 = vmatprep.mubr.f32.mxu0 0.0
  %402 = vmatmul.mubr.f32.gmra.mrb[0].mxu0 %v262
  %v403 = vpop.f32.mrb[0].mxu0
  %v404 = vadd.f32 %v290, %v403
  %v405 = vpop.f32.mrb[0].mxu0
  %406 = vmatprep.mubr.f32.mxu0 0.0
  %407 = vmatmul.mubr.f32.gmra.mrb[0].mxu0 %v263
  %v408 = vpop.f32.mrb[0].mxu0
  %v409 = vadd.f32 %v290, %v408
  %v410 = vpop.f32.mrb[0].mxu0
  %411 = vmatprep.mubr.f32.mxu0 0.0
  %412 = vmatmul.mubr.f32.gmra.mrb[0].mxu0 %v264
  %v413 = vpop.f32.mrb[0].mxu0
  %v414 = vadd.f32 %v290, %v413
  %v415 = vpop.f32.mrb[0].mxu0
  %416 = vmatprep.mubr.f32.mxu0 0.0
  %417 = vmatmul.mubr.f32.gmra.mrb[0].mxu0 %v265
  %v418 = vpop.f32.mrb[0].mxu0
  %v419 = vadd.f32 %v290, %v418
  %v420 = vpop.f32.mrb[0].mxu0
  %421 = vmatprep.mubr.f32.mxu0 0.0
  %422 = vmatmul.mubr.f32.gmra.mrb[0].mxu0 %v266
  %v423 = vpop.f32.mrb[0].mxu0
  %v424 = vadd.f32 %v290, %v423
  %v425 = vpop.f32.mrb[0].mxu0
  %426 = vmatprep.mubr.f32.mxu0 0.0
  %427 = vmatmul.mubr.f32.gmra.mrb[0].mxu0 %v267
  %v428 = vpop.f32.mrb[0].mxu0
  %v429 = vadd.f32 %v290, %v428
  %v430 = vpop.f32.mrb[0].mxu0
  %431 = vmatprep.mubr.f32.mxu0 0.0
  %432 = vmatmul.mubr.f32.gmra.mrb[0].mxu0 %v268
  %v433 = vpop.f32.mrb[0].mxu0
  %v434 = vadd.f32 %v290, %v433
  %v435 = vpop.f32.mrb[0].mxu0
  %436 = vdwg.mxu0
  %v437 = vrsqrt.pop %v359
  %v438 = vrsqrt.pop %v364
  %v439 = vrsqrt.pop %v369
  %v440 = vrsqrt.pop %v374
  %v441 = vrsqrt.pop %v379
  %v442 = vrsqrt.pop %v384
  %v443 = vrsqrt.pop %v389
  %v444 = vrsqrt.pop %v394
  %v445 = vrsqrt.pop %v399
  %v446 = vrsqrt.pop %v404
  %v447 = vrsqrt.pop %v409
  %v448 = vrsqrt.pop %v414
  %v449 = vrsqrt.pop %v419
  %v450 = vrsqrt.pop %v424
  %v451 = vrsqrt.pop %v429
  %v452 = vrsqrt.pop %v434
  %v453 = vmul.f32 %v191, %v437
  %v454 = vmul.f32 %v194, %v438
  %v455 = vmul.f32 %v199, %v439
  %v456 = vmul.f32 %v202, %v440
  %v457 = vmul.f32 %v207, %v441
  %v458 = vmul.f32 %v210, %v442
  %v459 = vmul.f32 %v215, %v443
  %v460 = vmul.f32 %v218, %v444
  %v461 = vmul.f32 %v223, %v445
  %v462 = vmul.f32 %v226, %v446
  %v463 = vmul.f32 %v231, %v447
  %v464 = vmul.f32 %v234, %v448
  %v465 = vmul.f32 %v239, %v449
  %v466 = vmul.f32 %v242, %v450
  %v467 = vmul.f32 %v247, %v451
  %v468 = vmul.f32 %v250, %v452
  %vm469 = vcmask 64512
  %470 = vst.msk [vmem:[%s5] sm:$0xff] %vm469, %v453
  %471 = vst.msk [vmem:[%s5 + $0x8] sm:$0xff] %vm469, %v454
  %472 = vst.msk [vmem:[%s5 + $0x10] sm:$0xff] %vm469, %v455
  %473 = vst.msk [vmem:[%s5 + $0x18] sm:$0xff] %vm469, %v456
  %474 = vst.msk [vmem:[%s5 + $0x20] sm:$0xff] %vm469, %v457
  %475 = vst.msk [vmem:[%s5 + $0x28] sm:$0xff] %vm469, %v458
  %476 = vst.msk [vmem:[%s5 + $0x30] sm:$0xff] %vm469, %v459
  %477 = vst.msk [vmem:[%s5 + $0x38] sm:$0xff] %vm469, %v460
  %478 = vst.msk [vmem:[%s5 + $0x40] sm:$0xff] %vm469, %v461
  %479 = vst.msk [vmem:[%s5 + $0x48] sm:$0xff] %vm469, %v462
  %480 = vst.msk [vmem:[%s5 + $0x50] sm:$0xff] %vm469, %v463
  %481 = vst.msk [vmem:[%s5 + $0x58] sm:$0xff] %vm469, %v464
  %482 = vst.msk [vmem:[%s5 + $0x60] sm:$0xff] %vm469, %v465
  %483 = vst.msk [vmem:[%s5 + $0x68] sm:$0xff] %vm469, %v466
  %484 = vst.msk [vmem:[%s5 + $0x70] sm:$0xff] %vm469, %v467
  %485 = vst.msk [vmem:[%s5 + $0x78] sm:$0xff] %vm469, %v468
  // Predicated region
  $region22: #{_lambda_.5} parent=0 // pred_check
    _
  $region23: #{_lambda_.5} parent=0 // pred_check_branch
    %487 = sbr.rel (0) target = $region25
  $region24: #{_lambda_.5} parent=0 // pred_region
    _
  $region25: #{_lambda_.5} parent=0 // pred_fallthru
    _
  // Predicated region
  $region26: #{_lambda_.5} parent=0 // pred_check
    _
  $region27: #{_lambda_.5} parent=0 // pred_check_branch
    %489 = sbr.rel (0) target = $region29
  $region28: #{_lambda_.5} parent=0 // pred_region
    _
  $region29: #{_lambda_.5} parent=0 // pred_fallthru
    _

// kernel: _lambda_.7
$region0: #{_lambda_.7}
  #allocation0 [shape = 'u32[]', space=smem, size = 0x4, offset = 0x4, fixed_abs, tag = 'smem constant byte address 0x4 - core index']
  #allocation1 [shape = 'u32[144,128]{1,0:T(1,128)}', space=vmem, size = 0x12000, scoped, tag = 'internal scratch']
  %s0 = inlined_call_operand.vmem [shape: bf16[512,128], index: 0, kind: input, shape index: {}]
  %s1 = inlined_call_operand.vmem [shape: bf16[128,128], index: 1, kind: input, shape index: {}]
  %s2 = inlined_call_operand.vmem [shape: f32[1,128], index: 2, kind: input, shape index: {}]
  %s3 = inlined_call_operand.vmem [shape: f32[128,128], index: 3, kind: input, shape index: {}]
  %s4 = inlined_call_operand.vmem [shape: f32[1,128], index: 4, kind: input, shape index: {}]
  %s5 = inlined_call_operand.vmem [shape: f32[512,8], index: 5, kind: input, shape index: {}]
  %s6 = inlined_call_operand.vmem [shape: f32[512,8], index: 6, kind: output, shape index: {}]
  %s7 = sld [smem:[#allocation0]]
  $region57: #{_lambda_.7} parent=0
    _
  %s9 = ssub.s32 1, %s7
  %s10 = scalar_select 0, %s9, %s7
  loop: start=0, step=1, limit=4
  $region2: #{_lambda_.7} parent=0 // loop_pre_header
    _
  $region3: #{_lambda_.7} parent=0 // loop_header
    %s12 = sphi 0, %s16
    %p13 = scmp.ge.s32.totalorder %s12, 4
    %s22 = sphi 0, %s24
    %s25 = sphi 0, %s22
    %s26 = sphi 0, %s25
    %s42 = sphi 0, %s26
    %s46 = sphi 0, %s46
    %s48 = sphi 0, %s46
    %s49 = sphi 0, %s48
    %s63 = sphi 0, %s49
    %s67 = sphi 0, %s67
    %s69 = sphi 0, %s67
    %s70 = sphi 0, %s69
    %s84 = sphi 0, %s70
    %s88 = sphi 0, %s88
    %s90 = sphi 0, %s88
    %s91 = sphi 0, %s90
    %s105 = sphi 0, %s91
    %s109 = sphi 0, %s109
    %s111 = sphi 0, %s109
    %s112 = sphi 0, %s111
    %s126 = sphi 0, %s112
    %s132 = sphi 0, %s134
    %s135 = sphi 0, %s132
    %s136 = sphi 0, %s135
    %s152 = sphi 0, %s136
    %s158 = sphi 0, %s160
    %s161 = sphi 0, %s158
    %s162 = sphi 0, %s161
    %s178 = sphi 0, %s162
  $region4: #{_lambda_.7} parent=0 // loop_header_branch
    %15 = sbr.rel (%p13) target = $region8
  $region5: #{_lambda_.7} parent=0 // loop_body
    %s17 = ssub.s32 %s12, 1
    %s18 = ssub.s32 %s12, 2
    %s19 = sadd.s32 %s12, 1
    %s20 = ssub.s32 %s12, %s19
    %p21 = scmp.eq.s32.totalorder %s20, 0
    %s23 = sadd.s32 %s22, 1
    %s24 = scalar_select %p21, %s22, %s23
    %p27 = pneg %p21
    %p28 = scmp.eq.s32.totalorder %s12, 1
    %p29 = por %p27, %p28
    %p30 = scmp.ne.s32.totalorder %s22, %s25
    %p31 = scmp.eq.s32.totalorder %s12, 0
    %p32 = por %p30, %p31
    %p33 = scmp.ne.s32.totalorder %s22, %s25
    %p34 = scmp.eq.s32.totalorder %s17, 1
    %p35 = por %p33, %p34
    %p36 = scmp.ne.s32.totalorder %s25, %s26
    %p37 = scmp.eq.s32.totalorder %s17, 0
    %p38 = por %p36, %p37
    %p39 = scmp.ne.s32.totalorder %s25, %s26
    %p40 = scmp.eq.s32.totalorder %s18, 1
    %p41 = por %p39, %p40
    %p43 = scmp.ne.s32.totalorder %s26, %s42
    %p44 = scmp.eq.s32.totalorder %s18, 0
    %p45 = por %p43, %p44
    %s47 = sadd.s32 %s46, 1
    %p50 = scmp.eq.s32.totalorder %s12, 1
    %p51 = scmp.ne.s32.totalorder %s46, %s48
    %p52 = scmp.eq.s32.totalorder %s12, 0
    %p53 = por %p51, %p52
    %p54 = scmp.ne.s32.totalorder %s46, %s48
    %p55 = scmp.eq.s32.totalorder %s17, 1
    %p56 = por %p54, %p55
    %p57 = scmp.ne.s32.totalorder %s48, %s49
    %p58 = scmp.eq.s32.totalorder %s17, 0
    %p59 = por %p57, %p58
    %p60 = scmp.ne.s32.totalorder %s48, %s49
    %p61 = scmp.eq.s32.totalorder %s18, 1
    %p62 = por %p60, %p61
    %p64 = scmp.ne.s32.totalorder %s49, %s63
    %p65 = scmp.eq.s32.totalorder %s18, 0
    %p66 = por %p64, %p65
    %s68 = sadd.s32 %s67, 1
    %p71 = scmp.eq.s32.totalorder %s12, 1
    %p72 = scmp.ne.s32.totalorder %s67, %s69
    %p73 = scmp.eq.s32.totalorder %s12, 0
    %p74 = por %p72, %p73
    %p75 = scmp.ne.s32.totalorder %s67, %s69
    %p76 = scmp.eq.s32.totalorder %s17, 1
    %p77 = por %p75, %p76
    %p78 = scmp.ne.s32.totalorder %s69, %s70
    %p79 = scmp.eq.s32.totalorder %s17, 0
    %p80 = por %p78, %p79
    %p81 = scmp.ne.s32.totalorder %s69, %s70
    %p82 = scmp.eq.s32.totalorder %s18, 1
    %p83 = por %p81, %p82
    %p85 = scmp.ne.s32.totalorder %s70, %s84
    %p86 = scmp.eq.s32.totalorder %s18, 0
    %p87 = por %p85, %p86
    %s89 = sadd.s32 %s88, 1
    %p92 = scmp.eq.s32.totalorder %s12, 1
    %p93 = scmp.ne.s32.totalorder %s88, %s90
    %p94 = scmp.eq.s32.totalorder %s12, 0
    %p95 = por %p93, %p94
    %p96 = scmp.ne.s32.totalorder %s88, %s90
    %p97 = scmp.eq.s32.totalorder %s17, 1
    %p98 = por %p96, %p97
    %p99 = scmp.ne.s32.totalorder %s90, %s91
    %p100 = scmp.eq.s32.totalorder %s17, 0
    %p101 = por %p99, %p100
    %p102 = scmp.ne.s32.totalorder %s90, %s91
    %p103 = scmp.eq.s32.totalorder %s18, 1
    %p104 = por %p102, %p103
    %p106 = scmp.ne.s32.totalorder %s91, %s105
    %p107 = scmp.eq.s32.totalorder %s18, 0
    %p108 = por %p106, %p107
    %s110 = sadd.s32 %s109, 1
    %p113 = scmp.eq.s32.totalorder %s12, 1
    %p114 = scmp.ne.s32.totalorder %s109, %s111
    %p115 = scmp.eq.s32.totalorder %s12, 0
    %p116 = por %p114, %p115
    %p117 = scmp.ne.s32.totalorder %s109, %s111
    %p118 = scmp.eq.s32.totalorder %s17, 1
    %p119 = por %p117, %p118
    %p120 = scmp.ne.s32.totalorder %s111, %s112
    %p121 = scmp.eq.s32.totalorder %s17, 0
    %p122 = por %p120, %p121
    %p123 = scmp.ne.s32.totalorder %s111, %s112
    %p124 = scmp.eq.s32.totalorder %s18, 1
    %p125 = por %p123, %p124
    %p127 = scmp.ne.s32.totalorder %s112, %s126
    %p128 = scmp.eq.s32.totalorder %s18, 0
    %p129 = por %p127, %p128
    %s130 = ssub.s32 %s12, %s19
    %p131 = scmp.eq.s32.totalorder %s130, 0
    %s133 = sadd.s32 %s132, 1
    %s134 = scalar_select %p131, %s132, %s133
    %p137 = pneg %p131
    %p138 = scmp.eq.s32.totalorder %s12, 1
    %p139 = por %p137, %p138
    %p140 = scmp.ne.s32.totalorder %s132, %s135
    %p141 = scmp.eq.s32.totalorder %s12, 0
    %p142 = por %p140, %p141
    %p143 = scmp.ne.s32.totalorder %s132, %s135
    %p144 = scmp.eq.s32.totalorder %s17, 1
    %p145 = por %p143, %p144
    %p146 = scmp.ne.s32.totalorder %s135, %s136
    %p147 = scmp.eq.s32.totalorder %s17, 0
    %p148 = por %p146, %p147
    %p149 = scmp.ne.s32.totalorder %s135, %s136
    %p150 = scmp.eq.s32.totalorder %s18, 1
    %p151 = por %p149, %p150
    %p153 = scmp.ne.s32.totalorder %s136, %s152
    %p154 = scmp.eq.s32.totalorder %s18, 0
    %p155 = por %p153, %p154
    %s156 = ssub.s32 %s12, %s19
    %p157 = scmp.eq.s32.totalorder %s156, 0
    %s159 = sadd.s32 %s158, 1
    %s160 = scalar_select %p157, %s158, %s159
    %p163 = pneg %p157
    %p164 = scmp.eq.s32.totalorder %s12, 1
    %p165 = por %p163, %p164
    %p166 = scmp.ne.s32.totalorder %s158, %s161
    %p167 = scmp.eq.s32.totalorder %s12, 0
    %p168 = por %p166, %p167
    %p169 = scmp.ne.s32.totalorder %s158, %s161
    %p170 = scmp.eq.s32.totalorder %s17, 1
    %p171 = por %p169, %p170
    %p172 = scmp.ne.s32.totalorder %s161, %s162
    %p173 = scmp.eq.s32.totalorder %s17, 0
    %p174 = por %p172, %p173
    %p175 = scmp.ne.s32.totalorder %s161, %s162
    %p176 = scmp.eq.s32.totalorder %s18, 1
    %p177 = por %p175, %p176
    %p179 = scmp.ne.s32.totalorder %s162, %s178
    %p180 = scmp.eq.s32.totalorder %s18, 0
    %p181 = por %p179, %p180
    %p182 = scmp.le.s32.totalorder 1, %s12
    %p183 = scmp.lt.s32.totalorder %s12, 3
    %p184 = pnand %p182, %p183
    %p185 = pneg %p184
    // Predicated region
    $region9: #{_lambda_.7} parent=5 // pred_check
      _
    $region10: #{_lambda_.7} parent=5 // pred_check_branch
      %187 = sbr.rel (%p184) target = $region12
    $region11: #{_lambda_.7} parent=5 // pred_region
      %s188 = ssub.s32 %s12, 1
      // Predicated region
      $region13: #{_lambda_.7} parent=11 // pred_check
        %p189 = pneg %p59
      $region14: #{_lambda_.7} parent=11 // pred_check_branch
        %191 = sbr.rel (%p189) target = $region16
      $region15: #{_lambda_.7} parent=11 // pred_region
        _
      $region16: #{_lambda_.7} parent=11 // pred_fallthru
        _
      // Predicated region
      $region17: #{_lambda_.7} parent=11 // pred_check
        %p192 = pneg %p80
      $region18: #{_lambda_.7} parent=11 // pred_check_branch
        %194 = sbr.rel (%p192) target = $region20
      $region19: #{_lambda_.7} parent=11 // pred_region
        _
      $region20: #{_lambda_.7} parent=11 // pred_fallthru
        _
      // Predicated region
      $region21: #{_lambda_.7} parent=11 // pred_check
        %p195 = pneg %p101
      $region22: #{_lambda_.7} parent=11 // pred_check_branch
        %197 = sbr.rel (%p195) target = $region24
      $region23: #{_lambda_.7} parent=11 // pred_region
        _
      $region24: #{_lambda_.7} parent=11 // pred_fallthru
        _
      // Predicated region
      $region25: #{_lambda_.7} parent=11 // pred_check
        %p198 = pneg %p122
      $region26: #{_lambda_.7} parent=11 // pred_check_branch
        %200 = sbr.rel (%p198) target = $region28
      $region27: #{_lambda_.7} parent=11 // pred_region
        _
      $region28: #{_lambda_.7} parent=11 // pred_fallthru
        _
    $region12: #{_lambda_.7} parent=5 // pred_fallthru
      _
    %p201 = scmp.lt.s32.totalorder %s12, 2
    // Predicated region
    $region29: #{_lambda_.7} parent=5 // pred_check
      %p202 = pneg %p201
    $region30: #{_lambda_.7} parent=5 // pred_check_branch
      %204 = sbr.rel (%p202) target = $region32
    $region31: #{_lambda_.7} parent=5 // pred_region
      // Predicated region
      $region33: #{_lambda_.7} parent=31 // pred_check
        %p205 = pneg %p32
      $region34: #{_lambda_.7} parent=31 // pred_check_branch
        %207 = sbr.rel (%p205) target = $region36
      $region35: #{_lambda_.7} parent=31 // pred_region
        %s208 = smul.u32 32, %s12
        %p209 = scmp.lt.s32.totalorder %s208, 63
        %s210 = scalar_select %p209, %s208, 63
        %s211 = smul.addr %s210, 4
        %s212 = scalar_lea.vmem %s0, %s211
        %s213 = smul.u32 32, %s12
      $region36: #{_lambda_.7} parent=31 // pred_fallthru
        _
      // Predicated region
      $region37: #{_lambda_.7} parent=31 // pred_check
        %p214 = pneg %p142
      $region38: #{_lambda_.7} parent=31 // pred_check_branch
        %216 = sbr.rel (%p214) target = $region40
      $region39: #{_lambda_.7} parent=31 // pred_region
        %s217 = smul.u32 32, %s12
        %p218 = scmp.lt.s32.totalorder %s217, 63
        %s219 = scalar_select %p218, %s217, 63
        %s220 = smul.addr %s219, 8
        %s221 = scalar_lea.vmem %s5, %s220
        %s222 = smul.u32 32, %s12
      $region40: #{_lambda_.7} parent=31 // pred_fallthru
        _
    $region32: #{_lambda_.7} parent=5 // pred_fallthru
      _
    %p223 = scmp.le.s32.totalorder 1, %s12
    %p224 = scmp.lt.s32.totalorder %s12, 3
    %p225 = pnand %p223, %p224
    %p226 = pneg %p225
    // Predicated region
    $region41: #{_lambda_.7} parent=5 // pred_check
      _
    $region42: #{_lambda_.7} parent=5 // pred_check_branch
      %228 = sbr.rel (%p225) target = $region44
    $region43: #{_lambda_.7} parent=5 // pred_region
      %s229 = ssub.s32 %s12, 1
      %s230 = smul.u32 32, %s17
      %p231 = scmp.lt.s32.totalorder %s230, 63
      %s232 = scalar_select %p231, %s230, 63
      %s233 = smul.addr %s232, 4
      %s234 = scalar_lea.vmem %s0, %s233
      %p235 = pneg %p38
      %p236 = pneg %p35
      %p237 = pneg %p59
      %p238 = pneg %p56
      %p239 = pneg %p80
      %p240 = pneg %p77
      %p241 = pneg %p101
      %p242 = pneg %p98
      %p243 = pneg %p122
      %p244 = pneg %p119
      %s245 = smul.u32 32, %s17
      %p246 = scmp.lt.s32.totalorder %s245, 63
      %s247 = scalar_select %p246, %s245, 63
      %s248 = smul.addr %s247, 8
      %s249 = scalar_lea.vmem %s5, %s248
      %p250 = pneg %p148
      %p251 = pneg %p145
      %p252 = pneg %p174
      %p253 = pneg %p171
      %s254 = smul.u32 32, %s17
      %p255 = scmp.lt.s32.totalorder %s254, 63
      %s256 = scalar_select %p255, %s254, 63
      %s257 = smul.addr %s256, 8
      %s258 = scalar_lea.vmem %s6, %s257
      %s259 = smul.u32 32, %s17
      %p260 = scmp.lt.s32.totalorder %s259, 63
      %s261 = scalar_select %p260, %s259, 63
      %s262 = smul.addr %s261, 4
      %s263 = scalar_lea.vmem %s0, %s262
      %s264 = smul.u32 32, %s17
      %s265 = smul.u32 32, %s17
      %p266 = scmp.lt.s32.totalorder %s265, 63
      %s267 = scalar_select %p266, %s265, 63
      %s268 = smul.addr %s267, 8
      %s269 = scalar_lea.vmem %s5, %s268
      %s270 = smul.u32 32, %s17
      %s271 = smul.u32 32, %s17
      %p272 = scmp.lt.s32.totalorder %s271, 63
      %s273 = scalar_select %p272, %s271, 63
      %s274 = smul.addr %s273, 8
      %s275 = scalar_lea.vmem %s6, %s274
      %s276 = smul.u32 32, %s17
      %v278 = vld [vmem:[%s263] sm:$0xf]
      %v279 = vld [vmem:[%s263 + $0x4] sm:$0xf]
      %v280 = vld [vmem:[%s263 + $0x8] sm:$0xf]
      %v281 = vld [vmem:[%s263 + $0xc] sm:$0xf]
      %v282 = vld [vmem:[%s263 + $0x10] sm:$0xf]
      %v283 = vld [vmem:[%s263 + $0x14] sm:$0xf]
      %v284 = vld [vmem:[%s263 + $0x18] sm:$0xf]
      %v285 = vld [vmem:[%s263 + $0x1c] sm:$0xf]
      %v286 = vld [vmem:[%s263 + $0x20] sm:$0xf]
      %v287 = vld [vmem:[%s263 + $0x24] sm:$0xf]
      %v288 = vld [vmem:[%s263 + $0x28] sm:$0xf]
      %v289 = vld [vmem:[%s263 + $0x2c] sm:$0xf]
      %v290 = vld [vmem:[%s263 + $0x30] sm:$0xf]
      %v291 = vld [vmem:[%s263 + $0x34] sm:$0xf]
      %v292 = vld [vmem:[%s263 + $0x38] sm:$0xf]
      %v293 = vld [vmem:[%s263 + $0x3c] sm:$0xf]
      %v294 = vld [vmem:[%s263 + $0x40] sm:$0xf]
      %v295 = vld [vmem:[%s263 + $0x44] sm:$0xf]
      %v296 = vld [vmem:[%s263 + $0x48] sm:$0xf]
      %v297 = vld [vmem:[%s263 + $0x4c] sm:$0xf]
      %v298 = vld [vmem:[%s263 + $0x50] sm:$0xf]
      %v299 = vld [vmem:[%s263 + $0x54] sm:$0xf]
      %v300 = vld [vmem:[%s263 + $0x58] sm:$0xf]
      %v301 = vld [vmem:[%s263 + $0x5c] sm:$0xf]
      %v302 = vld [vmem:[%s263 + $0x60] sm:$0xf]
      %v303 = vld [vmem:[%s263 + $0x64] sm:$0xf]
      %v304 = vld [vmem:[%s263 + $0x68] sm:$0xf]
      %v305 = vld [vmem:[%s263 + $0x6c] sm:$0xf]
      %v306 = vld [vmem:[%s263 + $0x70] sm:$0xf]
      %v307 = vld [vmem:[%s263 + $0x74] sm:$0xf]
      %v308 = vld [vmem:[%s263 + $0x78] sm:$0xf]
      %v309 = vld [vmem:[%s263 + $0x7c] sm:$0xf]
      %v310 = vld [vmem:[%s1] sm:$0xf]
      %v311 = vld [vmem:[%s1 + $0x4] sm:$0xf]
      %v312 = vld [vmem:[%s1 + $0x8] sm:$0xf]
      %v313 = vld [vmem:[%s1 + $0xc] sm:$0xf]
      %v314 = vld [vmem:[%s1 + $0x10] sm:$0xf]
      %v315 = vld [vmem:[%s1 + $0x14] sm:$0xf]
      %v316 = vld [vmem:[%s1 + $0x18] sm:$0xf]
      %v317 = vld [vmem:[%s1 + $0x1c] sm:$0xf]
      %v318 = vld [vmem:[%s1 + $0x20] sm:$0xf]
      %v319 = vld [vmem:[%s1 + $0x24] sm:$0xf]
      %v320 = vld [vmem:[%s1 + $0x28] sm:$0xf]
      %v321 = vld [vmem:[%s1 + $0x2c] sm:$0xf]
      %v322 = vld [vmem:[%s1 + $0x30] sm:$0xf]
      %v323 = vld [vmem:[%s1 + $0x34] sm:$0xf]
      %v324 = vld [vmem:[%s1 + $0x38] sm:$0xf]
      %v325 = vld [vmem:[%s1 + $0x3c] sm:$0xf]
      %v326 = vld [vmem:[%s2] sm:$0x1]
      %v328 = vlaneseq
      %v329 = vshrl.u32 %v328, 7
      %v330 = vsub.s32 0, %v329
      %v331 = vrot.slane %v326, %v330
      %v365 = vunpack.c.l.b16 %v278
      %v366 = vunpack.c.l.b16 %v279
      %v367 = vunpack.c.l.b16 %v280
      %v368 = vunpack.c.l.b16 %v281
      %v369 = vunpack.c.l.b16 %v282
      %v370 = vunpack.c.l.b16 %v283
      %v371 = vunpack.c.l.b16 %v284
      %v372 = vunpack.c.l.b16 %v285
      %v373 = vunpack.c.l.b16 %v286
      %v374 = vunpack.c.l.b16 %v287
      %v375 = vunpack.c.l.b16 %v288
      %v376 = vunpack.c.l.b16 %v289
      %v377 = vunpack.c.l.b16 %v290
      %v378 = vunpack.c.l.b16 %v291
      %v379 = vunpack.c.l.b16 %v292
      %v380 = vunpack.c.l.b16 %v293
      %v381 = vunpack.c.l.b16 %v294
      %v382 = vunpack.c.l.b16 %v295
      %v383 = vunpack.c.l.b16 %v296
      %v384 = vunpack.c.l.b16 %v297
      %v385 = vunpack.c.l.b16 %v298
      %v386 = vunpack.c.l.b16 %v299
      %v387 = vunpack.c.l.b16 %v300
      %v388 = vunpack.c.l.b16 %v301
      %v389 = vunpack.c.l.b16 %v302
      %v390 = vunpack.c.l.b16 %v303
      %v391 = vunpack.c.l.b16 %v304
      %v392 = vunpack.c.l.b16 %v305
      %v393 = vunpack.c.l.b16 %v306
      %v394 = vunpack.c.l.b16 %v307
      %v395 = vunpack.c.l.b16 %v308
      %v396 = vunpack.c.l.b16 %v309
      %v397 = vpack.c.b16 %v366, %v365
      %v398 = vpack.c.b16 %v368, %v367
      %v399 = vpack.c.b16 %v370, %v369
      %v400 = vpack.c.b16 %v372, %v371
      %v401 = vpack.c.b16 %v374, %v373
      %v402 = vpack.c.b16 %v376, %v375
      %v403 = vpack.c.b16 %v378, %v377
      %v404 = vpack.c.b16 %v380, %v379
      %v405 = vpack.c.b16 %v382, %v381
      %v406 = vpack.c.b16 %v384, %v383
      %v407 = vpack.c.b16 %v386, %v385
      %v408 = vpack.c.b16 %v388, %v387
      %v409 = vpack.c.b16 %v390, %v389
      %v410 = vpack.c.b16 %v392, %v391
      %v411 = vpack.c.b16 %v394, %v393
      %v412 = vpack.c.b16 %v396, %v395
      %v445 = vunpack.c.l.b16 %v310
      %v446 = vunpack.c.l.b16 %v311
      %v447 = vunpack.c.l.b16 %v312
      %v448 = vunpack.c.l.b16 %v313
      %v449 = vunpack.c.l.b16 %v314
      %v450 = vunpack.c.l.b16 %v315
      %v451 = vunpack.c.l.b16 %v316
      %v452 = vunpack.c.l.b16 %v317
      %v453 = vunpack.c.l.b16 %v318
      %v454 = vunpack.c.l.b16 %v319
      %v455 = vunpack.c.l.b16 %v320
      %v456 = vunpack.c.l.b16 %v321
      %v457 = vunpack.c.l.b16 %v322
      %v458 = vunpack.c.l.b16 %v323
      %v459 = vunpack.c.l.b16 %v324
      %v460 = vunpack.c.l.b16 %v325
      %v461 = vpack.c.b16 %v446, %v445
      %v462 = vpack.c.b16 %v448, %v447
      %v463 = vpack.c.b16 %v450, %v449
      %v464 = vpack.c.b16 %v452, %v451
      %v465 = vpack.c.b16 %v454, %v453
      %v466 = vpack.c.b16 %v456, %v455
      %v467 = vpack.c.b16 %v458, %v457
      %v468 = vpack.c.b16 %v460, %v459
      %477 = vmatprep.subr.bf16.mxu0 0
      %478 = vmatpush1.bf16.msra.mxu0 %v461
      %479 = vmatprep.subr.bf16.mxu0 0
      %480 = vmatpush1.bf16.msra.mxu0 %v462
      %481 = vmatprep.subr.bf16.mxu0 0
      %482 = vmatpush1.bf16.msra.mxu0 %v463
      %483 = vmatprep.subr.bf16.mxu0 0
      %484 = vmatpush1.bf16.msra.mxu0 %v464
      %485 = vmatprep.subr.bf16.mxu0 0
      %486 = vmatpush1.bf16.msra.mxu0 %v465
      %487 = vmatprep.subr.bf16.mxu0 0
      %488 = vmatpush1.bf16.msra.mxu0 %v466
      %489 = vmatprep.subr.bf16.mxu0 0
      %490 = vmatpush1.bf16.msra.mxu0 %v467
      %491 = vmatprep.subr.bf16.mxu0 0
      %492 = vmatpush1.bf16.msra.mxu0 %v468
      %493 = vmatprep.subr.bf16.mxu0 0
      %494 = vmatpush1.bf16.msra.mxu0 0
      %495 = vmatprep.subr.bf16.mxu0 0
      %496 = vmatpush1.bf16.msra.mxu0 0
      %497 = vmatprep.subr.bf16.mxu0 0
      %498 = vmatpush1.bf16.msra.mxu0 0
      %499 = vmatprep.subr.bf16.mxu0 0
      %500 = vmatpush1.bf16.msra.mxu0 0
      %501 = vmatprep.subr.bf16.mxu0 0
      %502 = vmatpush1.bf16.msra.mxu0 0
      %503 = vmatprep.subr.bf16.mxu0 0
      %504 = vmatpush1.bf16.msra.mxu0 0
      %505 = vmatprep.subr.bf16.mxu0 0
      %506 = vmatpush1.bf16.msra.mxu0 0
      %507 = vmatprep.subr.bf16.mxu0 0
      %508 = vmatpush1.bf16.msra.mxu0 0
      %509 = vmatprep.mubr.bf16.mxu0 0
      %510 = vmatmul.mubr.bf16.gmra.mrb[0].mxu0 %v397
      %v511 = vpop.f32.mrb[0].mxu0
      %v512 = vadd.f32 %v331, %v511
      %v513 = vpop.f32.mrb[0].mxu0
      %v514 = vpop.f32.mrb[0].mxu0
      %v515 = vadd.f32 %v331, %v514
      %v516 = vpop.f32.mrb[0].mxu0
      %517 = vmatprep.mubr.bf16.mxu0 0
      %518 = vmatmul.mubr.bf16.gmra.mrb[0].mxu0 %v398
      %v519 = vpop.f32.mrb[0].mxu0
      %v520 = vadd.f32 %v331, %v519
      %v521 = vpop.f32.mrb[0].mxu0
      %v522 = vpop.f32.mrb[0].mxu0
      %v523 = vadd.f32 %v331, %v522
      %v524 = vpop.f32.mrb[0].mxu0
      %525 = vmatprep.mubr.bf16.mxu0 0
      %526 = vmatmul.mubr.bf16.gmra.mrb[0].mxu0 %v399
      %v527 = vpop.f32.mrb[0].mxu0
      %v528 = vadd.f32 %v331, %v527
      %v529 = vpop.f32.mrb[0].mxu0
      %v530 = vpop.f32.mrb[0].mxu0
      %v531 = vadd.f32 %v331, %v530
      %v532 = vpop.f32.mrb[0].mxu0
      %533 = vmatprep.mubr.bf16.mxu0 0
      %534 = vmatmul.mubr.bf16.gmra.mrb[0].mxu0 %v400
      %v535 = vpop.f32.mrb[0].mxu0
      %v536 = vadd.f32 %v331, %v535
      %v537 = vpop.f32.mrb[0].mxu0
      %v538 = vpop.f32.mrb[0].mxu0
      %v539 = vadd.f32 %v331, %v538
      %v540 = vpop.f32.mrb[0].mxu0
      %541 = vmatprep.mubr.bf16.mxu0 0
      %542 = vmatmul.mubr.bf16.gmra.mrb[0].mxu0 %v401
      %v543 = vpop.f32.mrb[0].mxu0
      %v544 = vadd.f32 %v331, %v543
      %v545 = vpop.f32.mrb[0].mxu0
      %v546 = vpop.f32.mrb[0].mxu0
      %v547 = vadd.f32 %v331, %v546
      %v548 = vpop.f32.mrb[0].mxu0
      %549 = vmatprep.mubr.bf16.mxu0 0
      %550 = vmatmul.mubr.bf16.gmra.mrb[0].mxu0 %v402
      %v551 = vpop.f32.mrb[0].mxu0
      %v552 = vadd.f32 %v331, %v551
      %v553 = vpop.f32.mrb[0].mxu0
      %v554 = vpop.f32.mrb[0].mxu0
      %v555 = vadd.f32 %v331, %v554
      %v556 = vpop.f32.mrb[0].mxu0
      %557 = vmatprep.mubr.bf16.mxu0 0
      %558 = vmatmul.mubr.bf16.gmra.mrb[0].mxu0 %v403
      %v559 = vpop.f32.mrb[0].mxu0
      %v560 = vadd.f32 %v331, %v559
      %v561 = vpop.f32.mrb[0].mxu0
      %v562 = vpop.f32.mrb[0].mxu0
      %v563 = vadd.f32 %v331, %v562
      %v564 = vpop.f32.mrb[0].mxu0
      %565 = vmatprep.mubr.bf16.mxu0 0
      %566 = vmatmul.mubr.bf16.gmra.mrb[0].mxu0 %v404
      %v567 = vpop.f32.mrb[0].mxu0
      %v568 = vadd.f32 %v331, %v567
      %v569 = vpop.f32.mrb[0].mxu0
      %v570 = vpop.f32.mrb[0].mxu0
      %v571 = vadd.f32 %v331, %v570
      %v572 = vpop.f32.mrb[0].mxu0
      %573 = vmatprep.mubr.bf16.mxu0 0
      %574 = vmatmul.mubr.bf16.gmra.mrb[0].mxu0 %v405
      %v575 = vpop.f32.mrb[0].mxu0
      %v576 = vadd.f32 %v331, %v575
      %v577 = vpop.f32.mrb[0].mxu0
      %v578 = vpop.f32.mrb[0].mxu0
      %v579 = vadd.f32 %v331, %v578
      %v580 = vpop.f32.mrb[0].mxu0
      %581 = vmatprep.mubr.bf16.mxu0 0
      %582 = vmatmul.mubr.bf16.gmra.mrb[0].mxu0 %v406
      %v583 = vpop.f32.mrb[0].mxu0
      %v584 = vadd.f32 %v331, %v583
      %v585 = vpop.f32.mrb[0].mxu0
      %v586 = vpop.f32.mrb[0].mxu0
      %v587 = vadd.f32 %v331, %v586
      %v588 = vpop.f32.mrb[0].mxu0
      %589 = vmatprep.mubr.bf16.mxu0 0
      %590 = vmatmul.mubr.bf16.gmra.mrb[0].mxu0 %v407
      %v591 = vpop.f32.mrb[0].mxu0
      %v592 = vadd.f32 %v331, %v591
      %v593 = vpop.f32.mrb[0].mxu0
      %v594 = vpop.f32.mrb[0].mxu0
      %v595 = vadd.f32 %v331, %v594
      %v596 = vpop.f32.mrb[0].mxu0
      %597 = vmatprep.mubr.bf16.mxu0 0
      %598 = vmatmul.mubr.bf16.gmra.mrb[0].mxu0 %v408
      %v599 = vpop.f32.mrb[0].mxu0
      %v600 = vadd.f32 %v331, %v599
      %v601 = vpop.f32.mrb[0].mxu0
      %v602 = vpop.f32.mrb[0].mxu0
      %v603 = vadd.f32 %v331, %v602
      %v604 = vpop.f32.mrb[0].mxu0
      %605 = vmatprep.mubr.bf16.mxu0 0
      %606 = vmatmul.mubr.bf16.gmra.mrb[0].mxu0 %v409
      %v607 = vpop.f32.mrb[0].mxu0
      %v608 = vadd.f32 %v331, %v607
      %v609 = vpop.f32.mrb[0].mxu0
      %v610 = vpop.f32.mrb[0].mxu0
      %v611 = vadd.f32 %v331, %v610
      %v612 = vpop.f32.mrb[0].mxu0
      %613 = vmatprep.mubr.bf16.mxu0 0
      %614 = vmatmul.mubr.bf16.gmra.mrb[0].mxu0 %v410
      %v615 = vpop.f32.mrb[0].mxu0
      %v616 = vadd.f32 %v331, %v615
      %v617 = vpop.f32.mrb[0].mxu0
      %v618 = vpop.f32.mrb[0].mxu0
      %v619 = vadd.f32 %v331, %v618
      %v620 = vpop.f32.mrb[0].mxu0
      %621 = vmatprep.mubr.bf16.mxu0 0
      %622 = vmatmul.mubr.bf16.gmra.mrb[0].mxu0 %v411
      %v623 = vpop.f32.mrb[0].mxu0
      %v624 = vadd.f32 %v331, %v623
      %v625 = vpop.f32.mrb[0].mxu0
      %v626 = vpop.f32.mrb[0].mxu0
      %v627 = vadd.f32 %v331, %v626
      %v628 = vpop.f32.mrb[0].mxu0
      %629 = vmatprep.mubr.bf16.mxu0 0
      %630 = vmatmul.mubr.bf16.gmra.mrb[0].mxu0 %v412
      %v631 = vpop.f32.mrb[0].mxu0
      %v632 = vadd.f32 %v331, %v631
      %v633 = vpop.f32.mrb[0].mxu0
      %v634 = vpop.f32.mrb[0].mxu0
      %v635 = vadd.f32 %v331, %v634
      %v636 = vpop.f32.mrb[0].mxu0
      %637 = vdwg.mxu0
      %v638 = vmul.f32 %v512, %v512
      %v639 = vmul.f32 %v515, %v515
      %v640 = vmul.f32 %v520, %v520
      %v641 = vmul.f32 %v523, %v523
      %v642 = vmul.f32 %v528, %v528
      %v643 = vmul.f32 %v531, %v531
      %v644 = vmul.f32 %v536, %v536
      %v645 = vmul.f32 %v539, %v539
      %v646 = vmul.f32 %v544, %v544
      %v647 = vmul.f32 %v547, %v547
      %v648 = vmul.f32 %v552, %v552
      %v649 = vmul.f32 %v555, %v555
      %v650 = vmul.f32 %v560, %v560
      %v651 = vmul.f32 %v563, %v563
      %v652 = vmul.f32 %v568, %v568
      %v653 = vmul.f32 %v571, %v571
      %v654 = vmul.f32 %v576, %v576
      %v655 = vmul.f32 %v579, %v579
      %v656 = vmul.f32 %v584, %v584
      %v657 = vmul.f32 %v587, %v587
      %v658 = vmul.f32 %v592, %v592
      %v659 = vmul.f32 %v595, %v595
      %v660 = vmul.f32 %v600, %v600
      %v661 = vmul.f32 %v603, %v603
      %v662 = vmul.f32 %v608, %v608
      %v663 = vmul.f32 %v611, %v611
      %v664 = vmul.f32 %v616, %v616
      %v665 = vmul.f32 %v619, %v619
      %v666 = vmul.f32 %v624, %v624
      %v667 = vmul.f32 %v627, %v627
      %v668 = vmul.f32 %v632, %v632
      %v669 = vmul.f32 %v635, %v635
      %v670 = vld [vmem:[%s3] sm:$0xff]
      %v671 = vld [vmem:[%s3 + $0x8] sm:$0xff]
      %v672 = vld [vmem:[%s3 + $0x10] sm:$0xff]
      %v673 = vld [vmem:[%s3 + $0x18] sm:$0xff]
      %v674 = vld [vmem:[%s3 + $0x20] sm:$0xff]
      %v675 = vld [vmem:[%s3 + $0x28] sm:$0xff]
      %v676 = vld [vmem:[%s3 + $0x30] sm:$0xff]
      %v677 = vld [vmem:[%s3 + $0x38] sm:$0xff]
      %v678 = vld [vmem:[%s3 + $0x40] sm:$0xff]
      %v679 = vld [vmem:[%s3 + $0x48] sm:$0xff]
      %v680 = vld [vmem:[%s3 + $0x50] sm:$0xff]
      %v681 = vld [vmem:[%s3 + $0x58] sm:$0xff]
      %v682 = vld [vmem:[%s3 + $0x60] sm:$0xff]
      %v683 = vld [vmem:[%s3 + $0x68] sm:$0xff]
      %v684 = vld [vmem:[%s3 + $0x70] sm:$0xff]
      %v685 = vld [vmem:[%s3 + $0x78] sm:$0xff]
      %v686 = vld [vmem:[%s4] sm:$0x1]
      %v688 = vlaneseq
      %v689 = vshrl.u32 %v688, 7
      %v690 = vsub.s32 0, %v689
      %v691 = vrot.slane %v686, %v690
      %693 = vmatprep.subr.mxu0 0.0
      %694 = vmatpush1.msra.mxu0 %v670
      %695 = vmatprep.subr.mxu0 0.0
      %696 = vmatpush1.msra.mxu0 %v671
      %697 = vmatprep.subr.mxu0 0.0
      %698 = vmatpush1.msra.mxu0 %v672
      %699 = vmatprep.subr.mxu0 0.0
      %700 = vmatpush1.msra.mxu0 %v673
      %701 = vmatprep.subr.mxu0 0.0
      %702 = vmatpush1.msra.mxu0 %v674
      %703 = vmatprep.subr.mxu0 0.0
      %704 = vmatpush1.msra.mxu0 %v675
      %705 = vmatprep.subr.mxu0 0.0
      %706 = vmatpush1.msra.mxu0 %v676
      %707 = vmatprep.subr.mxu0 0.0
      %708 = vmatpush1.msra.mxu0 %v677
      %709 = vmatprep.subr.mxu0 0.0
      %710 = vmatpush1.msra.mxu0 %v678
      %711 = vmatprep.subr.mxu0 0.0
      %712 = vmatpush1.msra.mxu0 %v679
      %713 = vmatprep.subr.mxu0 0.0
      %714 = vmatpush1.msra.mxu0 %v680
      %715 = vmatprep.subr.mxu0 0.0
      %716 = vmatpush1.msra.mxu0 %v681
      %717 = vmatprep.subr.mxu0 0.0
      %718 = vmatpush1.msra.mxu0 %v682
      %719 = vmatprep.subr.mxu0 0.0
      %720 = vmatpush1.msra.mxu0 %v683
      %721 = vmatprep.subr.mxu0 0.0
      %722 = vmatpush1.msra.mxu0 %v684
      %723 = vmatprep.subr.mxu0 0.0
      %724 = vmatpush1.msra.mxu0 %v685
      %725 = vmatprep.subr.mxu0 0.0
      %726 = vmatpush1.msra.mxu0 0.0
      %727 = vmatprep.subr.mxu0 0.0
      %728 = vmatpush1.msra.mxu0 0.0
      %729 = vmatprep.subr.mxu0 0.0
      %730 = vmatpush1.msra.mxu0 0.0
      %731 = vmatprep.subr.mxu0 0.0
      %732 = vmatpush1.msra.mxu0 0.0
      %733 = vmatprep.subr.mxu0 0.0
      %734 = vmatpush1.msra.mxu0 0.0
      %735 = vmatprep.subr.mxu0 0.0
      %736 = vmatpush1.msra.mxu0 0.0
      %737 = vmatprep.subr.mxu0 0.0
      %738 = vmatpush1.msra.mxu0 0.0
      %739 = vmatprep.subr.mxu0 0.0
      %740 = vmatpush1.msra.mxu0 0.0
      %741 = vmatprep.subr.mxu0 0.0
      %742 = vmatpush1.msra.mxu0 0.0
      %743 = vmatprep.subr.mxu0 0.0
      %744 = vmatpush1.msra.mxu0 0.0
      %745 = vmatprep.subr.mxu0 0.0
      %746 = vmatpush1.msra.mxu0 0.0
      %747 = vmatprep.subr.mxu0 0.0
      %748 = vmatpush1.msra.mxu0 0.0
      %749 = vmatprep.subr.mxu0 0.0
      %750 = vmatpush1.msra.mxu0 0.0
      %751 = vmatprep.subr.mxu0 0.0
      %752 = vmatpush1.msra.mxu0 0.0
      %753 = vmatprep.subr.mxu0 0.0
      %754 = vmatpush1.msra.mxu0 0.0
      %755 = vmatprep.subr.mxu0 0.0
      %756 = vmatpush1.msra.mxu0 0.0
      %757 = vmatprep.mubr.f32.mxu0 0.0
      %758 = vmatmul.mubr.f32.gmra.mrb[0].mxu0 %v638
      %v759 = vpop.f32.mrb[0].mxu0
      %v760 = vadd.f32 %v691, %v759
      %v761 = vpop.f32.mrb[0].mxu0
      %762 = vmatprep.mubr.f32.mxu0 0.0
      %763 = vmatmul.mubr.f32.gmra.mrb[0].mxu0 %v639
      %v764 = vpop.f32.mrb[0].mxu0
      %v765 = vadd.f32 %v691, %v764
      %v766 = vpop.f32.mrb[0].mxu0
      %767 = vmatprep.mubr.f32.mxu0 0.0
      %768 = vmatmul.mubr.f32.gmra.mrb[0].mxu0 %v640
      %v769 = vpop.f32.mrb[0].mxu0
      %v770 = vadd.f32 %v691, %v769
      %v771 = vpop.f32.mrb[0].mxu0
      %772 = vmatprep.mubr.f32.mxu0 0.0
      %773 = vmatmul.mubr.f32.gmra.mrb[0].mxu0 %v641
      %v774 = vpop.f32.mrb[0].mxu0
      %v775 = vadd.f32 %v691, %v774
      %v776 = vpop.f32.mrb[0].mxu0
      %777 = vmatprep.mubr.f32.mxu0 0.0
      %778 = vmatmul.mubr.f32.gmra.mrb[0].mxu0 %v642
      %v779 = vpop.f32.mrb[0].mxu0
      %v780 = vadd.f32 %v691, %v779
      %v781 = vpop.f32.mrb[0].mxu0
      %782 = vmatprep.mubr.f32.mxu0 0.0
      %783 = vmatmul.mubr.f32.gmra.mrb[0].mxu0 %v643
      %v784 = vpop.f32.mrb[0].mxu0
      %v785 = vadd.f32 %v691, %v784
      %v786 = vpop.f32.mrb[0].mxu0
      %787 = vmatprep.mubr.f32.mxu0 0.0
      %788 = vmatmul.mubr.f32.gmra.mrb[0].mxu0 %v644
      %v789 = vpop.f32.mrb[0].mxu0
      %v790 = vadd.f32 %v691, %v789
      %v791 = vpop.f32.mrb[0].mxu0
      %792 = vmatprep.mubr.f32.mxu0 0.0
      %793 = vmatmul.mubr.f32.gmra.mrb[0].mxu0 %v645
      %v794 = vpop.f32.mrb[0].mxu0
      %v795 = vadd.f32 %v691, %v794
      %v796 = vpop.f32.mrb[0].mxu0
      %797 = vmatprep.mubr.f32.mxu0 0.0
      %798 = vmatmul.mubr.f32.gmra.mrb[0].mxu0 %v646
      %v799 = vpop.f32.mrb[0].mxu0
      %v800 = vadd.f32 %v691, %v799
      %v801 = vpop.f32.mrb[0].mxu0
      %802 = vmatprep.mubr.f32.mxu0 0.0
      %803 = vmatmul.mubr.f32.gmra.mrb[0].mxu0 %v647
      %v804 = vpop.f32.mrb[0].mxu0
      %v805 = vadd.f32 %v691, %v804
      %v806 = vpop.f32.mrb[0].mxu0
      %807 = vmatprep.mubr.f32.mxu0 0.0
      %808 = vmatmul.mubr.f32.gmra.mrb[0].mxu0 %v648
      %v809 = vpop.f32.mrb[0].mxu0
      %v810 = vadd.f32 %v691, %v809
      %v811 = vpop.f32.mrb[0].mxu0
      %812 = vmatprep.mubr.f32.mxu0 0.0
      %813 = vmatmul.mubr.f32.gmra.mrb[0].mxu0 %v649
      %v814 = vpop.f32.mrb[0].mxu0
      %v815 = vadd.f32 %v691, %v814
      %v816 = vpop.f32.mrb[0].mxu0
      %817 = vmatprep.mubr.f32.mxu0 0.0
      %818 = vmatmul.mubr.f32.gmra.mrb[0].mxu0 %v650
      %v819 = vpop.f32.mrb[0].mxu0
      %v820 = vadd.f32 %v691, %v819
      %v821 = vpop.f32.mrb[0].mxu0
      %822 = vmatprep.mubr.f32.mxu0 0.0
      %823 = vmatmul.mubr.f32.gmra.mrb[0].mxu0 %v651
      %v824 = vpop.f32.mrb[0].mxu0
      %v825 = vadd.f32 %v691, %v824
      %v826 = vpop.f32.mrb[0].mxu0
      %827 = vmatprep.mubr.f32.mxu0 0.0
      %828 = vmatmul.mubr.f32.gmra.mrb[0].mxu0 %v652
      %v829 = vpop.f32.mrb[0].mxu0
      %v830 = vadd.f32 %v691, %v829
      %v831 = vpop.f32.mrb[0].mxu0
      %832 = vmatprep.mubr.f32.mxu0 0.0
      %833 = vmatmul.mubr.f32.gmra.mrb[0].mxu0 %v653
      %v834 = vpop.f32.mrb[0].mxu0
      %v835 = vadd.f32 %v691, %v834
      %v836 = vpop.f32.mrb[0].mxu0
      %837 = vmatprep.mubr.f32.mxu0 0.0
      %838 = vmatmul.mubr.f32.gmra.mrb[0].mxu0 %v654
      %v839 = vpop.f32.mrb[0].mxu0
      %v840 = vadd.f32 %v691, %v839
      %v841 = vpop.f32.mrb[0].mxu0
      %842 = vmatprep.mubr.f32.mxu0 0.0
      %843 = vmatmul.mubr.f32.gmra.mrb[0].mxu0 %v655
      %v844 = vpop.f32.mrb[0].mxu0
      %v845 = vadd.f32 %v691, %v844
      %v846 = vpop.f32.mrb[0].mxu0
      %847 = vmatprep.mubr.f32.mxu0 0.0
      %848 = vmatmul.mubr.f32.gmra.mrb[0].mxu0 %v656
      %v849 = vpop.f32.mrb[0].mxu0
      %v850 = vadd.f32 %v691, %v849
      %v851 = vpop.f32.mrb[0].mxu0
      %852 = vmatprep.mubr.f32.mxu0 0.0
      %853 = vmatmul.mubr.f32.gmra.mrb[0].mxu0 %v657
      %v854 = vpop.f32.mrb[0].mxu0
      %v855 = vadd.f32 %v691, %v854
      %v856 = vpop.f32.mrb[0].mxu0
      %857 = vmatprep.mubr.f32.mxu0 0.0
      %858 = vmatmul.mubr.f32.gmra.mrb[0].mxu0 %v658
      %v859 = vpop.f32.mrb[0].mxu0
      %v860 = vadd.f32 %v691, %v859
      %v861 = vpop.f32.mrb[0].mxu0
      %862 = vmatprep.mubr.f32.mxu0 0.0
      %863 = vmatmul.mubr.f32.gmra.mrb[0].mxu0 %v659
      %v864 = vpop.f32.mrb[0].mxu0
      %v865 = vadd.f32 %v691, %v864
      %v866 = vpop.f32.mrb[0].mxu0
      %867 = vmatprep.mubr.f32.mxu0 0.0
      %868 = vmatmul.mubr.f32.gmra.mrb[0].mxu0 %v660
      %v869 = vpop.f32.mrb[0].mxu0
      %v870 = vadd.f32 %v691, %v869
      %v871 = vpop.f32.mrb[0].mxu0
      %872 = vmatprep.mubr.f32.mxu0 0.0
      %873 = vmatmul.mubr.f32.gmra.mrb[0].mxu0 %v661
      %v874 = vpop.f32.mrb[0].mxu0
      %v875 = vadd.f32 %v691, %v874
      %v876 = vpop.f32.mrb[0].mxu0
      %877 = vmatprep.mubr.f32.mxu0 0.0
      %878 = vmatmul.mubr.f32.gmra.mrb[0].mxu0 %v662
      %v879 = vpop.f32.mrb[0].mxu0
      %v880 = vadd.f32 %v691, %v879
      %v881 = vpop.f32.mrb[0].mxu0
      %882 = vmatprep.mubr.f32.mxu0 0.0
      %883 = vmatmul.mubr.f32.gmra.mrb[0].mxu0 %v663
      %v884 = vpop.f32.mrb[0].mxu0
      %v885 = vadd.f32 %v691, %v884
      %v886 = vpop.f32.mrb[0].mxu0
      %887 = vmatprep.mubr.f32.mxu0 0.0
      %888 = vmatmul.mubr.f32.gmra.mrb[0].mxu0 %v664
      %v889 = vpop.f32.mrb[0].mxu0
      %v890 = vadd.f32 %v691, %v889
      %v891 = vpop.f32.mrb[0].mxu0
      %892 = vmatprep.mubr.f32.mxu0 0.0
      %893 = vmatmul.mubr.f32.gmra.mrb[0].mxu0 %v665
      %v894 = vpop.f32.mrb[0].mxu0
      %v895 = vadd.f32 %v691, %v894
      %v896 = vpop.f32.mrb[0].mxu0
      %897 = vmatprep.mubr.f32.mxu0 0.0
      %898 = vmatmul.mubr.f32.gmra.mrb[0].mxu0 %v666
      %v899 = vpop.f32.mrb[0].mxu0
      %v900 = vadd.f32 %v691, %v899
      %v901 = vpop.f32.mrb[0].mxu0
      %902 = vmatprep.mubr.f32.mxu0 0.0
      %903 = vmatmul.mubr.f32.gmra.mrb[0].mxu0 %v667
      %v904 = vpop.f32.mrb[0].mxu0
      %v905 = vadd.f32 %v691, %v904
      %v906 = vpop.f32.mrb[0].mxu0
      %907 = vmatprep.mubr.f32.mxu0 0.0
      %908 = vmatmul.mubr.f32.gmra.mrb[0].mxu0 %v668
      %v909 = vpop.f32.mrb[0].mxu0
      %v910 = vadd.f32 %v691, %v909
      %v911 = vpop.f32.mrb[0].mxu0
      %912 = vmatprep.mubr.f32.mxu0 0.0
      %913 = vmatmul.mubr.f32.gmra.mrb[0].mxu0 %v669
      %v914 = vpop.f32.mrb[0].mxu0
      %v915 = vadd.f32 %v691, %v914
      %v916 = vpop.f32.mrb[0].mxu0
      %917 = vdwg.mxu0
      %v918 = vrsqrt.pop %v760
      %v919 = vrsqrt.pop %v765
      %v920 = vrsqrt.pop %v770
      %v921 = vrsqrt.pop %v775
      %v922 = vrsqrt.pop %v780
      %v923 = vrsqrt.pop %v785
      %v924 = vrsqrt.pop %v790
      %v925 = vrsqrt.pop %v795
      %v926 = vrsqrt.pop %v800
      %v927 = vrsqrt.pop %v805
      %v928 = vrsqrt.pop %v810
      %v929 = vrsqrt.pop %v815
      %v930 = vrsqrt.pop %v820
      %v931 = vrsqrt.pop %v825
      %v932 = vrsqrt.pop %v830
      %v933 = vrsqrt.pop %v835
      %v934 = vrsqrt.pop %v840
      %v935 = vrsqrt.pop %v845
      %v936 = vrsqrt.pop %v850
      %v937 = vrsqrt.pop %v855
      %v938 = vrsqrt.pop %v860
      %v939 = vrsqrt.pop %v865
      %v940 = vrsqrt.pop %v870
      %v941 = vrsqrt.pop %v875
      %v942 = vrsqrt.pop %v880
      %v943 = vrsqrt.pop %v885
      %v944 = vrsqrt.pop %v890
      %v945 = vrsqrt.pop %v895
      %v946 = vrsqrt.pop %v900
      %v947 = vrsqrt.pop %v905
      %v948 = vrsqrt.pop %v910
      %v949 = vrsqrt.pop %v915
      %v950 = vmul.f32 %v512, %v918
      %v951 = vmul.f32 %v515, %v919
      %v952 = vmul.f32 %v520, %v920
      %v953 = vmul.f32 %v523, %v921
      %v954 = vmul.f32 %v528, %v922
      %v955 = vmul.f32 %v531, %v923
      %v956 = vmul.f32 %v536, %v924
      %v957 = vmul.f32 %v539, %v925
      %v958 = vmul.f32 %v544, %v926
      %v959 = vmul.f32 %v547, %v927
      %v960 = vmul.f32 %v552, %v928
      %v961 = vmul.f32 %v555, %v929
      %v962 = vmul.f32 %v560, %v930
      %v963 = vmul.f32 %v563, %v931
      %v964 = vmul.f32 %v568, %v932
      %v965 = vmul.f32 %v571, %v933
      %v966 = vmul.f32 %v576, %v934
      %v967 = vmul.f32 %v579, %v935
      %v968 = vmul.f32 %v584, %v936
      %v969 = vmul.f32 %v587, %v937
      %v970 = vmul.f32 %v592, %v938
      %v971 = vmul.f32 %v595, %v939
      %v972 = vmul.f32 %v600, %v940
      %v973 = vmul.f32 %v603, %v941
      %v974 = vmul.f32 %v608, %v942
      %v975 = vmul.f32 %v611, %v943
      %v976 = vmul.f32 %v616, %v944
      %v977 = vmul.f32 %v619, %v945
      %v978 = vmul.f32 %v624, %v946
      %v979 = vmul.f32 %v627, %v947
      %v980 = vmul.f32 %v632, %v948
      %v981 = vmul.f32 %v635, %v949
      %v982 = vld [vmem:[%s269] sm:$0xff]
      %v983 = vld [vmem:[%s269 + $0x8] sm:$0xff]
      %v984 = vld [vmem:[%s269 + $0x10] sm:$0xff]
      %v985 = vld [vmem:[%s269 + $0x18] sm:$0xff]
      %v986 = vld [vmem:[%s269 + $0x20] sm:$0xff]
      %v987 = vld [vmem:[%s269 + $0x28] sm:$0xff]
      %v988 = vld [vmem:[%s269 + $0x30] sm:$0xff]
      %v989 = vld [vmem:[%s269 + $0x38] sm:$0xff]
      %v990 = vld [vmem:[%s269 + $0x40] sm:$0xff]
      %v991 = vld [vmem:[%s269 + $0x48] sm:$0xff]
      %v992 = vld [vmem:[%s269 + $0x50] sm:$0xff]
      %v993 = vld [vmem:[%s269 + $0x58] sm:$0xff]
      %v994 = vld [vmem:[%s269 + $0x60] sm:$0xff]
      %v995 = vld [vmem:[%s269 + $0x68] sm:$0xff]
      %v996 = vld [vmem:[%s269 + $0x70] sm:$0xff]
      %v997 = vld [vmem:[%s269 + $0x78] sm:$0xff]
      %v998 = vld [vmem:[%s269 + $0x80] sm:$0xff]
      %v999 = vld [vmem:[%s269 + $0x88] sm:$0xff]
      %v1000 = vld [vmem:[%s269 + $0x90] sm:$0xff]
      %v1001 = vld [vmem:[%s269 + $0x98] sm:$0xff]
      %v1002 = vld [vmem:[%s269 + $0xa0] sm:$0xff]
      %v1003 = vld [vmem:[%s269 + $0xa8] sm:$0xff]
      %v1004 = vld [vmem:[%s269 + $0xb0] sm:$0xff]
      %v1005 = vld [vmem:[%s269 + $0xb8] sm:$0xff]
      %v1006 = vld [vmem:[%s269 + $0xc0] sm:$0xff]
      %v1007 = vld [vmem:[%s269 + $0xc8] sm:$0xff]
      %v1008 = vld [vmem:[%s269 + $0xd0] sm:$0xff]
      %v1009 = vld [vmem:[%s269 + $0xd8] sm:$0xff]
      %v1010 = vld [vmem:[%s269 + $0xe0] sm:$0xff]
      %v1011 = vld [vmem:[%s269 + $0xe8] sm:$0xff]
      %v1012 = vld [vmem:[%s269 + $0xf0] sm:$0xff]
      %v1013 = vld [vmem:[%s269 + $0xf8] sm:$0xff]
      %v1014 = vadd.f32 %v950, %v982
      %v1015 = vadd.f32 %v951, %v983
      %v1016 = vadd.f32 %v952, %v984
      %v1017 = vadd.f32 %v953, %v985
      %v1018 = vadd.f32 %v954, %v986
      %v1019 = vadd.f32 %v955, %v987
      %v1020 = vadd.f32 %v956, %v988
      %v1021 = vadd.f32 %v957, %v989
      %v1022 = vadd.f32 %v958, %v990
      %v1023 = vadd.f32 %v959, %v991
      %v1024 = vadd.f32 %v960, %v992
      %v1025 = vadd.f32 %v961, %v993
      %v1026 = vadd.f32 %v962, %v994
      %v1027 = vadd.f32 %v963, %v995
      %v1028 = vadd.f32 %v964, %v996
      %v1029 = vadd.f32 %v965, %v997
      %v1030 = vadd.f32 %v966, %v998
      %v1031 = vadd.f32 %v967, %v999
      %v1032 = vadd.f32 %v968, %v1000
      %v1033 = vadd.f32 %v969, %v1001
      %v1034 = vadd.f32 %v970, %v1002
      %v1035 = vadd.f32 %v971, %v1003
      %v1036 = vadd.f32 %v972, %v1004
      %v1037 = vadd.f32 %v973, %v1005
      %v1038 = vadd.f32 %v974, %v1006
      %v1039 = vadd.f32 %v975, %v1007
      %v1040 = vadd.f32 %v976, %v1008
      %v1041 = vadd.f32 %v977, %v1009
      %v1042 = vadd.f32 %v978, %v1010
      %v1043 = vadd.f32 %v979, %v1011
      %v1044 = vadd.f32 %v980, %v1012
      %v1045 = vadd.f32 %v981, %v1013
      %vm1046 = vcmask 64512
      %1047 = vst.msk [vmem:[%s275] sm:$0xff] %vm1046, %v1014
      %1048 = vst.msk [vmem:[%s275 + $0x8] sm:$0xff] %vm1046, %v1015
      %1049 = vst.msk [vmem:[%s275 + $0x10] sm:$0xff] %vm1046, %v1016
      %1050 = vst.msk [vmem:[%s275 + $0x18] sm:$0xff] %vm1046, %v1017
      %1051 = vst.msk [vmem:[%s275 + $0x20] sm:$0xff] %vm1046, %v1018
      %1052 = vst.msk [vmem:[%s275 + $0x28] sm:$0xff] %vm1046, %v1019
      %1053 = vst.msk [vmem:[%s275 + $0x30] sm:$0xff] %vm1046, %v1020
      %1054 = vst.msk [vmem:[%s275 + $0x38] sm:$0xff] %vm1046, %v1021
      %1055 = vst.msk [vmem:[%s275 + $0x40] sm:$0xff] %vm1046, %v1022
      %1056 = vst.msk [vmem:[%s275 + $0x48] sm:$0xff] %vm1046, %v1023
      %1057 = vst.msk [vmem:[%s275 + $0x50] sm:$0xff] %vm1046, %v1024
      %1058 = vst.msk [vmem:[%s275 + $0x58] sm:$0xff] %vm1046, %v1025
      %1059 = vst.msk [vmem:[%s275 + $0x60] sm:$0xff] %vm1046, %v1026
      %1060 = vst.msk [vmem:[%s275 + $0x68] sm:$0xff] %vm1046, %v1027
      %1061 = vst.msk [vmem:[%s275 + $0x70] sm:$0xff] %vm1046, %v1028
      %1062 = vst.msk [vmem:[%s275 + $0x78] sm:$0xff] %vm1046, %v1029
      %1063 = vst.msk [vmem:[%s275 + $0x80] sm:$0xff] %vm1046, %v1030
      %1064 = vst.msk [vmem:[%s275 + $0x88] sm:$0xff] %vm1046, %v1031
      %1065 = vst.msk [vmem:[%s275 + $0x90] sm:$0xff] %vm1046, %v1032
      %1066 = vst.msk [vmem:[%s275 + $0x98] sm:$0xff] %vm1046, %v1033
      %1067 = vst.msk [vmem:[%s275 + $0xa0] sm:$0xff] %vm1046, %v1034
      %1068 = vst.msk [vmem:[%s275 + $0xa8] sm:$0xff] %vm1046, %v1035
      %1069 = vst.msk [vmem:[%s275 + $0xb0] sm:$0xff] %vm1046, %v1036
      %1070 = vst.msk [vmem:[%s275 + $0xb8] sm:$0xff] %vm1046, %v1037
      %1071 = vst.msk [vmem:[%s275 + $0xc0] sm:$0xff] %vm1046, %v1038
      %1072 = vst.msk [vmem:[%s275 + $0xc8] sm:$0xff] %vm1046, %v1039
      %1073 = vst.msk [vmem:[%s275 + $0xd0] sm:$0xff] %vm1046, %v1040
      %1074 = vst.msk [vmem:[%s275 + $0xd8] sm:$0xff] %vm1046, %v1041
      %1075 = vst.msk [vmem:[%s275 + $0xe0] sm:$0xff] %vm1046, %v1042
      %1076 = vst.msk [vmem:[%s275 + $0xe8] sm:$0xff] %vm1046, %v1043
      %1077 = vst.msk [vmem:[%s275 + $0xf0] sm:$0xff] %vm1046, %v1044
      %1078 = vst.msk [vmem:[%s275 + $0xf8] sm:$0xff] %vm1046, %v1045
      %s1079 = smul.u32 32, %s17
      %p1080 = scmp.lt.s32.totalorder %s1079, 63
      %s1081 = scalar_select %p1080, %s1079, 63
      %s1082 = smul.addr %s1081, 8
      %s1083 = scalar_lea.vmem %s6, %s1082
      // Predicated region
      $region45: #{_lambda_.7} parent=43 // pred_check
        %p1084 = pneg %p171
      $region46: #{_lambda_.7} parent=43 // pred_check_branch
        %1086 = sbr.rel (%p1084) target = $region48
      $region47: #{_lambda_.7} parent=43 // pred_region
        %s1087 = smul.u32 32, %s17
      $region48: #{_lambda_.7} parent=43 // pred_fallthru
        _
    $region44: #{_lambda_.7} parent=5 // pred_fallthru
      _
    %p1088 = scmp.le.s32.totalorder 2, %s12
    // Predicated region
    $region49: #{_lambda_.7} parent=5 // pred_check
      %p1089 = pneg %p1088
    $region50: #{_lambda_.7} parent=5 // pred_check_branch
      %1091 = sbr.rel (%p1089) target = $region52
    $region51: #{_lambda_.7} parent=5 // pred_region
      %s1092 = ssub.s32 %s12, 2
      // Predicated region
      $region53: #{_lambda_.7} parent=51 // pred_check
        %p1093 = pneg %p177
      $region54: #{_lambda_.7} parent=51 // pred_check_branch
        %1095 = sbr.rel (%p1093) target = $region56
      $region55: #{_lambda_.7} parent=51 // pred_region
        %s1096 = smul.u32 32, %s18
        %p1097 = scmp.lt.s32.totalorder %s1096, 63
        %s1098 = scalar_select %p1097, %s1096, 63
        %s1099 = smul.addr %s1098, 8
        %s1100 = scalar_lea.vmem %s6, %s1099
      $region56: #{_lambda_.7} parent=51 // pred_fallthru
        _
    $region52: #{_lambda_.7} parent=5 // pred_fallthru
      _
  $region6: #{_lambda_.7} parent=0 // loop_footer
    %s16 = sadd.s32 1, %s12
  $region7: #{_lambda_.7} parent=0 // loop_footer_branch
    %11 = sbr.rel target = $region3
  $region8: #{_lambda_.7} parent=0 // loop_exit
    _

// kernel: _lambda_.4
$region0: #{_lambda_.4}
  #allocation0 [shape = 'u32[]', space=smem, size = 0x4, offset = 0x4, fixed_abs, tag = 'smem constant byte address 0x4 - core index']
  #allocation1 [shape = 'u32[144,128]{1,0:T(1,128)}', space=vmem, size = 0x12000, scoped, tag = 'internal scratch']
  %s0 = inlined_call_operand.vmem [shape: bf16[512,128], index: 0, kind: input, shape index: {}]
  %s1 = inlined_call_operand.vmem [shape: bf16[128,128], index: 1, kind: input, shape index: {}]
  %s2 = inlined_call_operand.vmem [shape: f32[1,128], index: 2, kind: input, shape index: {}]
  %s3 = inlined_call_operand.vmem [shape: f32[128,128], index: 3, kind: input, shape index: {}]
  %s4 = inlined_call_operand.vmem [shape: f32[1,128], index: 4, kind: input, shape index: {}]
  %s5 = inlined_call_operand.vmem [shape: f32[512,8], index: 5, kind: output, shape index: {}]
  %s6 = sld [smem:[#allocation0]]
  $region53: #{_lambda_.4} parent=0
    _
  %s8 = ssub.s32 1, %s6
  %s9 = scalar_select 0, %s8, %s6
  loop: start=0, step=1, limit=4
  $region2: #{_lambda_.4} parent=0 // loop_pre_header
    _
  $region3: #{_lambda_.4} parent=0 // loop_header
    %s11 = sphi 0, %s15
    %p12 = scmp.ge.s32.totalorder %s11, 4
    %s21 = sphi 0, %s23
    %s24 = sphi 0, %s21
    %s25 = sphi 0, %s24
    %s41 = sphi 0, %s25
    %s45 = sphi 0, %s45
    %s47 = sphi 0, %s45
    %s48 = sphi 0, %s47
    %s62 = sphi 0, %s48
    %s66 = sphi 0, %s66
    %s68 = sphi 0, %s66
    %s69 = sphi 0, %s68
    %s83 = sphi 0, %s69
    %s87 = sphi 0, %s87
    %s89 = sphi 0, %s87
    %s90 = sphi 0, %s89
    %s104 = sphi 0, %s90
    %s108 = sphi 0, %s108
    %s110 = sphi 0, %s108
    %s111 = sphi 0, %s110
    %s125 = sphi 0, %s111
    %s131 = sphi 0, %s133
    %s134 = sphi 0, %s131
    %s135 = sphi 0, %s134
    %s151 = sphi 0, %s135
  $region4: #{_lambda_.4} parent=0 // loop_header_branch
    %14 = sbr.rel (%p12) target = $region8
  $region5: #{_lambda_.4} parent=0 // loop_body
    %s16 = ssub.s32 %s11, 1
    %s17 = ssub.s32 %s11, 2
    %s18 = sadd.s32 %s11, 1
    %s19 = ssub.s32 %s11, %s18
    %p20 = scmp.eq.s32.totalorder %s19, 0
    %s22 = sadd.s32 %s21, 1
    %s23 = scalar_select %p20, %s21, %s22
    %p26 = pneg %p20
    %p27 = scmp.eq.s32.totalorder %s11, 1
    %p28 = por %p26, %p27
    %p29 = scmp.ne.s32.totalorder %s21, %s24
    %p30 = scmp.eq.s32.totalorder %s11, 0
    %p31 = por %p29, %p30
    %p32 = scmp.ne.s32.totalorder %s21, %s24
    %p33 = scmp.eq.s32.totalorder %s16, 1
    %p34 = por %p32, %p33
    %p35 = scmp.ne.s32.totalorder %s24, %s25
    %p36 = scmp.eq.s32.totalorder %s16, 0
    %p37 = por %p35, %p36
    %p38 = scmp.ne.s32.totalorder %s24, %s25
    %p39 = scmp.eq.s32.totalorder %s17, 1
    %p40 = por %p38, %p39
    %p42 = scmp.ne.s32.totalorder %s25, %s41
    %p43 = scmp.eq.s32.totalorder %s17, 0
    %p44 = por %p42, %p43
    %s46 = sadd.s32 %s45, 1
    %p49 = scmp.eq.s32.totalorder %s11, 1
    %p50 = scmp.ne.s32.totalorder %s45, %s47
    %p51 = scmp.eq.s32.totalorder %s11, 0
    %p52 = por %p50, %p51
    %p53 = scmp.ne.s32.totalorder %s45, %s47
    %p54 = scmp.eq.s32.totalorder %s16, 1
    %p55 = por %p53, %p54
    %p56 = scmp.ne.s32.totalorder %s47, %s48
    %p57 = scmp.eq.s32.totalorder %s16, 0
    %p58 = por %p56, %p57
    %p59 = scmp.ne.s32.totalorder %s47, %s48
    %p60 = scmp.eq.s32.totalorder %s17, 1
    %p61 = por %p59, %p60
    %p63 = scmp.ne.s32.totalorder %s48, %s62
    %p64 = scmp.eq.s32.totalorder %s17, 0
    %p65 = por %p63, %p64
    %s67 = sadd.s32 %s66, 1
    %p70 = scmp.eq.s32.totalorder %s11, 1
    %p71 = scmp.ne.s32.totalorder %s66, %s68
    %p72 = scmp.eq.s32.totalorder %s11, 0
    %p73 = por %p71, %p72
    %p74 = scmp.ne.s32.totalorder %s66, %s68
    %p75 = scmp.eq.s32.totalorder %s16, 1
    %p76 = por %p74, %p75
    %p77 = scmp.ne.s32.totalorder %s68, %s69
    %p78 = scmp.eq.s32.totalorder %s16, 0
    %p79 = por %p77, %p78
    %p80 = scmp.ne.s32.totalorder %s68, %s69
    %p81 = scmp.eq.s32.totalorder %s17, 1
    %p82 = por %p80, %p81
    %p84 = scmp.ne.s32.totalorder %s69, %s83
    %p85 = scmp.eq.s32.totalorder %s17, 0
    %p86 = por %p84, %p85
    %s88 = sadd.s32 %s87, 1
    %p91 = scmp.eq.s32.totalorder %s11, 1
    %p92 = scmp.ne.s32.totalorder %s87, %s89
    %p93 = scmp.eq.s32.totalorder %s11, 0
    %p94 = por %p92, %p93
    %p95 = scmp.ne.s32.totalorder %s87, %s89
    %p96 = scmp.eq.s32.totalorder %s16, 1
    %p97 = por %p95, %p96
    %p98 = scmp.ne.s32.totalorder %s89, %s90
    %p99 = scmp.eq.s32.totalorder %s16, 0
    %p100 = por %p98, %p99
    %p101 = scmp.ne.s32.totalorder %s89, %s90
    %p102 = scmp.eq.s32.totalorder %s17, 1
    %p103 = por %p101, %p102
    %p105 = scmp.ne.s32.totalorder %s90, %s104
    %p106 = scmp.eq.s32.totalorder %s17, 0
    %p107 = por %p105, %p106
    %s109 = sadd.s32 %s108, 1
    %p112 = scmp.eq.s32.totalorder %s11, 1
    %p113 = scmp.ne.s32.totalorder %s108, %s110
    %p114 = scmp.eq.s32.totalorder %s11, 0
    %p115 = por %p113, %p114
    %p116 = scmp.ne.s32.totalorder %s108, %s110
    %p117 = scmp.eq.s32.totalorder %s16, 1
    %p118 = por %p116, %p117
    %p119 = scmp.ne.s32.totalorder %s110, %s111
    %p120 = scmp.eq.s32.totalorder %s16, 0
    %p121 = por %p119, %p120
    %p122 = scmp.ne.s32.totalorder %s110, %s111
    %p123 = scmp.eq.s32.totalorder %s17, 1
    %p124 = por %p122, %p123
    %p126 = scmp.ne.s32.totalorder %s111, %s125
    %p127 = scmp.eq.s32.totalorder %s17, 0
    %p128 = por %p126, %p127
    %s129 = ssub.s32 %s11, %s18
    %p130 = scmp.eq.s32.totalorder %s129, 0
    %s132 = sadd.s32 %s131, 1
    %s133 = scalar_select %p130, %s131, %s132
    %p136 = pneg %p130
    %p137 = scmp.eq.s32.totalorder %s11, 1
    %p138 = por %p136, %p137
    %p139 = scmp.ne.s32.totalorder %s131, %s134
    %p140 = scmp.eq.s32.totalorder %s11, 0
    %p141 = por %p139, %p140
    %p142 = scmp.ne.s32.totalorder %s131, %s134
    %p143 = scmp.eq.s32.totalorder %s16, 1
    %p144 = por %p142, %p143
    %p145 = scmp.ne.s32.totalorder %s134, %s135
    %p146 = scmp.eq.s32.totalorder %s16, 0
    %p147 = por %p145, %p146
    %p148 = scmp.ne.s32.totalorder %s134, %s135
    %p149 = scmp.eq.s32.totalorder %s17, 1
    %p150 = por %p148, %p149
    %p152 = scmp.ne.s32.totalorder %s135, %s151
    %p153 = scmp.eq.s32.totalorder %s17, 0
    %p154 = por %p152, %p153
    %p155 = scmp.le.s32.totalorder 1, %s11
    %p156 = scmp.lt.s32.totalorder %s11, 3
    %p157 = pnand %p155, %p156
    %p158 = pneg %p157
    // Predicated region
    $region9: #{_lambda_.4} parent=5 // pred_check
      _
    $region10: #{_lambda_.4} parent=5 // pred_check_branch
      %160 = sbr.rel (%p157) target = $region12
    $region11: #{_lambda_.4} parent=5 // pred_region
      %s161 = ssub.s32 %s11, 1
      // Predicated region
      $region13: #{_lambda_.4} parent=11 // pred_check
        %p162 = pneg %p58
      $region14: #{_lambda_.4} parent=11 // pred_check_branch
        %164 = sbr.rel (%p162) target = $region16
      $region15: #{_lambda_.4} parent=11 // pred_region
        _
      $region16: #{_lambda_.4} parent=11 // pred_fallthru
        _
      // Predicated region
      $region17: #{_lambda_.4} parent=11 // pred_check
        %p165 = pneg %p79
      $region18: #{_lambda_.4} parent=11 // pred_check_branch
        %167 = sbr.rel (%p165) target = $region20
      $region19: #{_lambda_.4} parent=11 // pred_region
        _
      $region20: #{_lambda_.4} parent=11 // pred_fallthru
        _
      // Predicated region
      $region21: #{_lambda_.4} parent=11 // pred_check
        %p168 = pneg %p100
      $region22: #{_lambda_.4} parent=11 // pred_check_branch
        %170 = sbr.rel (%p168) target = $region24
      $region23: #{_lambda_.4} parent=11 // pred_region
        _
      $region24: #{_lambda_.4} parent=11 // pred_fallthru
        _
      // Predicated region
      $region25: #{_lambda_.4} parent=11 // pred_check
        %p171 = pneg %p121
      $region26: #{_lambda_.4} parent=11 // pred_check_branch
        %173 = sbr.rel (%p171) target = $region28
      $region27: #{_lambda_.4} parent=11 // pred_region
        _
      $region28: #{_lambda_.4} parent=11 // pred_fallthru
        _
    $region12: #{_lambda_.4} parent=5 // pred_fallthru
      _
    %p174 = scmp.lt.s32.totalorder %s11, 2
    // Predicated region
    $region29: #{_lambda_.4} parent=5 // pred_check
      %p175 = pneg %p174
    $region30: #{_lambda_.4} parent=5 // pred_check_branch
      %177 = sbr.rel (%p175) target = $region32
    $region31: #{_lambda_.4} parent=5 // pred_region
      // Predicated region
      $region33: #{_lambda_.4} parent=31 // pred_check
        %p178 = pneg %p31
      $region34: #{_lambda_.4} parent=31 // pred_check_branch
        %180 = sbr.rel (%p178) target = $region36
      $region35: #{_lambda_.4} parent=31 // pred_region
        %s181 = smul.u32 32, %s11
        %p182 = scmp.lt.s32.totalorder %s181, 63
        %s183 = scalar_select %p182, %s181, 63
        %s184 = smul.addr %s183, 4
        %s185 = scalar_lea.vmem %s0, %s184
        %s186 = smul.u32 32, %s11
      $region36: #{_lambda_.4} parent=31 // pred_fallthru
        _
    $region32: #{_lambda_.4} parent=5 // pred_fallthru
      _
    %p187 = scmp.le.s32.totalorder 1, %s11
    %p188 = scmp.lt.s32.totalorder %s11, 3
    %p189 = pnand %p187, %p188
    %p190 = pneg %p189
    // Predicated region
    $region37: #{_lambda_.4} parent=5 // pred_check
      _
    $region38: #{_lambda_.4} parent=5 // pred_check_branch
      %192 = sbr.rel (%p189) target = $region40
    $region39: #{_lambda_.4} parent=5 // pred_region
      %s193 = ssub.s32 %s11, 1
      %s194 = smul.u32 32, %s16
      %p195 = scmp.lt.s32.totalorder %s194, 63
      %s196 = scalar_select %p195, %s194, 63
      %s197 = smul.addr %s196, 4
      %s198 = scalar_lea.vmem %s0, %s197
      %p199 = pneg %p37
      %p200 = pneg %p34
      %p201 = pneg %p58
      %p202 = pneg %p55
      %p203 = pneg %p79
      %p204 = pneg %p76
      %p205 = pneg %p100
      %p206 = pneg %p97
      %p207 = pneg %p121
      %p208 = pneg %p118
      %p209 = pneg %p147
      %p210 = pneg %p144
      %s211 = smul.u32 32, %s16
      %p212 = scmp.lt.s32.totalorder %s211, 63
      %s213 = scalar_select %p212, %s211, 63
      %s214 = smul.addr %s213, 8
      %s215 = scalar_lea.vmem %s5, %s214
      %s216 = smul.u32 32, %s16
      %p217 = scmp.lt.s32.totalorder %s216, 63
      %s218 = scalar_select %p217, %s216, 63
      %s219 = smul.addr %s218, 4
      %s220 = scalar_lea.vmem %s0, %s219
      %s221 = smul.u32 32, %s16
      %s222 = smul.u32 32, %s16
      %p223 = scmp.lt.s32.totalorder %s222, 63
      %s224 = scalar_select %p223, %s222, 63
      %s225 = smul.addr %s224, 8
      %s226 = scalar_lea.vmem %s5, %s225
      %s227 = smul.u32 32, %s16
      %v229 = vld [vmem:[%s220] sm:$0xf]
      %v230 = vld [vmem:[%s220 + $0x4] sm:$0xf]
      %v231 = vld [vmem:[%s220 + $0x8] sm:$0xf]
      %v232 = vld [vmem:[%s220 + $0xc] sm:$0xf]
      %v233 = vld [vmem:[%s220 + $0x10] sm:$0xf]
      %v234 = vld [vmem:[%s220 + $0x14] sm:$0xf]
      %v235 = vld [vmem:[%s220 + $0x18] sm:$0xf]
      %v236 = vld [vmem:[%s220 + $0x1c] sm:$0xf]
      %v237 = vld [vmem:[%s220 + $0x20] sm:$0xf]
      %v238 = vld [vmem:[%s220 + $0x24] sm:$0xf]
      %v239 = vld [vmem:[%s220 + $0x28] sm:$0xf]
      %v240 = vld [vmem:[%s220 + $0x2c] sm:$0xf]
      %v241 = vld [vmem:[%s220 + $0x30] sm:$0xf]
      %v242 = vld [vmem:[%s220 + $0x34] sm:$0xf]
      %v243 = vld [vmem:[%s220 + $0x38] sm:$0xf]
      %v244 = vld [vmem:[%s220 + $0x3c] sm:$0xf]
      %v245 = vld [vmem:[%s220 + $0x40] sm:$0xf]
      %v246 = vld [vmem:[%s220 + $0x44] sm:$0xf]
      %v247 = vld [vmem:[%s220 + $0x48] sm:$0xf]
      %v248 = vld [vmem:[%s220 + $0x4c] sm:$0xf]
      %v249 = vld [vmem:[%s220 + $0x50] sm:$0xf]
      %v250 = vld [vmem:[%s220 + $0x54] sm:$0xf]
      %v251 = vld [vmem:[%s220 + $0x58] sm:$0xf]
      %v252 = vld [vmem:[%s220 + $0x5c] sm:$0xf]
      %v253 = vld [vmem:[%s220 + $0x60] sm:$0xf]
      %v254 = vld [vmem:[%s220 + $0x64] sm:$0xf]
      %v255 = vld [vmem:[%s220 + $0x68] sm:$0xf]
      %v256 = vld [vmem:[%s220 + $0x6c] sm:$0xf]
      %v257 = vld [vmem:[%s220 + $0x70] sm:$0xf]
      %v258 = vld [vmem:[%s220 + $0x74] sm:$0xf]
      %v259 = vld [vmem:[%s220 + $0x78] sm:$0xf]
      %v260 = vld [vmem:[%s220 + $0x7c] sm:$0xf]
      %v261 = vld [vmem:[%s1] sm:$0xf]
      %v262 = vld [vmem:[%s1 + $0x4] sm:$0xf]
      %v263 = vld [vmem:[%s1 + $0x8] sm:$0xf]
      %v264 = vld [vmem:[%s1 + $0xc] sm:$0xf]
      %v265 = vld [vmem:[%s1 + $0x10] sm:$0xf]
      %v266 = vld [vmem:[%s1 + $0x14] sm:$0xf]
      %v267 = vld [vmem:[%s1 + $0x18] sm:$0xf]
      %v268 = vld [vmem:[%s1 + $0x1c] sm:$0xf]
      %v269 = vld [vmem:[%s1 + $0x20] sm:$0xf]
      %v270 = vld [vmem:[%s1 + $0x24] sm:$0xf]
      %v271 = vld [vmem:[%s1 + $0x28] sm:$0xf]
      %v272 = vld [vmem:[%s1 + $0x2c] sm:$0xf]
      %v273 = vld [vmem:[%s1 + $0x30] sm:$0xf]
      %v274 = vld [vmem:[%s1 + $0x34] sm:$0xf]
      %v275 = vld [vmem:[%s1 + $0x38] sm:$0xf]
      %v276 = vld [vmem:[%s1 + $0x3c] sm:$0xf]
      %v277 = vld [vmem:[%s2] sm:$0x1]
      %v279 = vlaneseq
      %v280 = vshrl.u32 %v279, 7
      %v281 = vsub.s32 0, %v280
      %v282 = vrot.slane %v277, %v281
      %v316 = vunpack.c.l.b16 %v229
      %v317 = vunpack.c.l.b16 %v230
      %v318 = vunpack.c.l.b16 %v231
      %v319 = vunpack.c.l.b16 %v232
      %v320 = vunpack.c.l.b16 %v233
      %v321 = vunpack.c.l.b16 %v234
      %v322 = vunpack.c.l.b16 %v235
      %v323 = vunpack.c.l.b16 %v236
      %v324 = vunpack.c.l.b16 %v237
      %v325 = vunpack.c.l.b16 %v238
      %v326 = vunpack.c.l.b16 %v239
      %v327 = vunpack.c.l.b16 %v240
      %v328 = vunpack.c.l.b16 %v241
      %v329 = vunpack.c.l.b16 %v242
      %v330 = vunpack.c.l.b16 %v243
      %v331 = vunpack.c.l.b16 %v244
      %v332 = vunpack.c.l.b16 %v245
      %v333 = vunpack.c.l.b16 %v246
      %v334 = vunpack.c.l.b16 %v247
      %v335 = vunpack.c.l.b16 %v248
      %v336 = vunpack.c.l.b16 %v249
      %v337 = vunpack.c.l.b16 %v250
      %v338 = vunpack.c.l.b16 %v251
      %v339 = vunpack.c.l.b16 %v252
      %v340 = vunpack.c.l.b16 %v253
      %v341 = vunpack.c.l.b16 %v254
      %v342 = vunpack.c.l.b16 %v255
      %v343 = vunpack.c.l.b16 %v256
      %v344 = vunpack.c.l.b16 %v257
      %v345 = vunpack.c.l.b16 %v258
      %v346 = vunpack.c.l.b16 %v259
      %v347 = vunpack.c.l.b16 %v260
      %v348 = vpack.c.b16 %v317, %v316
      %v349 = vpack.c.b16 %v319, %v318
      %v350 = vpack.c.b16 %v321, %v320
      %v351 = vpack.c.b16 %v323, %v322
      %v352 = vpack.c.b16 %v325, %v324
      %v353 = vpack.c.b16 %v327, %v326
      %v354 = vpack.c.b16 %v329, %v328
      %v355 = vpack.c.b16 %v331, %v330
      %v356 = vpack.c.b16 %v333, %v332
      %v357 = vpack.c.b16 %v335, %v334
      %v358 = vpack.c.b16 %v337, %v336
      %v359 = vpack.c.b16 %v339, %v338
      %v360 = vpack.c.b16 %v341, %v340
      %v361 = vpack.c.b16 %v343, %v342
      %v362 = vpack.c.b16 %v345, %v344
      %v363 = vpack.c.b16 %v347, %v346
      %v396 = vunpack.c.l.b16 %v261
      %v397 = vunpack.c.l.b16 %v262
      %v398 = vunpack.c.l.b16 %v263
      %v399 = vunpack.c.l.b16 %v264
      %v400 = vunpack.c.l.b16 %v265
      %v401 = vunpack.c.l.b16 %v266
      %v402 = vunpack.c.l.b16 %v267
      %v403 = vunpack.c.l.b16 %v268
      %v404 = vunpack.c.l.b16 %v269
      %v405 = vunpack.c.l.b16 %v270
      %v406 = vunpack.c.l.b16 %v271
      %v407 = vunpack.c.l.b16 %v272
      %v408 = vunpack.c.l.b16 %v273
      %v409 = vunpack.c.l.b16 %v274
      %v410 = vunpack.c.l.b16 %v275
      %v411 = vunpack.c.l.b16 %v276
      %v412 = vpack.c.b16 %v397, %v396
      %v413 = vpack.c.b16 %v399, %v398
      %v414 = vpack.c.b16 %v401, %v400
      %v415 = vpack.c.b16 %v403, %v402
      %v416 = vpack.c.b16 %v405, %v404
      %v417 = vpack.c.b16 %v407, %v406
      %v418 = vpack.c.b16 %v409, %v408
      %v419 = vpack.c.b16 %v411, %v410
      %428 = vmatprep.subr.bf16.mxu0 0
      %429 = vmatpush1.bf16.msra.mxu0 %v412
      %430 = vmatprep.subr.bf16.mxu0 0
      %431 = vmatpush1.bf16.msra.mxu0 %v413
      %432 = vmatprep.subr.bf16.mxu0 0
      %433 = vmatpush1.bf16.msra.mxu0 %v414
      %434 = vmatprep.subr.bf16.mxu0 0
      %435 = vmatpush1.bf16.msra.mxu0 %v415
      %436 = vmatprep.subr.bf16.mxu0 0
      %437 = vmatpush1.bf16.msra.mxu0 %v416
      %438 = vmatprep.subr.bf16.mxu0 0
      %439 = vmatpush1.bf16.msra.mxu0 %v417
      %440 = vmatprep.subr.bf16.mxu0 0
      %441 = vmatpush1.bf16.msra.mxu0 %v418
      %442 = vmatprep.subr.bf16.mxu0 0
      %443 = vmatpush1.bf16.msra.mxu0 %v419
      %444 = vmatprep.subr.bf16.mxu0 0
      %445 = vmatpush1.bf16.msra.mxu0 0
      %446 = vmatprep.subr.bf16.mxu0 0
      %447 = vmatpush1.bf16.msra.mxu0 0
      %448 = vmatprep.subr.bf16.mxu0 0
      %449 = vmatpush1.bf16.msra.mxu0 0
      %450 = vmatprep.subr.bf16.mxu0 0
      %451 = vmatpush1.bf16.msra.mxu0 0
      %452 = vmatprep.subr.bf16.mxu0 0
      %453 = vmatpush1.bf16.msra.mxu0 0
      %454 = vmatprep.subr.bf16.mxu0 0
      %455 = vmatpush1.bf16.msra.mxu0 0
      %456 = vmatprep.subr.bf16.mxu0 0
      %457 = vmatpush1.bf16.msra.mxu0 0
      %458 = vmatprep.subr.bf16.mxu0 0
      %459 = vmatpush1.bf16.msra.mxu0 0
      %460 = vmatprep.mubr.bf16.mxu0 0
      %461 = vmatmul.mubr.bf16.gmra.mrb[0].mxu0 %v348
      %v462 = vpop.f32.mrb[0].mxu0
      %v463 = vadd.f32 %v282, %v462
      %v464 = vpop.f32.mrb[0].mxu0
      %v465 = vpop.f32.mrb[0].mxu0
      %v466 = vadd.f32 %v282, %v465
      %v467 = vpop.f32.mrb[0].mxu0
      %468 = vmatprep.mubr.bf16.mxu0 0
      %469 = vmatmul.mubr.bf16.gmra.mrb[0].mxu0 %v349
      %v470 = vpop.f32.mrb[0].mxu0
      %v471 = vadd.f32 %v282, %v470
      %v472 = vpop.f32.mrb[0].mxu0
      %v473 = vpop.f32.mrb[0].mxu0
      %v474 = vadd.f32 %v282, %v473
      %v475 = vpop.f32.mrb[0].mxu0
      %476 = vmatprep.mubr.bf16.mxu0 0
      %477 = vmatmul.mubr.bf16.gmra.mrb[0].mxu0 %v350
      %v478 = vpop.f32.mrb[0].mxu0
      %v479 = vadd.f32 %v282, %v478
      %v480 = vpop.f32.mrb[0].mxu0
      %v481 = vpop.f32.mrb[0].mxu0
      %v482 = vadd.f32 %v282, %v481
      %v483 = vpop.f32.mrb[0].mxu0
      %484 = vmatprep.mubr.bf16.mxu0 0
      %485 = vmatmul.mubr.bf16.gmra.mrb[0].mxu0 %v351
      %v486 = vpop.f32.mrb[0].mxu0
      %v487 = vadd.f32 %v282, %v486
      %v488 = vpop.f32.mrb[0].mxu0
      %v489 = vpop.f32.mrb[0].mxu0
      %v490 = vadd.f32 %v282, %v489
      %v491 = vpop.f32.mrb[0].mxu0
      %492 = vmatprep.mubr.bf16.mxu0 0
      %493 = vmatmul.mubr.bf16.gmra.mrb[0].mxu0 %v352
      %v494 = vpop.f32.mrb[0].mxu0
      %v495 = vadd.f32 %v282, %v494
      %v496 = vpop.f32.mrb[0].mxu0
      %v497 = vpop.f32.mrb[0].mxu0
      %v498 = vadd.f32 %v282, %v497
      %v499 = vpop.f32.mrb[0].mxu0
      %500 = vmatprep.mubr.bf16.mxu0 0
      %501 = vmatmul.mubr.bf16.gmra.mrb[0].mxu0 %v353
      %v502 = vpop.f32.mrb[0].mxu0
      %v503 = vadd.f32 %v282, %v502
      %v504 = vpop.f32.mrb[0].mxu0
      %v505 = vpop.f32.mrb[0].mxu0
      %v506 = vadd.f32 %v282, %v505
      %v507 = vpop.f32.mrb[0].mxu0
      %508 = vmatprep.mubr.bf16.mxu0 0
      %509 = vmatmul.mubr.bf16.gmra.mrb[0].mxu0 %v354
      %v510 = vpop.f32.mrb[0].mxu0
      %v511 = vadd.f32 %v282, %v510
      %v512 = vpop.f32.mrb[0].mxu0
      %v513 = vpop.f32.mrb[0].mxu0
      %v514 = vadd.f32 %v282, %v513
      %v515 = vpop.f32.mrb[0].mxu0
      %516 = vmatprep.mubr.bf16.mxu0 0
      %517 = vmatmul.mubr.bf16.gmra.mrb[0].mxu0 %v355
      %v518 = vpop.f32.mrb[0].mxu0
      %v519 = vadd.f32 %v282, %v518
      %v520 = vpop.f32.mrb[0].mxu0
      %v521 = vpop.f32.mrb[0].mxu0
      %v522 = vadd.f32 %v282, %v521
      %v523 = vpop.f32.mrb[0].mxu0
      %524 = vmatprep.mubr.bf16.mxu0 0
      %525 = vmatmul.mubr.bf16.gmra.mrb[0].mxu0 %v356
      %v526 = vpop.f32.mrb[0].mxu0
      %v527 = vadd.f32 %v282, %v526
      %v528 = vpop.f32.mrb[0].mxu0
      %v529 = vpop.f32.mrb[0].mxu0
      %v530 = vadd.f32 %v282, %v529
      %v531 = vpop.f32.mrb[0].mxu0
      %532 = vmatprep.mubr.bf16.mxu0 0
      %533 = vmatmul.mubr.bf16.gmra.mrb[0].mxu0 %v357
      %v534 = vpop.f32.mrb[0].mxu0
      %v535 = vadd.f32 %v282, %v534
      %v536 = vpop.f32.mrb[0].mxu0
      %v537 = vpop.f32.mrb[0].mxu0
      %v538 = vadd.f32 %v282, %v537
      %v539 = vpop.f32.mrb[0].mxu0
      %540 = vmatprep.mubr.bf16.mxu0 0
      %541 = vmatmul.mubr.bf16.gmra.mrb[0].mxu0 %v358
      %v542 = vpop.f32.mrb[0].mxu0
      %v543 = vadd.f32 %v282, %v542
      %v544 = vpop.f32.mrb[0].mxu0
      %v545 = vpop.f32.mrb[0].mxu0
      %v546 = vadd.f32 %v282, %v545
      %v547 = vpop.f32.mrb[0].mxu0
      %548 = vmatprep.mubr.bf16.mxu0 0
      %549 = vmatmul.mubr.bf16.gmra.mrb[0].mxu0 %v359
      %v550 = vpop.f32.mrb[0].mxu0
      %v551 = vadd.f32 %v282, %v550
      %v552 = vpop.f32.mrb[0].mxu0
      %v553 = vpop.f32.mrb[0].mxu0
      %v554 = vadd.f32 %v282, %v553
      %v555 = vpop.f32.mrb[0].mxu0
      %556 = vmatprep.mubr.bf16.mxu0 0
      %557 = vmatmul.mubr.bf16.gmra.mrb[0].mxu0 %v360
      %v558 = vpop.f32.mrb[0].mxu0
      %v559 = vadd.f32 %v282, %v558
      %v560 = vpop.f32.mrb[0].mxu0
      %v561 = vpop.f32.mrb[0].mxu0
      %v562 = vadd.f32 %v282, %v561
      %v563 = vpop.f32.mrb[0].mxu0
      %564 = vmatprep.mubr.bf16.mxu0 0
      %565 = vmatmul.mubr.bf16.gmra.mrb[0].mxu0 %v361
      %v566 = vpop.f32.mrb[0].mxu0
      %v567 = vadd.f32 %v282, %v566
      %v568 = vpop.f32.mrb[0].mxu0
      %v569 = vpop.f32.mrb[0].mxu0
      %v570 = vadd.f32 %v282, %v569
      %v571 = vpop.f32.mrb[0].mxu0
      %572 = vmatprep.mubr.bf16.mxu0 0
      %573 = vmatmul.mubr.bf16.gmra.mrb[0].mxu0 %v362
      %v574 = vpop.f32.mrb[0].mxu0
      %v575 = vadd.f32 %v282, %v574
      %v576 = vpop.f32.mrb[0].mxu0
      %v577 = vpop.f32.mrb[0].mxu0
      %v578 = vadd.f32 %v282, %v577
      %v579 = vpop.f32.mrb[0].mxu0
      %580 = vmatprep.mubr.bf16.mxu0 0
      %581 = vmatmul.mubr.bf16.gmra.mrb[0].mxu0 %v363
      %v582 = vpop.f32.mrb[0].mxu0
      %v583 = vadd.f32 %v282, %v582
      %v584 = vpop.f32.mrb[0].mxu0
      %v585 = vpop.f32.mrb[0].mxu0
      %v586 = vadd.f32 %v282, %v585
      %v587 = vpop.f32.mrb[0].mxu0
      %588 = vdwg.mxu0
      %v589 = vmul.f32 %v463, %v463
      %v590 = vmul.f32 %v466, %v466
      %v591 = vmul.f32 %v471, %v471
      %v592 = vmul.f32 %v474, %v474
      %v593 = vmul.f32 %v479, %v479
      %v594 = vmul.f32 %v482, %v482
      %v595 = vmul.f32 %v487, %v487
      %v596 = vmul.f32 %v490, %v490
      %v597 = vmul.f32 %v495, %v495
      %v598 = vmul.f32 %v498, %v498
      %v599 = vmul.f32 %v503, %v503
      %v600 = vmul.f32 %v506, %v506
      %v601 = vmul.f32 %v511, %v511
      %v602 = vmul.f32 %v514, %v514
      %v603 = vmul.f32 %v519, %v519
      %v604 = vmul.f32 %v522, %v522
      %v605 = vmul.f32 %v527, %v527
      %v606 = vmul.f32 %v530, %v530
      %v607 = vmul.f32 %v535, %v535
      %v608 = vmul.f32 %v538, %v538
      %v609 = vmul.f32 %v543, %v543
      %v610 = vmul.f32 %v546, %v546
      %v611 = vmul.f32 %v551, %v551
      %v612 = vmul.f32 %v554, %v554
      %v613 = vmul.f32 %v559, %v559
      %v614 = vmul.f32 %v562, %v562
      %v615 = vmul.f32 %v567, %v567
      %v616 = vmul.f32 %v570, %v570
      %v617 = vmul.f32 %v575, %v575
      %v618 = vmul.f32 %v578, %v578
      %v619 = vmul.f32 %v583, %v583
      %v620 = vmul.f32 %v586, %v586
      %v621 = vld [vmem:[%s3] sm:$0xff]
      %v622 = vld [vmem:[%s3 + $0x8] sm:$0xff]
      %v623 = vld [vmem:[%s3 + $0x10] sm:$0xff]
      %v624 = vld [vmem:[%s3 + $0x18] sm:$0xff]
      %v625 = vld [vmem:[%s3 + $0x20] sm:$0xff]
      %v626 = vld [vmem:[%s3 + $0x28] sm:$0xff]
      %v627 = vld [vmem:[%s3 + $0x30] sm:$0xff]
      %v628 = vld [vmem:[%s3 + $0x38] sm:$0xff]
      %v629 = vld [vmem:[%s3 + $0x40] sm:$0xff]
      %v630 = vld [vmem:[%s3 + $0x48] sm:$0xff]
      %v631 = vld [vmem:[%s3 + $0x50] sm:$0xff]
      %v632 = vld [vmem:[%s3 + $0x58] sm:$0xff]
      %v633 = vld [vmem:[%s3 + $0x60] sm:$0xff]
      %v634 = vld [vmem:[%s3 + $0x68] sm:$0xff]
      %v635 = vld [vmem:[%s3 + $0x70] sm:$0xff]
      %v636 = vld [vmem:[%s3 + $0x78] sm:$0xff]
      %v637 = vld [vmem:[%s4] sm:$0x1]
      %v639 = vlaneseq
      %v640 = vshrl.u32 %v639, 7
      %v641 = vsub.s32 0, %v640
      %v642 = vrot.slane %v637, %v641
      %644 = vmatprep.subr.mxu0 0.0
      %645 = vmatpush1.msra.mxu0 %v621
      %646 = vmatprep.subr.mxu0 0.0
      %647 = vmatpush1.msra.mxu0 %v622
      %648 = vmatprep.subr.mxu0 0.0
      %649 = vmatpush1.msra.mxu0 %v623
      %650 = vmatprep.subr.mxu0 0.0
      %651 = vmatpush1.msra.mxu0 %v624
      %652 = vmatprep.subr.mxu0 0.0
      %653 = vmatpush1.msra.mxu0 %v625
      %654 = vmatprep.subr.mxu0 0.0
      %655 = vmatpush1.msra.mxu0 %v626
      %656 = vmatprep.subr.mxu0 0.0
      %657 = vmatpush1.msra.mxu0 %v627
      %658 = vmatprep.subr.mxu0 0.0
      %659 = vmatpush1.msra.mxu0 %v628
      %660 = vmatprep.subr.mxu0 0.0
      %661 = vmatpush1.msra.mxu0 %v629
      %662 = vmatprep.subr.mxu0 0.0
      %663 = vmatpush1.msra.mxu0 %v630
      %664 = vmatprep.subr.mxu0 0.0
      %665 = vmatpush1.msra.mxu0 %v631
      %666 = vmatprep.subr.mxu0 0.0
      %667 = vmatpush1.msra.mxu0 %v632
      %668 = vmatprep.subr.mxu0 0.0
      %669 = vmatpush1.msra.mxu0 %v633
      %670 = vmatprep.subr.mxu0 0.0
      %671 = vmatpush1.msra.mxu0 %v634
      %672 = vmatprep.subr.mxu0 0.0
      %673 = vmatpush1.msra.mxu0 %v635
      %674 = vmatprep.subr.mxu0 0.0
      %675 = vmatpush1.msra.mxu0 %v636
      %676 = vmatprep.subr.mxu0 0.0
      %677 = vmatpush1.msra.mxu0 0.0
      %678 = vmatprep.subr.mxu0 0.0
      %679 = vmatpush1.msra.mxu0 0.0
      %680 = vmatprep.subr.mxu0 0.0
      %681 = vmatpush1.msra.mxu0 0.0
      %682 = vmatprep.subr.mxu0 0.0
      %683 = vmatpush1.msra.mxu0 0.0
      %684 = vmatprep.subr.mxu0 0.0
      %685 = vmatpush1.msra.mxu0 0.0
      %686 = vmatprep.subr.mxu0 0.0
      %687 = vmatpush1.msra.mxu0 0.0
      %688 = vmatprep.subr.mxu0 0.0
      %689 = vmatpush1.msra.mxu0 0.0
      %690 = vmatprep.subr.mxu0 0.0
      %691 = vmatpush1.msra.mxu0 0.0
      %692 = vmatprep.subr.mxu0 0.0
      %693 = vmatpush1.msra.mxu0 0.0
      %694 = vmatprep.subr.mxu0 0.0
      %695 = vmatpush1.msra.mxu0 0.0
      %696 = vmatprep.subr.mxu0 0.0
      %697 = vmatpush1.msra.mxu0 0.0
      %698 = vmatprep.subr.mxu0 0.0
      %699 = vmatpush1.msra.mxu0 0.0
      %700 = vmatprep.subr.mxu0 0.0
      %701 = vmatpush1.msra.mxu0 0.0
      %702 = vmatprep.subr.mxu0 0.0
      %703 = vmatpush1.msra.mxu0 0.0
      %704 = vmatprep.subr.mxu0 0.0
      %705 = vmatpush1.msra.mxu0 0.0
      %706 = vmatprep.subr.mxu0 0.0
      %707 = vmatpush1.msra.mxu0 0.0
      %708 = vmatprep.mubr.f32.mxu0 0.0
      %709 = vmatmul.mubr.f32.gmra.mrb[0].mxu0 %v589
      %v710 = vpop.f32.mrb[0].mxu0
      %v711 = vadd.f32 %v642, %v710
      %v712 = vpop.f32.mrb[0].mxu0
      %713 = vmatprep.mubr.f32.mxu0 0.0
      %714 = vmatmul.mubr.f32.gmra.mrb[0].mxu0 %v590
      %v715 = vpop.f32.mrb[0].mxu0
      %v716 = vadd.f32 %v642, %v715
      %v717 = vpop.f32.mrb[0].mxu0
      %718 = vmatprep.mubr.f32.mxu0 0.0
      %719 = vmatmul.mubr.f32.gmra.mrb[0].mxu0 %v591
      %v720 = vpop.f32.mrb[0].mxu0
      %v721 = vadd.f32 %v642, %v720
      %v722 = vpop.f32.mrb[0].mxu0
      %723 = vmatprep.mubr.f32.mxu0 0.0
      %724 = vmatmul.mubr.f32.gmra.mrb[0].mxu0 %v592
      %v725 = vpop.f32.mrb[0].mxu0
      %v726 = vadd.f32 %v642, %v725
      %v727 = vpop.f32.mrb[0].mxu0
      %728 = vmatprep.mubr.f32.mxu0 0.0
      %729 = vmatmul.mubr.f32.gmra.mrb[0].mxu0 %v593
      %v730 = vpop.f32.mrb[0].mxu0
      %v731 = vadd.f32 %v642, %v730
      %v732 = vpop.f32.mrb[0].mxu0
      %733 = vmatprep.mubr.f32.mxu0 0.0
      %734 = vmatmul.mubr.f32.gmra.mrb[0].mxu0 %v594
      %v735 = vpop.f32.mrb[0].mxu0
      %v736 = vadd.f32 %v642, %v735
      %v737 = vpop.f32.mrb[0].mxu0
      %738 = vmatprep.mubr.f32.mxu0 0.0
      %739 = vmatmul.mubr.f32.gmra.mrb[0].mxu0 %v595
      %v740 = vpop.f32.mrb[0].mxu0
      %v741 = vadd.f32 %v642, %v740
      %v742 = vpop.f32.mrb[0].mxu0
      %743 = vmatprep.mubr.f32.mxu0 0.0
      %744 = vmatmul.mubr.f32.gmra.mrb[0].mxu0 %v596
      %v745 = vpop.f32.mrb[0].mxu0
      %v746 = vadd.f32 %v642, %v745
      %v747 = vpop.f32.mrb[0].mxu0
      %748 = vmatprep.mubr.f32.mxu0 0.0
      %749 = vmatmul.mubr.f32.gmra.mrb[0].mxu0 %v597
      %v750 = vpop.f32.mrb[0].mxu0
      %v751 = vadd.f32 %v642, %v750
      %v752 = vpop.f32.mrb[0].mxu0
      %753 = vmatprep.mubr.f32.mxu0 0.0
      %754 = vmatmul.mubr.f32.gmra.mrb[0].mxu0 %v598
      %v755 = vpop.f32.mrb[0].mxu0
      %v756 = vadd.f32 %v642, %v755
      %v757 = vpop.f32.mrb[0].mxu0
      %758 = vmatprep.mubr.f32.mxu0 0.0
      %759 = vmatmul.mubr.f32.gmra.mrb[0].mxu0 %v599
      %v760 = vpop.f32.mrb[0].mxu0
      %v761 = vadd.f32 %v642, %v760
      %v762 = vpop.f32.mrb[0].mxu0
      %763 = vmatprep.mubr.f32.mxu0 0.0
      %764 = vmatmul.mubr.f32.gmra.mrb[0].mxu0 %v600
      %v765 = vpop.f32.mrb[0].mxu0
      %v766 = vadd.f32 %v642, %v765
      %v767 = vpop.f32.mrb[0].mxu0
      %768 = vmatprep.mubr.f32.mxu0 0.0
      %769 = vmatmul.mubr.f32.gmra.mrb[0].mxu0 %v601
      %v770 = vpop.f32.mrb[0].mxu0
      %v771 = vadd.f32 %v642, %v770
      %v772 = vpop.f32.mrb[0].mxu0
      %773 = vmatprep.mubr.f32.mxu0 0.0
      %774 = vmatmul.mubr.f32.gmra.mrb[0].mxu0 %v602
      %v775 = vpop.f32.mrb[0].mxu0
      %v776 = vadd.f32 %v642, %v775
      %v777 = vpop.f32.mrb[0].mxu0
      %778 = vmatprep.mubr.f32.mxu0 0.0
      %779 = vmatmul.mubr.f32.gmra.mrb[0].mxu0 %v603
      %v780 = vpop.f32.mrb[0].mxu0
      %v781 = vadd.f32 %v642, %v780
      %v782 = vpop.f32.mrb[0].mxu0
      %783 = vmatprep.mubr.f32.mxu0 0.0
      %784 = vmatmul.mubr.f32.gmra.mrb[0].mxu0 %v604
      %v785 = vpop.f32.mrb[0].mxu0
      %v786 = vadd.f32 %v642, %v785
      %v787 = vpop.f32.mrb[0].mxu0
      %788 = vmatprep.mubr.f32.mxu0 0.0
      %789 = vmatmul.mubr.f32.gmra.mrb[0].mxu0 %v605
      %v790 = vpop.f32.mrb[0].mxu0
      %v791 = vadd.f32 %v642, %v790
      %v792 = vpop.f32.mrb[0].mxu0
      %793 = vmatprep.mubr.f32.mxu0 0.0
      %794 = vmatmul.mubr.f32.gmra.mrb[0].mxu0 %v606
      %v795 = vpop.f32.mrb[0].mxu0
      %v796 = vadd.f32 %v642, %v795
      %v797 = vpop.f32.mrb[0].mxu0
      %798 = vmatprep.mubr.f32.mxu0 0.0
      %799 = vmatmul.mubr.f32.gmra.mrb[0].mxu0 %v607
      %v800 = vpop.f32.mrb[0].mxu0
      %v801 = vadd.f32 %v642, %v800
      %v802 = vpop.f32.mrb[0].mxu0
      %803 = vmatprep.mubr.f32.mxu0 0.0
      %804 = vmatmul.mubr.f32.gmra.mrb[0].mxu0 %v608
      %v805 = vpop.f32.mrb[0].mxu0
      %v806 = vadd.f32 %v642, %v805
      %v807 = vpop.f32.mrb[0].mxu0
      %808 = vmatprep.mubr.f32.mxu0 0.0
      %809 = vmatmul.mubr.f32.gmra.mrb[0].mxu0 %v609
      %v810 = vpop.f32.mrb[0].mxu0
      %v811 = vadd.f32 %v642, %v810
      %v812 = vpop.f32.mrb[0].mxu0
      %813 = vmatprep.mubr.f32.mxu0 0.0
      %814 = vmatmul.mubr.f32.gmra.mrb[0].mxu0 %v610
      %v815 = vpop.f32.mrb[0].mxu0
      %v816 = vadd.f32 %v642, %v815
      %v817 = vpop.f32.mrb[0].mxu0
      %818 = vmatprep.mubr.f32.mxu0 0.0
      %819 = vmatmul.mubr.f32.gmra.mrb[0].mxu0 %v611
      %v820 = vpop.f32.mrb[0].mxu0
      %v821 = vadd.f32 %v642, %v820
      %v822 = vpop.f32.mrb[0].mxu0
      %823 = vmatprep.mubr.f32.mxu0 0.0
      %824 = vmatmul.mubr.f32.gmra.mrb[0].mxu0 %v612
      %v825 = vpop.f32.mrb[0].mxu0
      %v826 = vadd.f32 %v642, %v825
      %v827 = vpop.f32.mrb[0].mxu0
      %828 = vmatprep.mubr.f32.mxu0 0.0
      %829 = vmatmul.mubr.f32.gmra.mrb[0].mxu0 %v613
      %v830 = vpop.f32.mrb[0].mxu0
      %v831 = vadd.f32 %v642, %v830
      %v832 = vpop.f32.mrb[0].mxu0
      %833 = vmatprep.mubr.f32.mxu0 0.0
      %834 = vmatmul.mubr.f32.gmra.mrb[0].mxu0 %v614
      %v835 = vpop.f32.mrb[0].mxu0
      %v836 = vadd.f32 %v642, %v835
      %v837 = vpop.f32.mrb[0].mxu0
      %838 = vmatprep.mubr.f32.mxu0 0.0
      %839 = vmatmul.mubr.f32.gmra.mrb[0].mxu0 %v615
      %v840 = vpop.f32.mrb[0].mxu0
      %v841 = vadd.f32 %v642, %v840
      %v842 = vpop.f32.mrb[0].mxu0
      %843 = vmatprep.mubr.f32.mxu0 0.0
      %844 = vmatmul.mubr.f32.gmra.mrb[0].mxu0 %v616
      %v845 = vpop.f32.mrb[0].mxu0
      %v846 = vadd.f32 %v642, %v845
      %v847 = vpop.f32.mrb[0].mxu0
      %848 = vmatprep.mubr.f32.mxu0 0.0
      %849 = vmatmul.mubr.f32.gmra.mrb[0].mxu0 %v617
      %v850 = vpop.f32.mrb[0].mxu0
      %v851 = vadd.f32 %v642, %v850
      %v852 = vpop.f32.mrb[0].mxu0
      %853 = vmatprep.mubr.f32.mxu0 0.0
      %854 = vmatmul.mubr.f32.gmra.mrb[0].mxu0 %v618
      %v855 = vpop.f32.mrb[0].mxu0
      %v856 = vadd.f32 %v642, %v855
      %v857 = vpop.f32.mrb[0].mxu0
      %858 = vmatprep.mubr.f32.mxu0 0.0
      %859 = vmatmul.mubr.f32.gmra.mrb[0].mxu0 %v619
      %v860 = vpop.f32.mrb[0].mxu0
      %v861 = vadd.f32 %v642, %v860
      %v862 = vpop.f32.mrb[0].mxu0
      %863 = vmatprep.mubr.f32.mxu0 0.0
      %864 = vmatmul.mubr.f32.gmra.mrb[0].mxu0 %v620
      %v865 = vpop.f32.mrb[0].mxu0
      %v866 = vadd.f32 %v642, %v865
      %v867 = vpop.f32.mrb[0].mxu0
      %868 = vdwg.mxu0
      %v869 = vrsqrt.pop %v711
      %v870 = vrsqrt.pop %v716
      %v871 = vrsqrt.pop %v721
      %v872 = vrsqrt.pop %v726
      %v873 = vrsqrt.pop %v731
      %v874 = vrsqrt.pop %v736
      %v875 = vrsqrt.pop %v741
      %v876 = vrsqrt.pop %v746
      %v877 = vrsqrt.pop %v751
      %v878 = vrsqrt.pop %v756
      %v879 = vrsqrt.pop %v761
      %v880 = vrsqrt.pop %v766
      %v881 = vrsqrt.pop %v771
      %v882 = vrsqrt.pop %v776
      %v883 = vrsqrt.pop %v781
      %v884 = vrsqrt.pop %v786
      %v885 = vrsqrt.pop %v791
      %v886 = vrsqrt.pop %v796
      %v887 = vrsqrt.pop %v801
      %v888 = vrsqrt.pop %v806
      %v889 = vrsqrt.pop %v811
      %v890 = vrsqrt.pop %v816
      %v891 = vrsqrt.pop %v821
      %v892 = vrsqrt.pop %v826
      %v893 = vrsqrt.pop %v831
      %v894 = vrsqrt.pop %v836
      %v895 = vrsqrt.pop %v841
      %v896 = vrsqrt.pop %v846
      %v897 = vrsqrt.pop %v851
      %v898 = vrsqrt.pop %v856
      %v899 = vrsqrt.pop %v861
      %v900 = vrsqrt.pop %v866
      %v901 = vmul.f32 %v463, %v869
      %v902 = vmul.f32 %v466, %v870
      %v903 = vmul.f32 %v471, %v871
      %v904 = vmul.f32 %v474, %v872
      %v905 = vmul.f32 %v479, %v873
      %v906 = vmul.f32 %v482, %v874
      %v907 = vmul.f32 %v487, %v875
      %v908 = vmul.f32 %v490, %v876
      %v909 = vmul.f32 %v495, %v877
      %v910 = vmul.f32 %v498, %v878
      %v911 = vmul.f32 %v503, %v879
      %v912 = vmul.f32 %v506, %v880
      %v913 = vmul.f32 %v511, %v881
      %v914 = vmul.f32 %v514, %v882
      %v915 = vmul.f32 %v519, %v883
      %v916 = vmul.f32 %v522, %v884
      %v917 = vmul.f32 %v527, %v885
      %v918 = vmul.f32 %v530, %v886
      %v919 = vmul.f32 %v535, %v887
      %v920 = vmul.f32 %v538, %v888
      %v921 = vmul.f32 %v543, %v889
      %v922 = vmul.f32 %v546, %v890
      %v923 = vmul.f32 %v551, %v891
      %v924 = vmul.f32 %v554, %v892
      %v925 = vmul.f32 %v559, %v893
      %v926 = vmul.f32 %v562, %v894
      %v927 = vmul.f32 %v567, %v895
      %v928 = vmul.f32 %v570, %v896
      %v929 = vmul.f32 %v575, %v897
      %v930 = vmul.f32 %v578, %v898
      %v931 = vmul.f32 %v583, %v899
      %v932 = vmul.f32 %v586, %v900
      %vm933 = vcmask 64512
      %934 = vst.msk [vmem:[%s226] sm:$0xff] %vm933, %v901
      %935 = vst.msk [vmem:[%s226 + $0x8] sm:$0xff] %vm933, %v902
      %936 = vst.msk [vmem:[%s226 + $0x10] sm:$0xff] %vm933, %v903
      %937 = vst.msk [vmem:[%s226 + $0x18] sm:$0xff] %vm933, %v904
      %938 = vst.msk [vmem:[%s226 + $0x20] sm:$0xff] %vm933, %v905
      %939 = vst.msk [vmem:[%s226 + $0x28] sm:$0xff] %vm933, %v906
      %940 = vst.msk [vmem:[%s226 + $0x30] sm:$0xff] %vm933, %v907
      %941 = vst.msk [vmem:[%s226 + $0x38] sm:$0xff] %vm933, %v908
      %942 = vst.msk [vmem:[%s226 + $0x40] sm:$0xff] %vm933, %v909
      %943 = vst.msk [vmem:[%s226 + $0x48] sm:$0xff] %vm933, %v910
      %944 = vst.msk [vmem:[%s226 + $0x50] sm:$0xff] %vm933, %v911
      %945 = vst.msk [vmem:[%s226 + $0x58] sm:$0xff] %vm933, %v912
      %946 = vst.msk [vmem:[%s226 + $0x60] sm:$0xff] %vm933, %v913
      %947 = vst.msk [vmem:[%s226 + $0x68] sm:$0xff] %vm933, %v914
      %948 = vst.msk [vmem:[%s226 + $0x70] sm:$0xff] %vm933, %v915
      %949 = vst.msk [vmem:[%s226 + $0x78] sm:$0xff] %vm933, %v916
      %950 = vst.msk [vmem:[%s226 + $0x80] sm:$0xff] %vm933, %v917
      %951 = vst.msk [vmem:[%s226 + $0x88] sm:$0xff] %vm933, %v918
      %952 = vst.msk [vmem:[%s226 + $0x90] sm:$0xff] %vm933, %v919
      %953 = vst.msk [vmem:[%s226 + $0x98] sm:$0xff] %vm933, %v920
      %954 = vst.msk [vmem:[%s226 + $0xa0] sm:$0xff] %vm933, %v921
      %955 = vst.msk [vmem:[%s226 + $0xa8] sm:$0xff] %vm933, %v922
      %956 = vst.msk [vmem:[%s226 + $0xb0] sm:$0xff] %vm933, %v923
      %957 = vst.msk [vmem:[%s226 + $0xb8] sm:$0xff] %vm933, %v924
      %958 = vst.msk [vmem:[%s226 + $0xc0] sm:$0xff] %vm933, %v925
      %959 = vst.msk [vmem:[%s226 + $0xc8] sm:$0xff] %vm933, %v926
      %960 = vst.msk [vmem:[%s226 + $0xd0] sm:$0xff] %vm933, %v927
      %961 = vst.msk [vmem:[%s226 + $0xd8] sm:$0xff] %vm933, %v928
      %962 = vst.msk [vmem:[%s226 + $0xe0] sm:$0xff] %vm933, %v929
      %963 = vst.msk [vmem:[%s226 + $0xe8] sm:$0xff] %vm933, %v930
      %964 = vst.msk [vmem:[%s226 + $0xf0] sm:$0xff] %vm933, %v931
      %965 = vst.msk [vmem:[%s226 + $0xf8] sm:$0xff] %vm933, %v932
      %s966 = smul.u32 32, %s16
      %p967 = scmp.lt.s32.totalorder %s966, 63
      %s968 = scalar_select %p967, %s966, 63
      %s969 = smul.addr %s968, 8
      %s970 = scalar_lea.vmem %s5, %s969
      // Predicated region
      $region41: #{_lambda_.4} parent=39 // pred_check
        %p971 = pneg %p144
      $region42: #{_lambda_.4} parent=39 // pred_check_branch
        %973 = sbr.rel (%p971) target = $region44
      $region43: #{_lambda_.4} parent=39 // pred_region
        %s974 = smul.u32 32, %s16
      $region44: #{_lambda_.4} parent=39 // pred_fallthru
        _
    $region40: #{_lambda_.4} parent=5 // pred_fallthru
      _
    %p975 = scmp.le.s32.totalorder 2, %s11
    // Predicated region
    $region45: #{_lambda_.4} parent=5 // pred_check
      %p976 = pneg %p975
    $region46: #{_lambda_.4} parent=5 // pred_check_branch
      %978 = sbr.rel (%p976) target = $region48
    $region47: #{_lambda_.4} parent=5 // pred_region
      %s979 = ssub.s32 %s11, 2
      // Predicated region
      $region49: #{_lambda_.4} parent=47 // pred_check
        %p980 = pneg %p150
      $region50: #{_lambda_.4} parent=47 // pred_check_branch
        %982 = sbr.rel (%p980) target = $region52
      $region51: #{_lambda_.4} parent=47 // pred_region
        %s983 = smul.u32 32, %s17
        %p984 = scmp.lt.s32.totalorder %s983, 63
        %s985 = scalar_select %p984, %s983, 63
        %s986 = smul.addr %s985, 8
        %s987 = scalar_lea.vmem %s5, %s986
      $region52: #{_lambda_.4} parent=47 // pred_fallthru
        _
    $region48: #{_lambda_.4} parent=5 // pred_fallthru
      _
  $region6: #{_lambda_.4} parent=0 // loop_footer
    %s15 = sadd.s32 1, %s11
  $region7: #{_lambda_.4} parent=0 // loop_footer_branch
    %10 = sbr.rel target = $region3
  $region8: #{_lambda_.4} parent=0 // loop_exit
    _

// kernel: _lambda_.6
$region0: #{_lambda_.6}
  #allocation0 [shape = 'u32[]', space=smem, size = 0x4, offset = 0x4, fixed_abs, tag = 'smem constant byte address 0x4 - core index']
  #allocation1 [shape = 'u32[144,128]{1,0:T(1,128)}', space=vmem, size = 0x12000, scoped, tag = 'internal scratch']
  %s0 = inlined_call_operand.vmem [shape: bf16[128,128], index: 0, kind: input, shape index: {}]
  %s1 = inlined_call_operand.vmem [shape: bf16[128,128], index: 1, kind: input, shape index: {}]
  %s2 = inlined_call_operand.vmem [shape: f32[1,128], index: 2, kind: input, shape index: {}]
  %s3 = inlined_call_operand.vmem [shape: f32[128,128], index: 3, kind: input, shape index: {}]
  %s4 = inlined_call_operand.vmem [shape: f32[1,128], index: 4, kind: input, shape index: {}]
  %s5 = inlined_call_operand.vmem [shape: f32[128,8], index: 5, kind: input, shape index: {}]
  %s6 = inlined_call_operand.vmem [shape: f32[128,8], index: 6, kind: output, shape index: {}]
  %s7 = sld [smem:[#allocation0]]
  $region34: #{_lambda_.6} parent=0
    _
  %s9 = ssub.s32 1, %s7
  %s10 = scalar_select 0, %s9, %s7
  // Predicated region
  $region2: #{_lambda_.6} parent=0 // pred_check
    _
  $region3: #{_lambda_.6} parent=0 // pred_check_branch
    %12 = sbr.rel (0) target = $region5
  $region4: #{_lambda_.6} parent=0 // pred_region
    _
  $region5: #{_lambda_.6} parent=0 // pred_fallthru
    _
  // Predicated region
  $region6: #{_lambda_.6} parent=0 // pred_check
    _
  $region7: #{_lambda_.6} parent=0 // pred_check_branch
    %14 = sbr.rel (0) target = $region9
  $region8: #{_lambda_.6} parent=0 // pred_region
    _
  $region9: #{_lambda_.6} parent=0 // pred_fallthru
    _
  // Predicated region
  $region10: #{_lambda_.6} parent=0 // pred_check
    _
  $region11: #{_lambda_.6} parent=0 // pred_check_branch
    %16 = sbr.rel (0) target = $region13
  $region12: #{_lambda_.6} parent=0 // pred_region
    _
  $region13: #{_lambda_.6} parent=0 // pred_fallthru
    _
  // Predicated region
  $region14: #{_lambda_.6} parent=0 // pred_check
    _
  $region15: #{_lambda_.6} parent=0 // pred_check_branch
    %18 = sbr.rel (0) target = $region17
  $region16: #{_lambda_.6} parent=0 // pred_region
    _
  $region17: #{_lambda_.6} parent=0 // pred_fallthru
    _
  // Predicated region
  $region18: #{_lambda_.6} parent=0 // pred_check
    _
  $region19: #{_lambda_.6} parent=0 // pred_check_branch
    %20 = sbr.rel (0) target = $region21
  $region20: #{_lambda_.6} parent=0 // pred_region
    _
  $region21: #{_lambda_.6} parent=0 // pred_fallthru
    _
  // Predicated region
  $region22: #{_lambda_.6} parent=0 // pred_check
    _
  $region23: #{_lambda_.6} parent=0 // pred_check_branch
    %22 = sbr.rel (0) target = $region25
  $region24: #{_lambda_.6} parent=0 // pred_region
    _
  $region25: #{_lambda_.6} parent=0 // pred_fallthru
    _
  %v24 = vld [vmem:[%s0] sm:$0xf]
  %v25 = vld [vmem:[%s0 + $0x4] sm:$0xf]
  %v26 = vld [vmem:[%s0 + $0x8] sm:$0xf]
  %v27 = vld [vmem:[%s0 + $0xc] sm:$0xf]
  %v28 = vld [vmem:[%s0 + $0x10] sm:$0xf]
  %v29 = vld [vmem:[%s0 + $0x14] sm:$0xf]
  %v30 = vld [vmem:[%s0 + $0x18] sm:$0xf]
  %v31 = vld [vmem:[%s0 + $0x1c] sm:$0xf]
  %v32 = vld [vmem:[%s0 + $0x20] sm:$0xf]
  %v33 = vld [vmem:[%s0 + $0x24] sm:$0xf]
  %v34 = vld [vmem:[%s0 + $0x28] sm:$0xf]
  %v35 = vld [vmem:[%s0 + $0x2c] sm:$0xf]
  %v36 = vld [vmem:[%s0 + $0x30] sm:$0xf]
  %v37 = vld [vmem:[%s0 + $0x34] sm:$0xf]
  %v38 = vld [vmem:[%s0 + $0x38] sm:$0xf]
  %v39 = vld [vmem:[%s0 + $0x3c] sm:$0xf]
  %v40 = vld [vmem:[%s1] sm:$0xf]
  %v41 = vld [vmem:[%s1 + $0x4] sm:$0xf]
  %v42 = vld [vmem:[%s1 + $0x8] sm:$0xf]
  %v43 = vld [vmem:[%s1 + $0xc] sm:$0xf]
  %v44 = vld [vmem:[%s1 + $0x10] sm:$0xf]
  %v45 = vld [vmem:[%s1 + $0x14] sm:$0xf]
  %v46 = vld [vmem:[%s1 + $0x18] sm:$0xf]
  %v47 = vld [vmem:[%s1 + $0x1c] sm:$0xf]
  %v48 = vld [vmem:[%s1 + $0x20] sm:$0xf]
  %v49 = vld [vmem:[%s1 + $0x24] sm:$0xf]
  %v50 = vld [vmem:[%s1 + $0x28] sm:$0xf]
  %v51 = vld [vmem:[%s1 + $0x2c] sm:$0xf]
  %v52 = vld [vmem:[%s1 + $0x30] sm:$0xf]
  %v53 = vld [vmem:[%s1 + $0x34] sm:$0xf]
  %v54 = vld [vmem:[%s1 + $0x38] sm:$0xf]
  %v55 = vld [vmem:[%s1 + $0x3c] sm:$0xf]
  %v56 = vld [vmem:[%s2] sm:$0x1]
  %v58 = vlaneseq
  %v59 = vshrl.u32 %v58, 7
  %v60 = vsub.s32 0, %v59
  %v61 = vrot.slane %v56, %v60
  %v79 = vunpack.c.l.b16 %v24
  %v80 = vunpack.c.l.b16 %v25
  %v81 = vunpack.c.l.b16 %v26
  %v82 = vunpack.c.l.b16 %v27
  %v83 = vunpack.c.l.b16 %v28
  %v84 = vunpack.c.l.b16 %v29
  %v85 = vunpack.c.l.b16 %v30
  %v86 = vunpack.c.l.b16 %v31
  %v87 = vunpack.c.l.b16 %v32
  %v88 = vunpack.c.l.b16 %v33
  %v89 = vunpack.c.l.b16 %v34
  %v90 = vunpack.c.l.b16 %v35
  %v91 = vunpack.c.l.b16 %v36
  %v92 = vunpack.c.l.b16 %v37
  %v93 = vunpack.c.l.b16 %v38
  %v94 = vunpack.c.l.b16 %v39
  %v95 = vpack.c.b16 %v80, %v79
  %v96 = vpack.c.b16 %v82, %v81
  %v97 = vpack.c.b16 %v84, %v83
  %v98 = vpack.c.b16 %v86, %v85
  %v99 = vpack.c.b16 %v88, %v87
  %v100 = vpack.c.b16 %v90, %v89
  %v101 = vpack.c.b16 %v92, %v91
  %v102 = vpack.c.b16 %v94, %v93
  %v127 = vunpack.c.l.b16 %v40
  %v128 = vunpack.c.l.b16 %v41
  %v129 = vunpack.c.l.b16 %v42
  %v130 = vunpack.c.l.b16 %v43
  %v131 = vunpack.c.l.b16 %v44
  %v132 = vunpack.c.l.b16 %v45
  %v133 = vunpack.c.l.b16 %v46
  %v134 = vunpack.c.l.b16 %v47
  %v135 = vunpack.c.l.b16 %v48
  %v136 = vunpack.c.l.b16 %v49
  %v137 = vunpack.c.l.b16 %v50
  %v138 = vunpack.c.l.b16 %v51
  %v139 = vunpack.c.l.b16 %v52
  %v140 = vunpack.c.l.b16 %v53
  %v141 = vunpack.c.l.b16 %v54
  %v142 = vunpack.c.l.b16 %v55
  %v143 = vpack.c.b16 %v128, %v127
  %v144 = vpack.c.b16 %v130, %v129
  %v145 = vpack.c.b16 %v132, %v131
  %v146 = vpack.c.b16 %v134, %v133
  %v147 = vpack.c.b16 %v136, %v135
  %v148 = vpack.c.b16 %v138, %v137
  %v149 = vpack.c.b16 %v140, %v139
  %v150 = vpack.c.b16 %v142, %v141
  %159 = vmatprep.subr.bf16.mxu0 0
  %160 = vmatpush1.bf16.msra.mxu0 %v143
  %161 = vmatprep.subr.bf16.mxu0 0
  %162 = vmatpush1.bf16.msra.mxu0 %v144
  %163 = vmatprep.subr.bf16.mxu0 0
  %164 = vmatpush1.bf16.msra.mxu0 %v145
  %165 = vmatprep.subr.bf16.mxu0 0
  %166 = vmatpush1.bf16.msra.mxu0 %v146
  %167 = vmatprep.subr.bf16.mxu0 0
  %168 = vmatpush1.bf16.msra.mxu0 %v147
  %169 = vmatprep.subr.bf16.mxu0 0
  %170 = vmatpush1.bf16.msra.mxu0 %v148
  %171 = vmatprep.subr.bf16.mxu0 0
  %172 = vmatpush1.bf16.msra.mxu0 %v149
  %173 = vmatprep.subr.bf16.mxu0 0
  %174 = vmatpush1.bf16.msra.mxu0 %v150
  %175 = vmatprep.subr.bf16.mxu0 0
  %176 = vmatpush1.bf16.msra.mxu0 0
  %177 = vmatprep.subr.bf16.mxu0 0
  %178 = vmatpush1.bf16.msra.mxu0 0
  %179 = vmatprep.subr.bf16.mxu0 0
  %180 = vmatpush1.bf16.msra.mxu0 0
  %181 = vmatprep.subr.bf16.mxu0 0
  %182 = vmatpush1.bf16.msra.mxu0 0
  %183 = vmatprep.subr.bf16.mxu0 0
  %184 = vmatpush1.bf16.msra.mxu0 0
  %185 = vmatprep.subr.bf16.mxu0 0
  %186 = vmatpush1.bf16.msra.mxu0 0
  %187 = vmatprep.subr.bf16.mxu0 0
  %188 = vmatpush1.bf16.msra.mxu0 0
  %189 = vmatprep.subr.bf16.mxu0 0
  %190 = vmatpush1.bf16.msra.mxu0 0
  %191 = vmatprep.mubr.bf16.mxu0 0
  %192 = vmatmul.mubr.bf16.gmra.mrb[0].mxu0 %v95
  %v193 = vpop.f32.mrb[0].mxu0
  %v194 = vadd.f32 %v61, %v193
  %v195 = vpop.f32.mrb[0].mxu0
  %v196 = vpop.f32.mrb[0].mxu0
  %v197 = vadd.f32 %v61, %v196
  %v198 = vpop.f32.mrb[0].mxu0
  %199 = vmatprep.mubr.bf16.mxu0 0
  %200 = vmatmul.mubr.bf16.gmra.mrb[0].mxu0 %v96
  %v201 = vpop.f32.mrb[0].mxu0
  %v202 = vadd.f32 %v61, %v201
  %v203 = vpop.f32.mrb[0].mxu0
  %v204 = vpop.f32.mrb[0].mxu0
  %v205 = vadd.f32 %v61, %v204
  %v206 = vpop.f32.mrb[0].mxu0
  %207 = vmatprep.mubr.bf16.mxu0 0
  %208 = vmatmul.mubr.bf16.gmra.mrb[0].mxu0 %v97
  %v209 = vpop.f32.mrb[0].mxu0
  %v210 = vadd.f32 %v61, %v209
  %v211 = vpop.f32.mrb[0].mxu0
  %v212 = vpop.f32.mrb[0].mxu0
  %v213 = vadd.f32 %v61, %v212
  %v214 = vpop.f32.mrb[0].mxu0
  %215 = vmatprep.mubr.bf16.mxu0 0
  %216 = vmatmul.mubr.bf16.gmra.mrb[0].mxu0 %v98
  %v217 = vpop.f32.mrb[0].mxu0
  %v218 = vadd.f32 %v61, %v217
  %v219 = vpop.f32.mrb[0].mxu0
  %v220 = vpop.f32.mrb[0].mxu0
  %v221 = vadd.f32 %v61, %v220
  %v222 = vpop.f32.mrb[0].mxu0
  %223 = vmatprep.mubr.bf16.mxu0 0
  %224 = vmatmul.mubr.bf16.gmra.mrb[0].mxu0 %v99
  %v225 = vpop.f32.mrb[0].mxu0
  %v226 = vadd.f32 %v61, %v225
  %v227 = vpop.f32.mrb[0].mxu0
  %v228 = vpop.f32.mrb[0].mxu0
  %v229 = vadd.f32 %v61, %v228
  %v230 = vpop.f32.mrb[0].mxu0
  %231 = vmatprep.mubr.bf16.mxu0 0
  %232 = vmatmul.mubr.bf16.gmra.mrb[0].mxu0 %v100
  %v233 = vpop.f32.mrb[0].mxu0
  %v234 = vadd.f32 %v61, %v233
  %v235 = vpop.f32.mrb[0].mxu0
  %v236 = vpop.f32.mrb[0].mxu0
  %v237 = vadd.f32 %v61, %v236
  %v238 = vpop.f32.mrb[0].mxu0
  %239 = vmatprep.mubr.bf16.mxu0 0
  %240 = vmatmul.mubr.bf16.gmra.mrb[0].mxu0 %v101
  %v241 = vpop.f32.mrb[0].mxu0
  %v242 = vadd.f32 %v61, %v241
  %v243 = vpop.f32.mrb[0].mxu0
  %v244 = vpop.f32.mrb[0].mxu0
  %v245 = vadd.f32 %v61, %v244
  %v246 = vpop.f32.mrb[0].mxu0
  %247 = vmatprep.mubr.bf16.mxu0 0
  %248 = vmatmul.mubr.bf16.gmra.mrb[0].mxu0 %v102
  %v249 = vpop.f32.mrb[0].mxu0
  %v250 = vadd.f32 %v61, %v249
  %v251 = vpop.f32.mrb[0].mxu0
  %v252 = vpop.f32.mrb[0].mxu0
  %v253 = vadd.f32 %v61, %v252
  %v254 = vpop.f32.mrb[0].mxu0
  %255 = vdwg.mxu0
  %v256 = vmul.f32 %v194, %v194
  %v257 = vmul.f32 %v197, %v197
  %v258 = vmul.f32 %v202, %v202
  %v259 = vmul.f32 %v205, %v205
  %v260 = vmul.f32 %v210, %v210
  %v261 = vmul.f32 %v213, %v213
  %v262 = vmul.f32 %v218, %v218
  %v263 = vmul.f32 %v221, %v221
  %v264 = vmul.f32 %v226, %v226
  %v265 = vmul.f32 %v229, %v229
  %v266 = vmul.f32 %v234, %v234
  %v267 = vmul.f32 %v237, %v237
  %v268 = vmul.f32 %v242, %v242
  %v269 = vmul.f32 %v245, %v245
  %v270 = vmul.f32 %v250, %v250
  %v271 = vmul.f32 %v253, %v253
  %v272 = vld [vmem:[%s3] sm:$0xff]
  %v273 = vld [vmem:[%s3 + $0x8] sm:$0xff]
  %v274 = vld [vmem:[%s3 + $0x10] sm:$0xff]
  %v275 = vld [vmem:[%s3 + $0x18] sm:$0xff]
  %v276 = vld [vmem:[%s3 + $0x20] sm:$0xff]
  %v277 = vld [vmem:[%s3 + $0x28] sm:$0xff]
  %v278 = vld [vmem:[%s3 + $0x30] sm:$0xff]
  %v279 = vld [vmem:[%s3 + $0x38] sm:$0xff]
  %v280 = vld [vmem:[%s3 + $0x40] sm:$0xff]
  %v281 = vld [vmem:[%s3 + $0x48] sm:$0xff]
  %v282 = vld [vmem:[%s3 + $0x50] sm:$0xff]
  %v283 = vld [vmem:[%s3 + $0x58] sm:$0xff]
  %v284 = vld [vmem:[%s3 + $0x60] sm:$0xff]
  %v285 = vld [vmem:[%s3 + $0x68] sm:$0xff]
  %v286 = vld [vmem:[%s3 + $0x70] sm:$0xff]
  %v287 = vld [vmem:[%s3 + $0x78] sm:$0xff]
  %v288 = vld [vmem:[%s4] sm:$0x1]
  %v290 = vlaneseq
  %v291 = vshrl.u32 %v290, 7
  %v292 = vsub.s32 0, %v291
  %v293 = vrot.slane %v288, %v292
  %295 = vmatprep.subr.mxu0 0.0
  %296 = vmatpush1.msra.mxu0 %v272
  %297 = vmatprep.subr.mxu0 0.0
  %298 = vmatpush1.msra.mxu0 %v273
  %299 = vmatprep.subr.mxu0 0.0
  %300 = vmatpush1.msra.mxu0 %v274
  %301 = vmatprep.subr.mxu0 0.0
  %302 = vmatpush1.msra.mxu0 %v275
  %303 = vmatprep.subr.mxu0 0.0
  %304 = vmatpush1.msra.mxu0 %v276
  %305 = vmatprep.subr.mxu0 0.0
  %306 = vmatpush1.msra.mxu0 %v277
  %307 = vmatprep.subr.mxu0 0.0
  %308 = vmatpush1.msra.mxu0 %v278
  %309 = vmatprep.subr.mxu0 0.0
  %310 = vmatpush1.msra.mxu0 %v279
  %311 = vmatprep.subr.mxu0 0.0
  %312 = vmatpush1.msra.mxu0 %v280
  %313 = vmatprep.subr.mxu0 0.0
  %314 = vmatpush1.msra.mxu0 %v281
  %315 = vmatprep.subr.mxu0 0.0
  %316 = vmatpush1.msra.mxu0 %v282
  %317 = vmatprep.subr.mxu0 0.0
  %318 = vmatpush1.msra.mxu0 %v283
  %319 = vmatprep.subr.mxu0 0.0
  %320 = vmatpush1.msra.mxu0 %v284
  %321 = vmatprep.subr.mxu0 0.0
  %322 = vmatpush1.msra.mxu0 %v285
  %323 = vmatprep.subr.mxu0 0.0
  %324 = vmatpush1.msra.mxu0 %v286
  %325 = vmatprep.subr.mxu0 0.0
  %326 = vmatpush1.msra.mxu0 %v287
  %327 = vmatprep.subr.mxu0 0.0
  %328 = vmatpush1.msra.mxu0 0.0
  %329 = vmatprep.subr.mxu0 0.0
  %330 = vmatpush1.msra.mxu0 0.0
  %331 = vmatprep.subr.mxu0 0.0
  %332 = vmatpush1.msra.mxu0 0.0
  %333 = vmatprep.subr.mxu0 0.0
  %334 = vmatpush1.msra.mxu0 0.0
  %335 = vmatprep.subr.mxu0 0.0
  %336 = vmatpush1.msra.mxu0 0.0
  %337 = vmatprep.subr.mxu0 0.0
  %338 = vmatpush1.msra.mxu0 0.0
  %339 = vmatprep.subr.mxu0 0.0
  %340 = vmatpush1.msra.mxu0 0.0
  %341 = vmatprep.subr.mxu0 0.0
  %342 = vmatpush1.msra.mxu0 0.0
  %343 = vmatprep.subr.mxu0 0.0
  %344 = vmatpush1.msra.mxu0 0.0
  %345 = vmatprep.subr.mxu0 0.0
  %346 = vmatpush1.msra.mxu0 0.0
  %347 = vmatprep.subr.mxu0 0.0
  %348 = vmatpush1.msra.mxu0 0.0
  %349 = vmatprep.subr.mxu0 0.0
  %350 = vmatpush1.msra.mxu0 0.0
  %351 = vmatprep.subr.mxu0 0.0
  %352 = vmatpush1.msra.mxu0 0.0
  %353 = vmatprep.subr.mxu0 0.0
  %354 = vmatpush1.msra.mxu0 0.0
  %355 = vmatprep.subr.mxu0 0.0
  %356 = vmatpush1.msra.mxu0 0.0
  %357 = vmatprep.subr.mxu0 0.0
  %358 = vmatpush1.msra.mxu0 0.0
  %359 = vmatprep.mubr.f32.mxu0 0.0
  %360 = vmatmul.mubr.f32.gmra.mrb[0].mxu0 %v256
  %v361 = vpop.f32.mrb[0].mxu0
  %v362 = vadd.f32 %v293, %v361
  %v363 = vpop.f32.mrb[0].mxu0
  %364 = vmatprep.mubr.f32.mxu0 0.0
  %365 = vmatmul.mubr.f32.gmra.mrb[0].mxu0 %v257
  %v366 = vpop.f32.mrb[0].mxu0
  %v367 = vadd.f32 %v293, %v366
  %v368 = vpop.f32.mrb[0].mxu0
  %369 = vmatprep.mubr.f32.mxu0 0.0
  %370 = vmatmul.mubr.f32.gmra.mrb[0].mxu0 %v258
  %v371 = vpop.f32.mrb[0].mxu0
  %v372 = vadd.f32 %v293, %v371
  %v373 = vpop.f32.mrb[0].mxu0
  %374 = vmatprep.mubr.f32.mxu0 0.0
  %375 = vmatmul.mubr.f32.gmra.mrb[0].mxu0 %v259
  %v376 = vpop.f32.mrb[0].mxu0
  %v377 = vadd.f32 %v293, %v376
  %v378 = vpop.f32.mrb[0].mxu0
  %379 = vmatprep.mubr.f32.mxu0 0.0
  %380 = vmatmul.mubr.f32.gmra.mrb[0].mxu0 %v260
  %v381 = vpop.f32.mrb[0].mxu0
  %v382 = vadd.f32 %v293, %v381
  %v383 = vpop.f32.mrb[0].mxu0
  %384 = vmatprep.mubr.f32.mxu0 0.0
  %385 = vmatmul.mubr.f32.gmra.mrb[0].mxu0 %v261
  %v386 = vpop.f32.mrb[0].mxu0
  %v387 = vadd.f32 %v293, %v386
  %v388 = vpop.f32.mrb[0].mxu0
  %389 = vmatprep.mubr.f32.mxu0 0.0
  %390 = vmatmul.mubr.f32.gmra.mrb[0].mxu0 %v262
  %v391 = vpop.f32.mrb[0].mxu0
  %v392 = vadd.f32 %v293, %v391
  %v393 = vpop.f32.mrb[0].mxu0
  %394 = vmatprep.mubr.f32.mxu0 0.0
  %395 = vmatmul.mubr.f32.gmra.mrb[0].mxu0 %v263
  %v396 = vpop.f32.mrb[0].mxu0
  %v397 = vadd.f32 %v293, %v396
  %v398 = vpop.f32.mrb[0].mxu0
  %399 = vmatprep.mubr.f32.mxu0 0.0
  %400 = vmatmul.mubr.f32.gmra.mrb[0].mxu0 %v264
  %v401 = vpop.f32.mrb[0].mxu0
  %v402 = vadd.f32 %v293, %v401
  %v403 = vpop.f32.mrb[0].mxu0
  %404 = vmatprep.mubr.f32.mxu0 0.0
  %405 = vmatmul.mubr.f32.gmra.mrb[0].mxu0 %v265
  %v406 = vpop.f32.mrb[0].mxu0
  %v407 = vadd.f32 %v293, %v406
  %v408 = vpop.f32.mrb[0].mxu0
  %409 = vmatprep.mubr.f32.mxu0 0.0
  %410 = vmatmul.mubr.f32.gmra.mrb[0].mxu0 %v266
  %v411 = vpop.f32.mrb[0].mxu0
  %v412 = vadd.f32 %v293, %v411
  %v413 = vpop.f32.mrb[0].mxu0
  %414 = vmatprep.mubr.f32.mxu0 0.0
  %415 = vmatmul.mubr.f32.gmra.mrb[0].mxu0 %v267
  %v416 = vpop.f32.mrb[0].mxu0
  %v417 = vadd.f32 %v293, %v416
  %v418 = vpop.f32.mrb[0].mxu0
  %419 = vmatprep.mubr.f32.mxu0 0.0
  %420 = vmatmul.mubr.f32.gmra.mrb[0].mxu0 %v268
  %v421 = vpop.f32.mrb[0].mxu0
  %v422 = vadd.f32 %v293, %v421
  %v423 = vpop.f32.mrb[0].mxu0
  %424 = vmatprep.mubr.f32.mxu0 0.0
  %425 = vmatmul.mubr.f32.gmra.mrb[0].mxu0 %v269
  %v426 = vpop.f32.mrb[0].mxu0
  %v427 = vadd.f32 %v293, %v426
  %v428 = vpop.f32.mrb[0].mxu0
  %429 = vmatprep.mubr.f32.mxu0 0.0
  %430 = vmatmul.mubr.f32.gmra.mrb[0].mxu0 %v270
  %v431 = vpop.f32.mrb[0].mxu0
  %v432 = vadd.f32 %v293, %v431
  %v433 = vpop.f32.mrb[0].mxu0
  %434 = vmatprep.mubr.f32.mxu0 0.0
  %435 = vmatmul.mubr.f32.gmra.mrb[0].mxu0 %v271
  %v436 = vpop.f32.mrb[0].mxu0
  %v437 = vadd.f32 %v293, %v436
  %v438 = vpop.f32.mrb[0].mxu0
  %439 = vdwg.mxu0
  %v440 = vrsqrt.pop %v362
  %v441 = vrsqrt.pop %v367
  %v442 = vrsqrt.pop %v372
  %v443 = vrsqrt.pop %v377
  %v444 = vrsqrt.pop %v382
  %v445 = vrsqrt.pop %v387
  %v446 = vrsqrt.pop %v392
  %v447 = vrsqrt.pop %v397
  %v448 = vrsqrt.pop %v402
  %v449 = vrsqrt.pop %v407
  %v450 = vrsqrt.pop %v412
  %v451 = vrsqrt.pop %v417
  %v452 = vrsqrt.pop %v422
  %v453 = vrsqrt.pop %v427
  %v454 = vrsqrt.pop %v432
  %v455 = vrsqrt.pop %v437
  %v456 = vmul.f32 %v194, %v440
  %v457 = vmul.f32 %v197, %v441
  %v458 = vmul.f32 %v202, %v442
  %v459 = vmul.f32 %v205, %v443
  %v460 = vmul.f32 %v210, %v444
  %v461 = vmul.f32 %v213, %v445
  %v462 = vmul.f32 %v218, %v446
  %v463 = vmul.f32 %v221, %v447
  %v464 = vmul.f32 %v226, %v448
  %v465 = vmul.f32 %v229, %v449
  %v466 = vmul.f32 %v234, %v450
  %v467 = vmul.f32 %v237, %v451
  %v468 = vmul.f32 %v242, %v452
  %v469 = vmul.f32 %v245, %v453
  %v470 = vmul.f32 %v250, %v454
  %v471 = vmul.f32 %v253, %v455
  %v472 = vld [vmem:[%s5] sm:$0xff]
  %v473 = vld [vmem:[%s5 + $0x8] sm:$0xff]
  %v474 = vld [vmem:[%s5 + $0x10] sm:$0xff]
  %v475 = vld [vmem:[%s5 + $0x18] sm:$0xff]
  %v476 = vld [vmem:[%s5 + $0x20] sm:$0xff]
  %v477 = vld [vmem:[%s5 + $0x28] sm:$0xff]
  %v478 = vld [vmem:[%s5 + $0x30] sm:$0xff]
  %v479 = vld [vmem:[%s5 + $0x38] sm:$0xff]
  %v480 = vld [vmem:[%s5 + $0x40] sm:$0xff]
  %v481 = vld [vmem:[%s5 + $0x48] sm:$0xff]
  %v482 = vld [vmem:[%s5 + $0x50] sm:$0xff]
  %v483 = vld [vmem:[%s5 + $0x58] sm:$0xff]
  %v484 = vld [vmem:[%s5 + $0x60] sm:$0xff]
  %v485 = vld [vmem:[%s5 + $0x68] sm:$0xff]
  %v486 = vld [vmem:[%s5 + $0x70] sm:$0xff]
  %v487 = vld [vmem:[%s5 + $0x78] sm:$0xff]
  %v488 = vadd.f32 %v456, %v472
  %v489 = vadd.f32 %v457, %v473
  %v490 = vadd.f32 %v458, %v474
  %v491 = vadd.f32 %v459, %v475
  %v492 = vadd.f32 %v460, %v476
  %v493 = vadd.f32 %v461, %v477
  %v494 = vadd.f32 %v462, %v478
  %v495 = vadd.f32 %v463, %v479
  %v496 = vadd.f32 %v464, %v480
  %v497 = vadd.f32 %v465, %v481
  %v498 = vadd.f32 %v466, %v482
  %v499 = vadd.f32 %v467, %v483
  %v500 = vadd.f32 %v468, %v484
  %v501 = vadd.f32 %v469, %v485
  %v502 = vadd.f32 %v470, %v486
  %v503 = vadd.f32 %v471, %v487
  %vm504 = vcmask 64512
  %505 = vst.msk [vmem:[%s6] sm:$0xff] %vm504, %v488
  %506 = vst.msk [vmem:[%s6 + $0x8] sm:$0xff] %vm504, %v489
  %507 = vst.msk [vmem:[%s6 + $0x10] sm:$0xff] %vm504, %v490
  %508 = vst.msk [vmem:[%s6 + $0x18] sm:$0xff] %vm504, %v491
  %509 = vst.msk [vmem:[%s6 + $0x20] sm:$0xff] %vm504, %v492
  %510 = vst.msk [vmem:[%s6 + $0x28] sm:$0xff] %vm504, %v493
  %511 = vst.msk [vmem:[%s6 + $0x30] sm:$0xff] %vm504, %v494
  %512 = vst.msk [vmem:[%s6 + $0x38] sm:$0xff] %vm504, %v495
  %513 = vst.msk [vmem:[%s6 + $0x40] sm:$0xff] %vm504, %v496
  %514 = vst.msk [vmem:[%s6 + $0x48] sm:$0xff] %vm504, %v497
  %515 = vst.msk [vmem:[%s6 + $0x50] sm:$0xff] %vm504, %v498
  %516 = vst.msk [vmem:[%s6 + $0x58] sm:$0xff] %vm504, %v499
  %517 = vst.msk [vmem:[%s6 + $0x60] sm:$0xff] %vm504, %v500
  %518 = vst.msk [vmem:[%s6 + $0x68] sm:$0xff] %vm504, %v501
  %519 = vst.msk [vmem:[%s6 + $0x70] sm:$0xff] %vm504, %v502
  %520 = vst.msk [vmem:[%s6 + $0x78] sm:$0xff] %vm504, %v503
  // Predicated region
  $region26: #{_lambda_.6} parent=0 // pred_check
    _
  $region27: #{_lambda_.6} parent=0 // pred_check_branch
    %522 = sbr.rel (0) target = $region29
  $region28: #{_lambda_.6} parent=0 // pred_region
    _
  $region29: #{_lambda_.6} parent=0 // pred_fallthru
    _
  // Predicated region
  $region30: #{_lambda_.6} parent=0 // pred_check
    _
  $region31: #{_lambda_.6} parent=0 // pred_check_branch
    %524 = sbr.rel (0) target = $region33
  $region32: #{_lambda_.6} parent=0 // pred_region
    _
  $region33: #{_lambda_.6} parent=0 // pred_fallthru
    _

</llo_original>
